<compile_context>
chip_gen: v6e
topology: v6e:2x2x1
jax: 0.10.0
libtpu: 0.0.40
codegen_flags: <defaults>
</compile_context>

<pallas_src>
import math
import functools

import jax
import jax.numpy as jnp
from jax.experimental import pallas as pl
from jax.experimental.pallas import tpu as pltpu


# -----------------------------------------------------------------------------
# Pallas kernel: one EncoderBlock, grid = (batch-tile, FFN-chunk).
# -----------------------------------------------------------------------------
def encoder_block_kernel(x_ref, wqkv_ref, bqkv_ref, wo_ref, bo_ref,
                         ln1g_ref, ln1b_ref,
                         w1_ref, b1_ref, w2_ref, b2_ref,
                         ln2g_ref, ln2b_ref,
                         out_ref,
                         x1n_ref, ffacc_ref,
                         *, num_heads, head_dim, seq_len, batch_tile, kv_chunk,
                         eps=1e-5):
    f = pl.program_id(1)
    nf = pl.num_programs(1)
    H, hd, S, TB, TK = num_heads, head_dim, seq_len, batch_tile, kv_chunk
    D = H * hd

    # ---------------- f == 0: attention + residual + LayerNorm1 ----------------
    @pl.when(f == 0)
    def _attention():
        x = x_ref[...]                                   # [TB*S, D] f32
        xb = x.astype(jnp.bfloat16)

        # Fused QKV projection over all TB*S rows (bf16 in, f32 accumulate).
        # Column layout is torch-native: per head h, [q_h | k_h | v_h] blocks of
        # width 3*hd; the wrapper folded 1/sqrt(hd) into the q columns/bias.
        qkv = jnp.dot(xb, wqkv_ref[...], preferred_element_type=jnp.float32)
        qkv = qkv + bqkv_ref[...]                        # [TB*S, 3D] f32

        nk = S // TK
        outs = []
        for bb in range(TB):                             # per-batch-element attention
            qkv_b = qkv[bb * S:(bb + 1) * S].astype(jnp.bfloat16)   # [S, 3D]
            # One stack of H contiguous per-head column blocks -> [H, S, 3*hd].
            heads = jnp.stack(
                [qkv_b[:, h * 3 * hd:(h + 1) * 3 * hd] for h in range(H)], axis=0)
            qh = heads[..., :hd]                         # [H, S, hd] (pre-scaled)
            kh = heads[..., hd:2 * hd]
            vh = heads[..., 2 * hd:]

            if nk == 1:
                # Single KV chunk: plain softmax.
                logits = jnp.einsum('hqd,hkd->hqk', qh, kh,
                                    preferred_element_type=jnp.float32)
                m = jnp.max(logits, axis=-1, keepdims=True)
                p = jnp.exp(logits - m)
                denom = jnp.sum(p, axis=-1, keepdims=True)
                vals = jnp.einsum('hqk,hkd->hqd', p.astype(jnp.bfloat16), vh,
                                  preferred_element_type=jnp.float32)
            else:
                # Flash-style online softmax over KV chunks: live logits are
                # [H, S, TK] instead of [H, S, S].
                m = jnp.full((H, S, 1), -jnp.inf, jnp.float32)
                denom = jnp.zeros((H, S, 1), jnp.float32)
                vals = jnp.zeros((H, S, hd), jnp.float32)
                for j in range(nk):
                    kj = kh[:, j * TK:(j + 1) * TK, :]
                    vj = vh[:, j * TK:(j + 1) * TK, :]
                    s_ = jnp.einsum('hqd,hkd->hqk', qh, kj,
                                    preferred_element_type=jnp.float32)
                    m_new = jnp.maximum(m, jnp.max(s_, axis=-1, keepdims=True))
                    alpha = jnp.exp(m - m_new)
                    p = jnp.exp(s_ - m_new)
                    denom = alpha * denom + jnp.sum(p, axis=-1, keepdims=True)
                    vals = alpha * vals + jnp.einsum(
                        'hqk,hkd->hqd', p.astype(jnp.bfloat16), vj,
                        preferred_element_type=jnp.float32)
                    m = m_new

            # Deferred softmax normalization on the small [H,S,hd] output;
            # approximate reciprocal runs on the otherwise-idle EUP slot.
            vals = vals * pl.reciprocal(denom, approx=True)
            # (H, S, hd) -> (S, D) in torch's head-major concat order.
            outs.append(jnp.concatenate([vals[h] for h in range(H)], axis=-1))

        vals2d = jnp.concatenate(outs, axis=0) if TB > 1 else outs[0]   # [TB*S, D]

        o = jnp.dot(vals2d.astype(jnp.bfloat16), wo_ref[...],
                    preferred_element_type=jnp.float32) + bo_ref[...]

        x1 = x + o
        mu = jnp.mean(x1, axis=-1, keepdims=True)
        xc = x1 - mu
        var = jnp.mean(xc * xc, axis=-1, keepdims=True)
        x1n_ref[...] = xc * jax.lax.rsqrt(var + eps) * ln1g_ref[...] + ln1b_ref[...]
        ffacc_ref[...] = jnp.zeros_like(ffacc_ref)

    # ------------- every step: one F-chunk of the feed-forward net -------------
    x1n = x1n_ref[...]
    h1 = jnp.dot(x1n.astype(jnp.bfloat16), w1_ref[...],
                 preferred_element_type=jnp.float32) + b1_ref[...]
    h1 = jnp.maximum(h1, 0.0)
    ffacc_ref[...] += jnp.dot(h1.astype(jnp.bfloat16), w2_ref[...],
                              preferred_element_type=jnp.float32)

    # --------------- last step: residual + LayerNorm2 + writeback --------------
    @pl.when(f == nf - 1)
    def _finalize():
        x2 = x1n_ref[...] + ffacc_ref[...] + b2_ref[...]
        mu = jnp.mean(x2, axis=-1, keepdims=True)
        xc = x2 - mu
        var = jnp.mean(xc * xc, axis=-1, keepdims=True)
        out_ref[...] = xc * jax.lax.rsqrt(var + eps) * ln2g_ref[...] + ln2b_ref[...]


# -----------------------------------------------------------------------------
# Parameter prep: fold the 1/sqrt(hd) attention scale into the Q columns/bias
# (torch-native per-head [q|k|v] column order is kept) and cast matmul weights
# to bf16.
# -----------------------------------------------------------------------------
def _prep_params(params, *, num_heads):
    D = params["wo"].shape[0]
    hd = D // num_heads
    scale = 1.0 / math.sqrt(hd)
    sv = jnp.asarray([scale, 1.0, 1.0], jnp.float32).reshape(1, 1, 3, 1)

    wqkv = (params["wqkv"].reshape(D, num_heads, 3, hd) * sv).reshape(D, 3 * D)
    bqkv = (params["bqkv"].reshape(1, num_heads, 3, hd) * sv).reshape(1, 3 * D)

    return {
        "wqkv": wqkv.astype(jnp.bfloat16),
        "bqkv": bqkv.astype(jnp.float32),
        "wo": params["wo"].astype(jnp.bfloat16),
        "bo": params["bo"],
        "ln1g": params["ln1g"], "ln1b": params["ln1b"],
        "w1": params["w1"].astype(jnp.bfloat16), "b1": params["b1"],
        "w2": params["w2"].astype(jnp.bfloat16), "b2": params["b2"],
        "ln2g": params["ln2g"], "ln2b": params["ln2b"],
    }


# -----------------------------------------------------------------------------
# Tiling / VMEM planning.
# -----------------------------------------------------------------------------
def _vmem_capacity_bytes():
    try:
        cap = getattr(pltpu.get_tpu_info(), "vmem_capacity_bytes", None)
        if cap:
            return int(cap)
    except Exception:
        pass
    return 64 * 1024 * 1024      # conservative (v7x-sized) fallback


def _pick_tb(B, S):
    """Batch tile: target >=256 MXU rows, <=1024 rows, divides B, 8-row aligned."""
    cands = [t for t in range(1, B + 1)
             if B % t == 0 and (t == B or (t * S) % 8 == 0)]
    tb = cands[0]
    for t in cands:
        if t * S > 1024:
            break
        tb = t
        if t * S >= 256:
            break
    return tb


def _plan_ffn_tile(*, S, D, F, H, hd, TB, TK, budget):
    rows = TB * S

    def nb(shape, itemsize=4):
        n = 1
        for d in shape:
            n *= d
        return n * itemsize

    # Resident VMEM independent of the FFN chunk size: pipelined x/out blocks,
    # single-buffered weights, scratch, plus headroom for attention-phase
    # intermediates.
    fixed = (4 * nb((rows, D))                              # x + out (2 buffers each)
             + nb((D, 3 * D), 2) + nb((1, 3 * D))           # wqkv, bqkv (1 buffer)
             + nb((D, D), 2) + 6 * nb((1, D))               # wo + small vectors
             + 2 * nb((rows, D))                            # x1n + ffacc scratch
             + nb((rows, 3 * D), 6)                         # qkv (f32 + bf16)
             + nb((H, S, TK), 12)                           # logits + exp working set
             + nb((H, S, 3 * hd), 8)                        # per-head q/k/v + vals
             + 8 * nb((rows, D)))                           # misc f32 temporaries

    def chunk_bytes(tf):
        return (2 * (nb((D, tf), 2) + nb((1, tf)) + nb((tf, D), 2))   # w1/b1/w2 (2 buf)
                + nb((rows, tf), 6))                                   # h1 (f32 + bf16)

    # Prefer large, 256/128-multiple FFN chunks that fit the per-chip budget.
    cands = sorted({t for t in (2048, 1024, 512, 256, 128) if F % t == 0} | {F},
                   reverse=True)
    TF = cands[-1]
    for t in cands:
        if 2 * (fixed + chunk_bytes(t)) <= budget:
            TF = t
            break
    vmem_limit = int(min(budget, max(2 * (fixed + chunk_bytes(TF)),
                                     32 * 1024 * 1024)))
    return TF, vmem_limit


# -----------------------------------------------------------------------------
# Wrapper: one pallas_call per EncoderBlock.
# -----------------------------------------------------------------------------
def encoder_block(x, params, *, num_heads):
    B, S, D = x.shape
    F = params["w1"].shape[1]
    hd = D // num_heads
    p = _prep_params(params, num_heads=num_heads)

    TB = _pick_tb(B, S)
    rows = TB * S
    TK = next((t for t in (512, 256, 128) if S % t == 0 and t < S), S)

    budget = int(0.85 * _vmem_capacity_bytes())
    TF, vmem_limit = _plan_ffn_tile(S=S, D=D, F=F, H=num_heads, hd=hd,
                                    TB=TB, TK=TK, budget=budget)
    NF = F // TF

    kernel = functools.partial(encoder_block_kernel,
                               num_heads=num_heads, head_dim=hd,
                               seq_len=S, batch_tile=TB, kv_chunk=TK)

    x2d = x.reshape(B * S, D)
    args = (x2d, p["wqkv"], p["bqkv"], p["wo"], p["bo"],
            p["ln1g"], p["ln1b"], p["w1"], p["b1"], p["w2"], p["b2"],
            p["ln2g"], p["ln2b"])

    def build(single_buffer_consts):
        def const_spec(shape):
            idx = lambda b, f, _n=len(shape): (0,) * _n
            if single_buffer_consts:
                # constant-index blocks never change -> single buffer saves VMEM
                return pl.BlockSpec(shape, idx, pipeline_mode=pl.Buffered(1))
            return pl.BlockSpec(shape, idx)

        grid_spec = pltpu.PrefetchScalarGridSpec(
            num_scalar_prefetch=0,
            grid=(B // TB, NF),
            in_specs=[
                pl.BlockSpec((rows, D), lambda b, f: (b, 0)),     # x (flattened)
                const_spec((D, 3 * D)),                           # wqkv (bf16, q-scaled)
                const_spec((1, 3 * D)),                           # bqkv
                const_spec((D, D)),                               # wo (bf16)
                const_spec((1, D)),                               # bo
                const_spec((1, D)),                               # ln1 gamma
                const_spec((1, D)),                               # ln1 beta
                pl.BlockSpec((D, TF), lambda b, f: (0, f)),       # w1 chunk (bf16)
                pl.BlockSpec((1, TF), lambda b, f: (0, f)),       # b1 chunk
                pl.BlockSpec((TF, D), lambda b, f: (f, 0)),       # w2 chunk (bf16)
                const_spec((1, D)),                               # b2
                const_spec((1, D)),                               # ln2 gamma
                const_spec((1, D)),                               # ln2 beta
            ],
            out_specs=pl.BlockSpec((rows, D), lambda b, f: (b, 0)),
            scratch_shapes=[
                pltpu.VMEM((rows, D), jnp.float32),   # x1n (post-LN1), reused per F chunk
                pltpu.VMEM((rows, D), jnp.float32),   # FFN output accumulator
            ],
        )
        return pl.pallas_call(
            kernel,
            out_shape=jax.ShapeDtypeStruct((B * S, D), jnp.float32),
            grid_spec=grid_spec,
            compiler_params=pltpu.CompilerParams(
                dimension_semantics=("parallel", "arbitrary"),
                vmem_limit_bytes=vmem_limit),
        )

    try:
        out2d = build(True)(*args)
    except Exception:
        # Fallback if this JAX build rejects pipeline_mode=pl.Buffered(1).
        out2d = build(False)(*args)

    return out2d.reshape(B, S, D)


def transformer_encoder(x, layer_params, *, num_heads):
    for p in layer_params:
        x = encoder_block(x, p, num_heads=num_heads)
    return x


# -----------------------------------------------------------------------------
# Pure-JAX f32 reference (faithful to the PyTorch forward, unmodified weights).
# -----------------------------------------------------------------------------
def ref_block(x, p, *, num_heads):
    B, S, D = x.shape
    hd = D // num_heads
    qkv = x @ p["wqkv"] + p["bqkv"][0]
    qkv = qkv.reshape(B, S, num_heads, 3 * hd).transpose(0, 2, 1, 3)
    q, k, v = qkv[..., :hd], qkv[..., hd:2 * hd], qkv[..., 2 * hd:]
    logits = jnp.einsum("bhqd,bhkd->bhqk", q, k) / math.sqrt(hd)
    attn = jax.nn.softmax(logits, axis=-1)
    vals = jnp.einsum("bhqk,bhkd->bhqd", attn, v).transpose(0, 2, 1, 3).reshape(B, S, D)
    o = vals @ p["wo"] + p["bo"][0]
    x = x + o
    x = (x - x.mean(-1, keepdims=True)) * jax.lax.rsqrt(x.var(-1, keepdims=True) + 1e-5) \
        * p["ln1g"][0] + p["ln1b"][0]
    h = jnp.maximum(x @ p["w1"] + p["b1"][0], 0.0)
    x = x + (h @ p["w2"] + p["b2"][0])
    x = (x - x.mean(-1, keepdims=True)) * jax.lax.rsqrt(x.var(-1, keepdims=True) + 1e-5) \
        * p["ln2g"][0] + p["ln2b"][0]
    return x


# -----------------------------------------------------------------------------
# Deterministic parameter init (shapes from the module's __init__).
# Weights stored pre-transposed as (in, out) so forward computes x @ W + b.
# -----------------------------------------------------------------------------
def xavier_uniform(key, fan_in, fan_out):
    limit = math.sqrt(6.0 / (fan_in + fan_out))
    # torch weight is (out, in); sample then transpose to (in, out)
    return jax.random.uniform(key, (fan_out, fan_in), jnp.float32, -limit, limit).T


def init_layer(key, D, F):
    ks = jax.random.split(key, 4)
    return {
        "wqkv": xavier_uniform(ks[0], D, 3 * D),
        "bqkv": jnp.zeros((1, 3 * D), jnp.float32),
        "wo": xavier_uniform(ks[1], D, D),
        "bo": jnp.zeros((1, D), jnp.float32),
        "ln1g": jnp.ones((1, D), jnp.float32),
        "ln1b": jnp.zeros((1, D), jnp.float32),
        "w1": xavier_uniform(ks[2], D, F),
        "b1": jnp.zeros((1, F), jnp.float32),
        "w2": xavier_uniform(ks[3], F, D),
        "b2": jnp.zeros((1, D), jnp.float32),
        "ln2g": jnp.ones((1, D), jnp.float32),
        "ln2b": jnp.zeros((1, D), jnp.float32),
    }


if __name__ == "__main__":
    B, S, D, H, F = 2, 8, 32, 4, 64
    num_layers = 2

    key = jax.random.PRNGKey(0)
    kx, *kls = jax.random.split(key, 1 + num_layers)
    x = jax.random.normal(kx, (B, S, D), jnp.float32)
    layer_params = [init_layer(k, D, F) for k in kls]

    out = transformer_encoder(x, layer_params, num_heads=H)
    out = jax.block_until_ready(out)

    # verify against pure-JAX f32 reference of the PyTorch forward
    ref = x
    for p in layer_params:
        ref = ref_block(ref, p, num_heads=H)

    assert out.shape == (B, S, D)
    assert bool(jnp.isfinite(out).all())
    # bf16 matmul inputs + approx softmax reciprocal -> loosened tolerance
    assert jnp.allclose(out, ref, atol=5e-2, rtol=5e-2), "mismatch vs reference"

    print("KERNEL_OK")
</pallas_src>

<mosaic_0001>
module attributes {stable_mosaic.version = 11 : i64} {
  func.func @encoder_block_kernel(%arg0: i32, %arg1: i32, %arg2: memref<16x32xf32, #tpu.memory_space<vmem>>, %arg3: memref<32x96xbf16, #tpu.memory_space<vmem>>, %arg4: memref<1x96xf32, #tpu.memory_space<vmem>>, %arg5: memref<32x32xbf16, #tpu.memory_space<vmem>>, %arg6: memref<1x32xf32, #tpu.memory_space<vmem>>, %arg7: memref<1x32xf32, #tpu.memory_space<vmem>>, %arg8: memref<1x32xf32, #tpu.memory_space<vmem>>, %arg9: memref<32x64xbf16, #tpu.memory_space<vmem>>, %arg10: memref<1x64xf32, #tpu.memory_space<vmem>>, %arg11: memref<64x32xbf16, #tpu.memory_space<vmem>>, %arg12: memref<1x32xf32, #tpu.memory_space<vmem>>, %arg13: memref<1x32xf32, #tpu.memory_space<vmem>>, %arg14: memref<1x32xf32, #tpu.memory_space<vmem>>, %arg15: memref<16x32xf32, #tpu.memory_space<vmem>>, %arg16: memref<16x32xf32, #tpu.memory_space<vmem>>, %arg17: memref<16x32xf32, #tpu.memory_space<vmem>>) attributes {dimension_semantics = [#tpu.dimension_semantics<parallel>, #tpu.dimension_semantics<arbitrary>], iteration_bounds = array<i64: 1, 1>, scalar_prefetch = 0 : i64, scratch_operands = 2 : i64, tpu.core_type = #tpu.core_type<tc>, window_params = [{transform_indices = @transform_0, window_bounds = array<i64: 16, 32>}, {pipeline_mode = #tpu.pipeline_mode<synchronous>, transform_indices = @transform_1, window_bounds = array<i64: 32, 96>}, {pipeline_mode = #tpu.pipeline_mode<synchronous>, transform_indices = @transform_2, window_bounds = array<i64: 1, 96>}, {pipeline_mode = #tpu.pipeline_mode<synchronous>, transform_indices = @transform_3, window_bounds = array<i64: 32, 32>}, {pipeline_mode = #tpu.pipeline_mode<synchronous>, transform_indices = @transform_4, window_bounds = array<i64: 1, 32>}, {pipeline_mode = #tpu.pipeline_mode<synchronous>, transform_indices = @transform_5, window_bounds = array<i64: 1, 32>}, {pipeline_mode = #tpu.pipeline_mode<synchronous>, transform_indices = @transform_6, window_bounds = array<i64: 1, 32>}, {transform_indices = @transform_7, window_bounds = array<i64: 32, 64>}, {transform_indices = @transform_8, window_bounds = array<i64: 1, 64>}, {transform_indices = @transform_9, window_bounds = array<i64: 64, 32>}, {pipeline_mode = #tpu.pipeline_mode<synchronous>, transform_indices = @transform_10, window_bounds = array<i64: 1, 32>}, {pipeline_mode = #tpu.pipeline_mode<synchronous>, transform_indices = @transform_11, window_bounds = array<i64: 1, 32>}, {pipeline_mode = #tpu.pipeline_mode<synchronous>, transform_indices = @transform_12, window_bounds = array<i64: 1, 32>}, {transform_indices = @transform_13, window_bounds = array<i64: 16, 32>}]} {
    %c0_i32 = arith.constant 0 : i32
    %0 = arith.cmpi eq, %arg1, %c0_i32 : i32
    %1 = arith.extui %0 : i1 to i32
    %c0_i32_0 = arith.constant 0 : i32
    %2 = arith.cmpi ne, %1, %c0_i32_0 : i32
    scf.if %2 {
      %c0_16 = arith.constant 0 : index
      %c0_17 = arith.constant 0 : index
      %21 = vector.load %arg2[%c0_16, %c0_17] : memref<16x32xf32, #tpu.memory_space<vmem>>, vector<16x32xf32>
      %22 = arith.truncf %21 : vector<16x32xf32> to vector<16x32xbf16>
      %c0_18 = arith.constant 0 : index
      %c0_19 = arith.constant 0 : index
      %23 = vector.load %arg3[%c0_18, %c0_19] : memref<32x96xbf16, #tpu.memory_space<vmem>>, vector<32x96xbf16>
      %cst_20 = arith.constant dense<0.000000e+00> : vector<16x96xf32>
      %24 = tpu.matmul %22, %23, %cst_20 {dimension_numbers = #tpu.dot_dimension_numbers<[1], [0], [0], [1], [0, 0, 1, 1], [], []>} : vector<16x32xbf16>, vector<32x96xbf16>, vector<16x96xf32> -> vector<16x96xf32>
      %c0_21 = arith.constant 0 : index
      %c0_22 = arith.constant 0 : index
      %25 = vector.load %arg4[%c0_21, %c0_22] : memref<1x96xf32, #tpu.memory_space<vmem>>, vector<1x96xf32>
      %26 = vector.broadcast %25 : vector<1x96xf32> to vector<16x96xf32>
      %27 = arith.addf %24, %26 : vector<16x96xf32>
      %28 = vector.extract_strided_slice %27 {offsets = [0, 0], sizes = [8, 96], strides = [1, 1]} : vector<16x96xf32> to vector<8x96xf32>
      %29 = arith.truncf %28 : vector<8x96xf32> to vector<8x96xbf16>
      %30 = vector.extract_strided_slice %29 {offsets = [0, 0], sizes = [8, 24], strides = [1, 1]} : vector<8x96xbf16> to vector<8x24xbf16>
      %31 = vector.extract_strided_slice %29 {offsets = [0, 24], sizes = [8, 24], strides = [1, 1]} : vector<8x96xbf16> to vector<8x24xbf16>
      %32 = vector.extract_strided_slice %29 {offsets = [0, 48], sizes = [8, 24], strides = [1, 1]} : vector<8x96xbf16> to vector<8x24xbf16>
      %33 = vector.extract_strided_slice %29 {offsets = [0, 72], sizes = [8, 24], strides = [1, 1]} : vector<8x96xbf16> to vector<8x24xbf16>
      %34 = vector.shape_cast %30 : vector<8x24xbf16> to vector<1x8x24xbf16>
      %35 = vector.shape_cast %31 : vector<8x24xbf16> to vector<1x8x24xbf16>
      %36 = vector.shape_cast %32 : vector<8x24xbf16> to vector<1x8x24xbf16>
      %37 = vector.shape_cast %33 : vector<8x24xbf16> to vector<1x8x24xbf16>
      %38 = tpu.concatenate %34, %35, %36, %37 in 0 : vector<1x8x24xbf16>, vector<1x8x24xbf16>, vector<1x8x24xbf16>, vector<1x8x24xbf16> -> vector<4x8x24xbf16>
      %39 = vector.extract_strided_slice %38 {offsets = [0, 0, 0], sizes = [4, 8, 8], strides = [1, 1, 1]} : vector<4x8x24xbf16> to vector<4x8x8xbf16>
      %40 = vector.extract_strided_slice %38 {offsets = [0, 0, 8], sizes = [4, 8, 8], strides = [1, 1, 1]} : vector<4x8x24xbf16> to vector<4x8x8xbf16>
      %41 = vector.extract_strided_slice %38 {offsets = [0, 0, 16], sizes = [4, 8, 8], strides = [1, 1, 1]} : vector<4x8x24xbf16> to vector<4x8x8xbf16>
      "tpu.trace_start"() <{level = 10 : i32, message = "hqd,hkd->hqk"}> : () -> ()
      %cst_23 = arith.constant dense<0.000000e+00> : vector<4x8x8xf32>
      %42 = tpu.matmul %39, %40, %cst_23 {dimension_numbers = #tpu.dot_dimension_numbers<[2], [2], [1], [1], [0, 0, 0, 1, 1, 1], [0], [0]>} : vector<4x8x8xbf16>, vector<4x8x8xbf16>, vector<4x8x8xf32> -> vector<4x8x8xf32>
      "tpu.trace_stop"() : () -> ()
      %cst_24 = arith.constant dense<0xFF800000> : vector<4x8xf32>
      %43 = vector.multi_reduction <maximumf>, %42, %cst_24 [2] : vector<4x8x8xf32> to vector<4x8xf32>
      %44 = vector.shape_cast %43 : vector<4x8xf32> to vector<4x8x1xf32>
      %45 = vector.broadcast %44 : vector<4x8x1xf32> to vector<4x8x8xf32>
      %46 = arith.subf %42, %45 : vector<4x8x8xf32>
      %47 = math.exp %46 : vector<4x8x8xf32>
      %cst_25 = arith.constant dense<0.000000e+00> : vector<4x8xf32>
      %48 = vector.multi_reduction <add>, %47, %cst_25 [2] : vector<4x8x8xf32> to vector<4x8xf32>
      %49 = vector.shape_cast %48 : vector<4x8xf32> to vector<4x8x1xf32>
      %50 = arith.truncf %47 : vector<4x8x8xf32> to vector<4x8x8xbf16>
      "tpu.trace_start"() <{level = 10 : i32, message = "hqk,hkd->hqd"}> : () -> ()
      %cst_26 = arith.constant dense<0.000000e+00> : vector<4x8x8xf32>
      %51 = tpu.matmul %50, %41, %cst_26 {dimension_numbers = #tpu.dot_dimension_numbers<[2], [1], [1], [2], [0, 0, 0, 1, 1, 2], [0], [0]>} : vector<4x8x8xbf16>, vector<4x8x8xbf16>, vector<4x8x8xf32> -> vector<4x8x8xf32>
      "tpu.trace_stop"() : () -> ()
      %52 = tpu.reciprocal %49 {approx = true} : vector<4x8x1xf32> -> vector<4x8x1xf32>
      %53 = vector.broadcast %52 : vector<4x8x1xf32> to vector<4x8x8xf32>
      %54 = arith.mulf %51, %53 : vector<4x8x8xf32>
      %55 = vector.extract_strided_slice %54 {offsets = [0, 0, 0], sizes = [1, 8, 8], strides = [1, 1, 1]} : vector<4x8x8xf32> to vector<1x8x8xf32>
      %56 = vector.shape_cast %55 : vector<1x8x8xf32> to vector<8x8xf32>
      %57 = vector.extract_strided_slice %54 {offsets = [1, 0, 0], sizes = [1, 8, 8], strides = [1, 1, 1]} : vector<4x8x8xf32> to vector<1x8x8xf32>
      %58 = vector.shape_cast %57 : vector<1x8x8xf32> to vector<8x8xf32>
      %59 = vector.extract_strided_slice %54 {offsets = [2, 0, 0], sizes = [1, 8, 8], strides = [1, 1, 1]} : vector<4x8x8xf32> to vector<1x8x8xf32>
      %60 = vector.shape_cast %59 : vector<1x8x8xf32> to vector<8x8xf32>
      %61 = vector.extract_strided_slice %54 {offsets = [3, 0, 0], sizes = [1, 8, 8], strides = [1, 1, 1]} : vector<4x8x8xf32> to vector<1x8x8xf32>
      %62 = vector.shape_cast %61 : vector<1x8x8xf32> to vector<8x8xf32>
      %63 = tpu.concatenate %56, %58, %60, %62 in 1 : vector<8x8xf32>, vector<8x8xf32>, vector<8x8xf32>, vector<8x8xf32> -> vector<8x32xf32>
      %64 = vector.extract_strided_slice %27 {offsets = [8, 0], sizes = [8, 96], strides = [1, 1]} : vector<16x96xf32> to vector<8x96xf32>
      %65 = arith.truncf %64 : vector<8x96xf32> to vector<8x96xbf16>
      %66 = vector.extract_strided_slice %65 {offsets = [0, 0], sizes = [8, 24], strides = [1, 1]} : vector<8x96xbf16> to vector<8x24xbf16>
      %67 = vector.extract_strided_slice %65 {offsets = [0, 24], sizes = [8, 24], strides = [1, 1]} : vector<8x96xbf16> to vector<8x24xbf16>
      %68 = vector.extract_strided_slice %65 {offsets = [0, 48], sizes = [8, 24], strides = [1, 1]} : vector<8x96xbf16> to vector<8x24xbf16>
      %69 = vector.extract_strided_slice %65 {offsets = [0, 72], sizes = [8, 24], strides = [1, 1]} : vector<8x96xbf16> to vector<8x24xbf16>
      %70 = vector.shape_cast %66 : vector<8x24xbf16> to vector<1x8x24xbf16>
      %71 = vector.shape_cast %67 : vector<8x24xbf16> to vector<1x8x24xbf16>
      %72 = vector.shape_cast %68 : vector<8x24xbf16> to vector<1x8x24xbf16>
      %73 = vector.shape_cast %69 : vector<8x24xbf16> to vector<1x8x24xbf16>
      %74 = tpu.concatenate %70, %71, %72, %73 in 0 : vector<1x8x24xbf16>, vector<1x8x24xbf16>, vector<1x8x24xbf16>, vector<1x8x24xbf16> -> vector<4x8x24xbf16>
      %75 = vector.extract_strided_slice %74 {offsets = [0, 0, 0], sizes = [4, 8, 8], strides = [1, 1, 1]} : vector<4x8x24xbf16> to vector<4x8x8xbf16>
      %76 = vector.extract_strided_slice %74 {offsets = [0, 0, 8], sizes = [4, 8, 8], strides = [1, 1, 1]} : vector<4x8x24xbf16> to vector<4x8x8xbf16>
      %77 = vector.extract_strided_slice %74 {offsets = [0, 0, 16], sizes = [4, 8, 8], strides = [1, 1, 1]} : vector<4x8x24xbf16> to vector<4x8x8xbf16>
      "tpu.trace_start"() <{level = 10 : i32, message = "hqd,hkd->hqk"}> : () -> ()
      %cst_27 = arith.constant dense<0.000000e+00> : vector<4x8x8xf32>
      %78 = tpu.matmul %75, %76, %cst_27 {dimension_numbers = #tpu.dot_dimension_numbers<[2], [2], [1], [1], [0, 0, 0, 1, 1, 1], [0], [0]>} : vector<4x8x8xbf16>, vector<4x8x8xbf16>, vector<4x8x8xf32> -> vector<4x8x8xf32>
      "tpu.trace_stop"() : () -> ()
      %cst_28 = arith.constant dense<0xFF800000> : vector<4x8xf32>
      %79 = vector.multi_reduction <maximumf>, %78, %cst_28 [2] : vector<4x8x8xf32> to vector<4x8xf32>
      %80 = vector.shape_cast %79 : vector<4x8xf32> to vector<4x8x1xf32>
      %81 = vector.broadcast %80 : vector<4x8x1xf32> to vector<4x8x8xf32>
      %82 = arith.subf %78, %81 : vector<4x8x8xf32>
      %83 = math.exp %82 : vector<4x8x8xf32>
      %cst_29 = arith.constant dense<0.000000e+00> : vector<4x8xf32>
      %84 = vector.multi_reduction <add>, %83, %cst_29 [2] : vector<4x8x8xf32> to vector<4x8xf32>
      %85 = vector.shape_cast %84 : vector<4x8xf32> to vector<4x8x1xf32>
      %86 = arith.truncf %83 : vector<4x8x8xf32> to vector<4x8x8xbf16>
      "tpu.trace_start"() <{level = 10 : i32, message = "hqk,hkd->hqd"}> : () -> ()
      %cst_30 = arith.constant dense<0.000000e+00> : vector<4x8x8xf32>
      %87 = tpu.matmul %86, %77, %cst_30 {dimension_numbers = #tpu.dot_dimension_numbers<[2], [1], [1], [2], [0, 0, 0, 1, 1, 2], [0], [0]>} : vector<4x8x8xbf16>, vector<4x8x8xbf16>, vector<4x8x8xf32> -> vector<4x8x8xf32>
      "tpu.trace_stop"() : () -> ()
      %88 = tpu.reciprocal %85 {approx = true} : vector<4x8x1xf32> -> vector<4x8x1xf32>
      %89 = vector.broadcast %88 : vector<4x8x1xf32> to vector<4x8x8xf32>
      %90 = arith.mulf %87, %89 : vector<4x8x8xf32>
      %91 = vector.extract_strided_slice %90 {offsets = [0, 0, 0], sizes = [1, 8, 8], strides = [1, 1, 1]} : vector<4x8x8xf32> to vector<1x8x8xf32>
      %92 = vector.shape_cast %91 : vector<1x8x8xf32> to vector<8x8xf32>
      %93 = vector.extract_strided_slice %90 {offsets = [1, 0, 0], sizes = [1, 8, 8], strides = [1, 1, 1]} : vector<4x8x8xf32> to vector<1x8x8xf32>
      %94 = vector.shape_cast %93 : vector<1x8x8xf32> to vector<8x8xf32>
      %95 = vector.extract_strided_slice %90 {offsets = [2, 0, 0], sizes = [1, 8, 8], strides = [1, 1, 1]} : vector<4x8x8xf32> to vector<1x8x8xf32>
      %96 = vector.shape_cast %95 : vector<1x8x8xf32> to vector<8x8xf32>
      %97 = vector.extract_strided_slice %90 {offsets = [3, 0, 0], sizes = [1, 8, 8], strides = [1, 1, 1]} : vector<4x8x8xf32> to vector<1x8x8xf32>
      %98 = vector.shape_cast %97 : vector<1x8x8xf32> to vector<8x8xf32>
      %99 = tpu.concatenate %92, %94, %96, %98 in 1 : vector<8x8xf32>, vector<8x8xf32>, vector<8x8xf32>, vector<8x8xf32> -> vector<8x32xf32>
      %100 = tpu.concatenate %63, %99 in 0 : vector<8x32xf32>, vector<8x32xf32> -> vector<16x32xf32>
      %101 = arith.truncf %100 : vector<16x32xf32> to vector<16x32xbf16>
      %c0_31 = arith.constant 0 : index
      %c0_32 = arith.constant 0 : index
      %102 = vector.load %arg5[%c0_31, %c0_32] : memref<32x32xbf16, #tpu.memory_space<vmem>>, vector<32x32xbf16>
      %cst_33 = arith.constant dense<0.000000e+00> : vector<16x32xf32>
      %103 = tpu.matmul %101, %102, %cst_33 {dimension_numbers = #tpu.dot_dimension_numbers<[1], [0], [0], [1], [0, 0, 1, 1], [], []>} : vector<16x32xbf16>, vector<32x32xbf16>, vector<16x32xf32> -> vector<16x32xf32>
      %c0_34 = arith.constant 0 : index
      %c0_35 = arith.constant 0 : index
      %104 = vector.load %arg6[%c0_34, %c0_35] : memref<1x32xf32, #tpu.memory_space<vmem>>, vector<1x32xf32>
      %105 = vector.broadcast %104 : vector<1x32xf32> to vector<16x32xf32>
      %106 = arith.addf %103, %105 : vector<16x32xf32>
      %107 = arith.addf %21, %106 : vector<16x32xf32>
      %cst_36 = arith.constant dense<0.000000e+00> : vector<16xf32>
      %108 = vector.multi_reduction <add>, %107, %cst_36 [1] : vector<16x32xf32> to vector<16xf32>
      %109 = vector.shape_cast %108 : vector<16xf32> to vector<16x1xf32>
      %cst_37 = arith.constant 3.200000e+01 : f32
      %110 = vector.broadcast %cst_37 : f32 to vector<16x1xf32>
      %111 = arith.divf %109, %110 : vector<16x1xf32>
      %112 = vector.broadcast %111 : vector<16x1xf32> to vector<16x32xf32>
      %113 = arith.subf %107, %112 : vector<16x32xf32>
      %114 = arith.mulf %113, %113 : vector<16x32xf32>
      %cst_38 = arith.constant dense<0.000000e+00> : vector<16xf32>
      %115 = vector.multi_reduction <add>, %114, %cst_38 [1] : vector<16x32xf32> to vector<16xf32>
      %116 = vector.shape_cast %115 : vector<16xf32> to vector<16x1xf32>
      %cst_39 = arith.constant 3.200000e+01 : f32
      %117 = vector.broadcast %cst_39 : f32 to vector<16x1xf32>
      %118 = arith.divf %116, %117 : vector<16x1xf32>
      %cst_40 = arith.constant 9.99999974E-6 : f32
      %119 = vector.broadcast %cst_40 : f32 to vector<16x1xf32>
      %120 = arith.addf %118, %119 : vector<16x1xf32>
      %121 = math.rsqrt %120 : vector<16x1xf32>
      %122 = vector.broadcast %121 : vector<16x1xf32> to vector<16x32xf32>
      %123 = arith.mulf %113, %122 : vector<16x32xf32>
      %c0_41 = arith.constant 0 : index
      %c0_42 = arith.constant 0 : index
      %124 = vector.load %arg7[%c0_41, %c0_42] : memref<1x32xf32, #tpu.memory_space<vmem>>, vector<1x32xf32>
      %125 = vector.broadcast %124 : vector<1x32xf32> to vector<16x32xf32>
      %126 = arith.mulf %123, %125 : vector<16x32xf32>
      %c0_43 = arith.constant 0 : index
      %c0_44 = arith.constant 0 : index
      %127 = vector.load %arg8[%c0_43, %c0_44] : memref<1x32xf32, #tpu.memory_space<vmem>>, vector<1x32xf32>
      %128 = vector.broadcast %127 : vector<1x32xf32> to vector<16x32xf32>
      %129 = arith.addf %126, %128 : vector<16x32xf32>
      %c0_45 = arith.constant 0 : index
      %c0_46 = arith.constant 0 : index
      %130 = vector.load %arg16[%c0_45, %c0_46] : memref<16x32xf32, #tpu.memory_space<vmem>>, vector<16x32xf32>
      tpu.vector_store %arg16[%c0_45, %c0_46], %129 {strides = array<i32>} : memref<16x32xf32, #tpu.memory_space<vmem>>, vector<16x32xf32>,
      %cst_47 = arith.constant 0.000000e+00 : f32
      %131 = vector.broadcast %cst_47 : f32 to vector<16x32xf32>
      %c0_48 = arith.constant 0 : index
      %c0_49 = arith.constant 0 : index
      %132 = vector.load %arg17[%c0_48, %c0_49] : memref<16x32xf32, #tpu.memory_space<vmem>>, vector<16x32xf32>
      tpu.vector_store %arg17[%c0_48, %c0_49], %131 {strides = array<i32>} : memref<16x32xf32, #tpu.memory_space<vmem>>, vector<16x32xf32>,
    } else {
    }
    %c0 = arith.constant 0 : index
    %c0_1 = arith.constant 0 : index
    %3 = vector.load %arg16[%c0, %c0_1] : memref<16x32xf32, #tpu.memory_space<vmem>>, vector<16x32xf32>
    %4 = arith.truncf %3 : vector<16x32xf32> to vector<16x32xbf16>
    %c0_2 = arith.constant 0 : index
    %c0_3 = arith.constant 0 : index
    %5 = vector.load %arg9[%c0_2, %c0_3] : memref<32x64xbf16, #tpu.memory_space<vmem>>, vector<32x64xbf16>
    %cst = arith.constant dense<0.000000e+00> : vector<16x64xf32>
    %6 = tpu.matmul %4, %5, %cst {dimension_numbers = #tpu.dot_dimension_numbers<[1], [0], [0], [1], [0, 0, 1, 1], [], []>} : vector<16x32xbf16>, vector<32x64xbf16>, vector<16x64xf32> -> vector<16x64xf32>
    %c0_4 = arith.constant 0 : index
    %c0_5 = arith.constant 0 : index
    %7 = vector.load %arg10[%c0_4, %c0_5] : memref<1x64xf32, #tpu.memory_space<vmem>>, vector<1x64xf32>
    %8 = vector.broadcast %7 : vector<1x64xf32> to vector<16x64xf32>
    %9 = arith.addf %6, %8 : vector<16x64xf32>
    %cst_6 = arith.constant 0.000000e+00 : f32
    %10 = vector.broadcast %cst_6 : f32 to vector<16x64xf32>
    %11 = arith.maximumf %9, %10 : vector<16x64xf32>
    %c0_7 = arith.constant 0 : index
    %c0_8 = arith.constant 0 : index
    %12 = vector.load %arg17[%c0_7, %c0_8] : memref<16x32xf32, #tpu.memory_space<vmem>>, vector<16x32xf32>
    %13 = arith.truncf %11 : vector<16x64xf32> to vector<16x64xbf16>
    %c0_9 = arith.constant 0 : index
    %c0_10 = arith.constant 0 : index
    %14 = vector.load %arg11[%c0_9, %c0_10] : memref<64x32xbf16, #tpu.memory_space<vmem>>, vector<64x32xbf16>
    %cst_11 = arith.constant dense<0.000000e+00> : vector<16x32xf32>
    %15 = tpu.matmul %13, %14, %cst_11 {dimension_numbers = #tpu.dot_dimension_numbers<[1], [0], [0], [1], [0, 0, 1, 1], [], []>} : vector<16x64xbf16>, vector<64x32xbf16>, vector<16x32xf32> -> vector<16x32xf32>
    %16 = arith.addf %12, %15 : vector<16x32xf32>
    %c0_12 = arith.constant 0 : index
    %c0_13 = arith.constant 0 : index
    %17 = vector.load %arg17[%c0_12, %c0_13] : memref<16x32xf32, #tpu.memory_space<vmem>>, vector<16x32xf32>
    tpu.vector_store %arg17[%c0_12, %c0_13], %16 {strides = array<i32>} : memref<16x32xf32, #tpu.memory_space<vmem>>, vector<16x32xf32>,
    %c0_i32_14 = arith.constant 0 : i32
    %18 = arith.cmpi eq, %arg1, %c0_i32_14 : i32
    %19 = arith.extui %18 : i1 to i32
    %c0_i32_15 = arith.constant 0 : i32
    %20 = arith.cmpi ne, %19, %c0_i32_15 : i32
    scf.if %20 {
      %c0_16 = arith.constant 0 : index
      %c0_17 = arith.constant 0 : index
      %21 = vector.load %arg16[%c0_16, %c0_17] : memref<16x32xf32, #tpu.memory_space<vmem>>, vector<16x32xf32>
      %c0_18 = arith.constant 0 : index
      %c0_19 = arith.constant 0 : index
      %22 = vector.load %arg17[%c0_18, %c0_19] : memref<16x32xf32, #tpu.memory_space<vmem>>, vector<16x32xf32>
      %23 = arith.addf %21, %22 : vector<16x32xf32>
      %c0_20 = arith.constant 0 : index
      %c0_21 = arith.constant 0 : index
      %24 = vector.load %arg12[%c0_20, %c0_21] : memref<1x32xf32, #tpu.memory_space<vmem>>, vector<1x32xf32>
      %25 = vector.broadcast %24 : vector<1x32xf32> to vector<16x32xf32>
      %26 = arith.addf %23, %25 : vector<16x32xf32>
      %cst_22 = arith.constant dense<0.000000e+00> : vector<16xf32>
      %27 = vector.multi_reduction <add>, %26, %cst_22 [1] : vector<16x32xf32> to vector<16xf32>
      %28 = vector.shape_cast %27 : vector<16xf32> to vector<16x1xf32>
      %cst_23 = arith.constant 3.200000e+01 : f32
      %29 = vector.broadcast %cst_23 : f32 to vector<16x1xf32>
      %30 = arith.divf %28, %29 : vector<16x1xf32>
      %31 = vector.broadcast %30 : vector<16x1xf32> to vector<16x32xf32>
      %32 = arith.subf %26, %31 : vector<16x32xf32>
      %33 = arith.mulf %32, %32 : vector<16x32xf32>
      %cst_24 = arith.constant dense<0.000000e+00> : vector<16xf32>
      %34 = vector.multi_reduction <add>, %33, %cst_24 [1] : vector<16x32xf32> to vector<16xf32>
      %35 = vector.shape_cast %34 : vector<16xf32> to vector<16x1xf32>
      %cst_25 = arith.constant 3.200000e+01 : f32
      %36 = vector.broadcast %cst_25 : f32 to vector<16x1xf32>
      %37 = arith.divf %35, %36 : vector<16x1xf32>
      %cst_26 = arith.constant 9.99999974E-6 : f32
      %38 = vector.broadcast %cst_26 : f32 to vector<16x1xf32>
      %39 = arith.addf %37, %38 : vector<16x1xf32>
      %40 = math.rsqrt %39 : vector<16x1xf32>
      %41 = vector.broadcast %40 : vector<16x1xf32> to vector<16x32xf32>
      %42 = arith.mulf %32, %41 : vector<16x32xf32>
      %c0_27 = arith.constant 0 : index
      %c0_28 = arith.constant 0 : index
      %43 = vector.load %arg13[%c0_27, %c0_28] : memref<1x32xf32, #tpu.memory_space<vmem>>, vector<1x32xf32>
      %44 = vector.broadcast %43 : vector<1x32xf32> to vector<16x32xf32>
      %45 = arith.mulf %42, %44 : vector<16x32xf32>
      %c0_29 = arith.constant 0 : index
      %c0_30 = arith.constant 0 : index
      %46 = vector.load %arg14[%c0_29, %c0_30] : memref<1x32xf32, #tpu.memory_space<vmem>>, vector<1x32xf32>
      %47 = vector.broadcast %46 : vector<1x32xf32> to vector<16x32xf32>
      %48 = arith.addf %45, %47 : vector<16x32xf32>
      %c0_31 = arith.constant 0 : index
      %c0_32 = arith.constant 0 : index
      %49 = vector.load %arg15[%c0_31, %c0_32] : memref<16x32xf32, #tpu.memory_space<vmem>>, vector<16x32xf32>
      tpu.vector_store %arg15[%c0_31, %c0_32], %48 {strides = array<i32>} : memref<16x32xf32, #tpu.memory_space<vmem>>, vector<16x32xf32>,
    } else {
    }
    return
  }
  func.func @transform_0(%arg0: i32, %arg1: i32) -> (i32, i32) {
    %c0_i32 = arith.constant 0 : i32
    %c0_i32_0 = arith.constant 0 : i32
    return %arg0, %c0_i32 : i32, i32
  }
  func.func @transform_1(%arg0: i32, %arg1: i32) -> (i32, i32) {
    %c0_i32 = arith.constant 0 : i32
    %c0_i32_0 = arith.constant 0 : i32
    %c0_i32_1 = arith.constant 0 : i32
    return %c0_i32, %c0_i32_0 : i32, i32
  }
  func.func @transform_2(%arg0: i32, %arg1: i32) -> (i32, i32) {
    %c0_i32 = arith.constant 0 : i32
    %c0_i32_0 = arith.constant 0 : i32
    %c0_i32_1 = arith.constant 0 : i32
    return %c0_i32, %c0_i32_0 : i32, i32
  }
  func.func @transform_3(%arg0: i32, %arg1: i32) -> (i32, i32) {
    %c0_i32 = arith.constant 0 : i32
    %c0_i32_0 = arith.constant 0 : i32
    %c0_i32_1 = arith.constant 0 : i32
    return %c0_i32, %c0_i32_0 : i32, i32
  }
  func.func @transform_4(%arg0: i32, %arg1: i32) -> (i32, i32) {
    %c0_i32 = arith.constant 0 : i32
    %c0_i32_0 = arith.constant 0 : i32
    %c0_i32_1 = arith.constant 0 : i32
    return %c0_i32, %c0_i32_0 : i32, i32
  }
  func.func @transform_5(%arg0: i32, %arg1: i32) -> (i32, i32) {
    %c0_i32 = arith.constant 0 : i32
    %c0_i32_0 = arith.constant 0 : i32
    %c0_i32_1 = arith.constant 0 : i32
    return %c0_i32, %c0_i32_0 : i32, i32
  }
  func.func @transform_6(%arg0: i32, %arg1: i32) -> (i32, i32) {
    %c0_i32 = arith.constant 0 : i32
    %c0_i32_0 = arith.constant 0 : i32
    %c0_i32_1 = arith.constant 0 : i32
    return %c0_i32, %c0_i32_0 : i32, i32
  }
  func.func @transform_7(%arg0: i32, %arg1: i32) -> (i32, i32) {
    %c0_i32 = arith.constant 0 : i32
    %c0_i32_0 = arith.constant 0 : i32
    return %c0_i32, %arg1 : i32, i32
  }
  func.func @transform_8(%arg0: i32, %arg1: i32) -> (i32, i32) {
    %c0_i32 = arith.constant 0 : i32
    %c0_i32_0 = arith.constant 0 : i32
    return %c0_i32, %arg1 : i32, i32
  }
  func.func @transform_9(%arg0: i32, %arg1: i32) -> (i32, i32) {
    %c0_i32 = arith.constant 0 : i32
    %c0_i32_0 = arith.constant 0 : i32
    return %arg1, %c0_i32 : i32, i32
  }
  func.func @transform_10(%arg0: i32, %arg1: i32) -> (i32, i32) {
    %c0_i32 = arith.constant 0 : i32
    %c0_i32_0 = arith.constant 0 : i32
    %c0_i32_1 = arith.constant 0 : i32
    return %c0_i32, %c0_i32_0 : i32, i32
  }
  func.func @transform_11(%arg0: i32, %arg1: i32) -> (i32, i32) {
    %c0_i32 = arith.constant 0 : i32
    %c0_i32_0 = arith.constant 0 : i32
    %c0_i32_1 = arith.constant 0 : i32
    return %c0_i32, %c0_i32_0 : i32, i32
  }
  func.func @transform_12(%arg0: i32, %arg1: i32) -> (i32, i32) {
    %c0_i32 = arith.constant 0 : i32
    %c0_i32_0 = arith.constant 0 : i32
    %c0_i32_1 = arith.constant 0 : i32
    return %c0_i32, %c0_i32_0 : i32, i32
  }
  func.func @transform_13(%arg0: i32, %arg1: i32) -> (i32, i32) {
    %c0_i32 = arith.constant 0 : i32
    %c0_i32_0 = arith.constant 0 : i32
    return %arg0, %c0_i32 : i32, i32
  }
}

module attributes {stable_mosaic.version = 11 : i64} {
  func.func @encoder_block_kernel(%arg0: i32, %arg1: i32, %arg2: memref<16x32xf32, #tpu.memory_space<vmem>>, %arg3: memref<32x96xbf16, #tpu.memory_space<vmem>>, %arg4: memref<1x96xf32, #tpu.memory_space<vmem>>, %arg5: memref<32x32xbf16, #tpu.memory_space<vmem>>, %arg6: memref<1x32xf32, #tpu.memory_space<vmem>>, %arg7: memref<1x32xf32, #tpu.memory_space<vmem>>, %arg8: memref<1x32xf32, #tpu.memory_space<vmem>>, %arg9: memref<32x64xbf16, #tpu.memory_space<vmem>>, %arg10: memref<1x64xf32, #tpu.memory_space<vmem>>, %arg11: memref<64x32xbf16, #tpu.memory_space<vmem>>, %arg12: memref<1x32xf32, #tpu.memory_space<vmem>>, %arg13: memref<1x32xf32, #tpu.memory_space<vmem>>, %arg14: memref<1x32xf32, #tpu.memory_space<vmem>>, %arg15: memref<16x32xf32, #tpu.memory_space<vmem>>, %arg16: memref<16x32xf32, #tpu.memory_space<vmem>>, %arg17: memref<16x32xf32, #tpu.memory_space<vmem>>) attributes {dimension_semantics = [#tpu.dimension_semantics<parallel>, #tpu.dimension_semantics<arbitrary>], iteration_bounds = array<i64: 1, 1>, scalar_prefetch = 0 : i64, scratch_operands = 2 : i64, tpu.core_type = #tpu.core_type<tc>, window_params = [{transform_indices = @transform_0, window_bounds = array<i64: 16, 32>}, {pipeline_mode = #tpu.pipeline_mode<synchronous>, transform_indices = @transform_1, window_bounds = array<i64: 32, 96>}, {pipeline_mode = #tpu.pipeline_mode<synchronous>, transform_indices = @transform_2, window_bounds = array<i64: 1, 96>}, {pipeline_mode = #tpu.pipeline_mode<synchronous>, transform_indices = @transform_3, window_bounds = array<i64: 32, 32>}, {pipeline_mode = #tpu.pipeline_mode<synchronous>, transform_indices = @transform_4, window_bounds = array<i64: 1, 32>}, {pipeline_mode = #tpu.pipeline_mode<synchronous>, transform_indices = @transform_5, window_bounds = array<i64: 1, 32>}, {pipeline_mode = #tpu.pipeline_mode<synchronous>, transform_indices = @transform_6, window_bounds = array<i64: 1, 32>}, {transform_indices = @transform_7, window_bounds = array<i64: 32, 64>}, {transform_indices = @transform_8, window_bounds = array<i64: 1, 64>}, {transform_indices = @transform_9, window_bounds = array<i64: 64, 32>}, {pipeline_mode = #tpu.pipeline_mode<synchronous>, transform_indices = @transform_10, window_bounds = array<i64: 1, 32>}, {pipeline_mode = #tpu.pipeline_mode<synchronous>, transform_indices = @transform_11, window_bounds = array<i64: 1, 32>}, {pipeline_mode = #tpu.pipeline_mode<synchronous>, transform_indices = @transform_12, window_bounds = array<i64: 1, 32>}, {transform_indices = @transform_13, window_bounds = array<i64: 16, 32>}]} {
    %c0_i32 = arith.constant 0 : i32
    %0 = arith.cmpi eq, %arg1, %c0_i32 : i32
    %1 = arith.extui %0 : i1 to i32
    %c0_i32_0 = arith.constant 0 : i32
    %2 = arith.cmpi ne, %1, %c0_i32_0 : i32
    scf.if %2 {
      %c0_16 = arith.constant 0 : index
      %c0_17 = arith.constant 0 : index
      %21 = vector.load %arg2[%c0_16, %c0_17] : memref<16x32xf32, #tpu.memory_space<vmem>>, vector<16x32xf32>
      %22 = arith.truncf %21 : vector<16x32xf32> to vector<16x32xbf16>
      %c0_18 = arith.constant 0 : index
      %c0_19 = arith.constant 0 : index
      %23 = vector.load %arg3[%c0_18, %c0_19] : memref<32x96xbf16, #tpu.memory_space<vmem>>, vector<32x96xbf16>
      %cst_20 = arith.constant dense<0.000000e+00> : vector<16x96xf32>
      %24 = tpu.matmul %22, %23, %cst_20 {dimension_numbers = #tpu.dot_dimension_numbers<[1], [0], [0], [1], [0, 0, 1, 1], [], []>} : vector<16x32xbf16>, vector<32x96xbf16>, vector<16x96xf32> -> vector<16x96xf32>
      %c0_21 = arith.constant 0 : index
      %c0_22 = arith.constant 0 : index
      %25 = vector.load %arg4[%c0_21, %c0_22] : memref<1x96xf32, #tpu.memory_space<vmem>>, vector<1x96xf32>
      %26 = vector.broadcast %25 : vector<1x96xf32> to vector<16x96xf32>
      %27 = arith.addf %24, %26 : vector<16x96xf32>
      %28 = vector.extract_strided_slice %27 {offsets = [0, 0], sizes = [8, 96], strides = [1, 1]} : vector<16x96xf32> to vector<8x96xf32>
      %29 = arith.truncf %28 : vector<8x96xf32> to vector<8x96xbf16>
      %30 = vector.extract_strided_slice %29 {offsets = [0, 0], sizes = [8, 24], strides = [1, 1]} : vector<8x96xbf16> to vector<8x24xbf16>
      %31 = vector.extract_strided_slice %29 {offsets = [0, 24], sizes = [8, 24], strides = [1, 1]} : vector<8x96xbf16> to vector<8x24xbf16>
      %32 = vector.extract_strided_slice %29 {offsets = [0, 48], sizes = [8, 24], strides = [1, 1]} : vector<8x96xbf16> to vector<8x24xbf16>
      %33 = vector.extract_strided_slice %29 {offsets = [0, 72], sizes = [8, 24], strides = [1, 1]} : vector<8x96xbf16> to vector<8x24xbf16>
      %34 = vector.shape_cast %30 : vector<8x24xbf16> to vector<1x8x24xbf16>
      %35 = vector.shape_cast %31 : vector<8x24xbf16> to vector<1x8x24xbf16>
      %36 = vector.shape_cast %32 : vector<8x24xbf16> to vector<1x8x24xbf16>
      %37 = vector.shape_cast %33 : vector<8x24xbf16> to vector<1x8x24xbf16>
      %38 = tpu.concatenate %34, %35, %36, %37 in 0 : vector<1x8x24xbf16>, vector<1x8x24xbf16>, vector<1x8x24xbf16>, vector<1x8x24xbf16> -> vector<4x8x24xbf16>
      %39 = vector.extract_strided_slice %38 {offsets = [0, 0, 0], sizes = [4, 8, 8], strides = [1, 1, 1]} : vector<4x8x24xbf16> to vector<4x8x8xbf16>
      %40 = vector.extract_strided_slice %38 {offsets = [0, 0, 8], sizes = [4, 8, 8], strides = [1, 1, 1]} : vector<4x8x24xbf16> to vector<4x8x8xbf16>
      %41 = vector.extract_strided_slice %38 {offsets = [0, 0, 16], sizes = [4, 8, 8], strides = [1, 1, 1]} : vector<4x8x24xbf16> to vector<4x8x8xbf16>
      "tpu.trace_start"() <{level = 10 : i32, message = "hqd,hkd->hqk"}> : () -> ()
      %cst_23 = arith.constant dense<0.000000e+00> : vector<4x8x8xf32>
      %42 = tpu.matmul %39, %40, %cst_23 {dimension_numbers = #tpu.dot_dimension_numbers<[2], [2], [1], [1], [0, 0, 0, 1, 1, 1], [0], [0]>} : vector<4x8x8xbf16>, vector<4x8x8xbf16>, vector<4x8x8xf32> -> vector<4x8x8xf32>
      "tpu.trace_stop"() : () -> ()
      %cst_24 = arith.constant dense<0xFF800000> : vector<4x8xf32>
      %43 = vector.multi_reduction <maximumf>, %42, %cst_24 [2] : vector<4x8x8xf32> to vector<4x8xf32>
      %44 = vector.shape_cast %43 : vector<4x8xf32> to vector<4x8x1xf32>
      %45 = vector.broadcast %44 : vector<4x8x1xf32> to vector<4x8x8xf32>
      %46 = arith.subf %42, %45 : vector<4x8x8xf32>
      %47 = math.exp %46 : vector<4x8x8xf32>
      %cst_25 = arith.constant dense<0.000000e+00> : vector<4x8xf32>
      %48 = vector.multi_reduction <add>, %47, %cst_25 [2] : vector<4x8x8xf32> to vector<4x8xf32>
      %49 = vector.shape_cast %48 : vector<4x8xf32> to vector<4x8x1xf32>
      %50 = arith.truncf %47 : vector<4x8x8xf32> to vector<4x8x8xbf16>
      "tpu.trace_start"() <{level = 10 : i32, message = "hqk,hkd->hqd"}> : () -> ()
      %cst_26 = arith.constant dense<0.000000e+00> : vector<4x8x8xf32>
      %51 = tpu.matmul %50, %41, %cst_26 {dimension_numbers = #tpu.dot_dimension_numbers<[2], [1], [1], [2], [0, 0, 0, 1, 1, 2], [0], [0]>} : vector<4x8x8xbf16>, vector<4x8x8xbf16>, vector<4x8x8xf32> -> vector<4x8x8xf32>
      "tpu.trace_stop"() : () -> ()
      %52 = tpu.reciprocal %49 {approx = true} : vector<4x8x1xf32> -> vector<4x8x1xf32>
      %53 = vector.broadcast %52 : vector<4x8x1xf32> to vector<4x8x8xf32>
      %54 = arith.mulf %51, %53 : vector<4x8x8xf32>
      %55 = vector.extract_strided_slice %54 {offsets = [0, 0, 0], sizes = [1, 8, 8], strides = [1, 1, 1]} : vector<4x8x8xf32> to vector<1x8x8xf32>
      %56 = vector.shape_cast %55 : vector<1x8x8xf32> to vector<8x8xf32>
      %57 = vector.extract_strided_slice %54 {offsets = [1, 0, 0], sizes = [1, 8, 8], strides = [1, 1, 1]} : vector<4x8x8xf32> to vector<1x8x8xf32>
      %58 = vector.shape_cast %57 : vector<1x8x8xf32> to vector<8x8xf32>
      %59 = vector.extract_strided_slice %54 {offsets = [2, 0, 0], sizes = [1, 8, 8], strides = [1, 1, 1]} : vector<4x8x8xf32> to vector<1x8x8xf32>
      %60 = vector.shape_cast %59 : vector<1x8x8xf32> to vector<8x8xf32>
      %61 = vector.extract_strided_slice %54 {offsets = [3, 0, 0], sizes = [1, 8, 8], strides = [1, 1, 1]} : vector<4x8x8xf32> to vector<1x8x8xf32>
      %62 = vector.shape_cast %61 : vector<1x8x8xf32> to vector<8x8xf32>
      %63 = tpu.concatenate %56, %58, %60, %62 in 1 : vector<8x8xf32>, vector<8x8xf32>, vector<8x8xf32>, vector<8x8xf32> -> vector<8x32xf32>
      %64 = vector.extract_strided_slice %27 {offsets = [8, 0], sizes = [8, 96], strides = [1, 1]} : vector<16x96xf32> to vector<8x96xf32>
      %65 = arith.truncf %64 : vector<8x96xf32> to vector<8x96xbf16>
      %66 = vector.extract_strided_slice %65 {offsets = [0, 0], sizes = [8, 24], strides = [1, 1]} : vector<8x96xbf16> to vector<8x24xbf16>
      %67 = vector.extract_strided_slice %65 {offsets = [0, 24], sizes = [8, 24], strides = [1, 1]} : vector<8x96xbf16> to vector<8x24xbf16>
      %68 = vector.extract_strided_slice %65 {offsets = [0, 48], sizes = [8, 24], strides = [1, 1]} : vector<8x96xbf16> to vector<8x24xbf16>
      %69 = vector.extract_strided_slice %65 {offsets = [0, 72], sizes = [8, 24], strides = [1, 1]} : vector<8x96xbf16> to vector<8x24xbf16>
      %70 = vector.shape_cast %66 : vector<8x24xbf16> to vector<1x8x24xbf16>
      %71 = vector.shape_cast %67 : vector<8x24xbf16> to vector<1x8x24xbf16>
      %72 = vector.shape_cast %68 : vector<8x24xbf16> to vector<1x8x24xbf16>
      %73 = vector.shape_cast %69 : vector<8x24xbf16> to vector<1x8x24xbf16>
      %74 = tpu.concatenate %70, %71, %72, %73 in 0 : vector<1x8x24xbf16>, vector<1x8x24xbf16>, vector<1x8x24xbf16>, vector<1x8x24xbf16> -> vector<4x8x24xbf16>
      %75 = vector.extract_strided_slice %74 {offsets = [0, 0, 0], sizes = [4, 8, 8], strides = [1, 1, 1]} : vector<4x8x24xbf16> to vector<4x8x8xbf16>
      %76 = vector.extract_strided_slice %74 {offsets = [0, 0, 8], sizes = [4, 8, 8], strides = [1, 1, 1]} : vector<4x8x24xbf16> to vector<4x8x8xbf16>
      %77 = vector.extract_strided_slice %74 {offsets = [0, 0, 16], sizes = [4, 8, 8], strides = [1, 1, 1]} : vector<4x8x24xbf16> to vector<4x8x8xbf16>
      "tpu.trace_start"() <{level = 10 : i32, message = "hqd,hkd->hqk"}> : () -> ()
      %cst_27 = arith.constant dense<0.000000e+00> : vector<4x8x8xf32>
      %78 = tpu.matmul %75, %76, %cst_27 {dimension_numbers = #tpu.dot_dimension_numbers<[2], [2], [1], [1], [0, 0, 0, 1, 1, 1], [0], [0]>} : vector<4x8x8xbf16>, vector<4x8x8xbf16>, vector<4x8x8xf32> -> vector<4x8x8xf32>
      "tpu.trace_stop"() : () -> ()
      %cst_28 = arith.constant dense<0xFF800000> : vector<4x8xf32>
      %79 = vector.multi_reduction <maximumf>, %78, %cst_28 [2] : vector<4x8x8xf32> to vector<4x8xf32>
      %80 = vector.shape_cast %79 : vector<4x8xf32> to vector<4x8x1xf32>
      %81 = vector.broadcast %80 : vector<4x8x1xf32> to vector<4x8x8xf32>
      %82 = arith.subf %78, %81 : vector<4x8x8xf32>
      %83 = math.exp %82 : vector<4x8x8xf32>
      %cst_29 = arith.constant dense<0.000000e+00> : vector<4x8xf32>
      %84 = vector.multi_reduction <add>, %83, %cst_29 [2] : vector<4x8x8xf32> to vector<4x8xf32>
      %85 = vector.shape_cast %84 : vector<4x8xf32> to vector<4x8x1xf32>
      %86 = arith.truncf %83 : vector<4x8x8xf32> to vector<4x8x8xbf16>
      "tpu.trace_start"() <{level = 10 : i32, message = "hqk,hkd->hqd"}> : () -> ()
      %cst_30 = arith.constant dense<0.000000e+00> : vector<4x8x8xf32>
      %87 = tpu.matmul %86, %77, %cst_30 {dimension_numbers = #tpu.dot_dimension_numbers<[2], [1], [1], [2], [0, 0, 0, 1, 1, 2], [0], [0]>} : vector<4x8x8xbf16>, vector<4x8x8xbf16>, vector<4x8x8xf32> -> vector<4x8x8xf32>
      "tpu.trace_stop"() : () -> ()
      %88 = tpu.reciprocal %85 {approx = true} : vector<4x8x1xf32> -> vector<4x8x1xf32>
      %89 = vector.broadcast %88 : vector<4x8x1xf32> to vector<4x8x8xf32>
      %90 = arith.mulf %87, %89 : vector<4x8x8xf32>
      %91 = vector.extract_strided_slice %90 {offsets = [0, 0, 0], sizes = [1, 8, 8], strides = [1, 1, 1]} : vector<4x8x8xf32> to vector<1x8x8xf32>
      %92 = vector.shape_cast %91 : vector<1x8x8xf32> to vector<8x8xf32>
      %93 = vector.extract_strided_slice %90 {offsets = [1, 0, 0], sizes = [1, 8, 8], strides = [1, 1, 1]} : vector<4x8x8xf32> to vector<1x8x8xf32>
      %94 = vector.shape_cast %93 : vector<1x8x8xf32> to vector<8x8xf32>
      %95 = vector.extract_strided_slice %90 {offsets = [2, 0, 0], sizes = [1, 8, 8], strides = [1, 1, 1]} : vector<4x8x8xf32> to vector<1x8x8xf32>
      %96 = vector.shape_cast %95 : vector<1x8x8xf32> to vector<8x8xf32>
      %97 = vector.extract_strided_slice %90 {offsets = [3, 0, 0], sizes = [1, 8, 8], strides = [1, 1, 1]} : vector<4x8x8xf32> to vector<1x8x8xf32>
      %98 = vector.shape_cast %97 : vector<1x8x8xf32> to vector<8x8xf32>
      %99 = tpu.concatenate %92, %94, %96, %98 in 1 : vector<8x8xf32>, vector<8x8xf32>, vector<8x8xf32>, vector<8x8xf32> -> vector<8x32xf32>
      %100 = tpu.concatenate %63, %99 in 0 : vector<8x32xf32>, vector<8x32xf32> -> vector<16x32xf32>
      %101 = arith.truncf %100 : vector<16x32xf32> to vector<16x32xbf16>
      %c0_31 = arith.constant 0 : index
      %c0_32 = arith.constant 0 : index
      %102 = vector.load %arg5[%c0_31, %c0_32] : memref<32x32xbf16, #tpu.memory_space<vmem>>, vector<32x32xbf16>
      %cst_33 = arith.constant dense<0.000000e+00> : vector<16x32xf32>
      %103 = tpu.matmul %101, %102, %cst_33 {dimension_numbers = #tpu.dot_dimension_numbers<[1], [0], [0], [1], [0, 0, 1, 1], [], []>} : vector<16x32xbf16>, vector<32x32xbf16>, vector<16x32xf32> -> vector<16x32xf32>
      %c0_34 = arith.constant 0 : index
      %c0_35 = arith.constant 0 : index
      %104 = vector.load %arg6[%c0_34, %c0_35] : memref<1x32xf32, #tpu.memory_space<vmem>>, vector<1x32xf32>
      %105 = vector.broadcast %104 : vector<1x32xf32> to vector<16x32xf32>
      %106 = arith.addf %103, %105 : vector<16x32xf32>
      %107 = arith.addf %21, %106 : vector<16x32xf32>
      %cst_36 = arith.constant dense<0.000000e+00> : vector<16xf32>
      %108 = vector.multi_reduction <add>, %107, %cst_36 [1] : vector<16x32xf32> to vector<16xf32>
      %109 = vector.shape_cast %108 : vector<16xf32> to vector<16x1xf32>
      %cst_37 = arith.constant 3.200000e+01 : f32
      %110 = vector.broadcast %cst_37 : f32 to vector<16x1xf32>
      %111 = arith.divf %109, %110 : vector<16x1xf32>
      %112 = vector.broadcast %111 : vector<16x1xf32> to vector<16x32xf32>
      %113 = arith.subf %107, %112 : vector<16x32xf32>
      %114 = arith.mulf %113, %113 : vector<16x32xf32>
      %cst_38 = arith.constant dense<0.000000e+00> : vector<16xf32>
      %115 = vector.multi_reduction <add>, %114, %cst_38 [1] : vector<16x32xf32> to vector<16xf32>
      %116 = vector.shape_cast %115 : vector<16xf32> to vector<16x1xf32>
      %cst_39 = arith.constant 3.200000e+01 : f32
      %117 = vector.broadcast %cst_39 : f32 to vector<16x1xf32>
      %118 = arith.divf %116, %117 : vector<16x1xf32>
      %cst_40 = arith.constant 9.99999974E-6 : f32
      %119 = vector.broadcast %cst_40 : f32 to vector<16x1xf32>
      %120 = arith.addf %118, %119 : vector<16x1xf32>
      %121 = math.rsqrt %120 : vector<16x1xf32>
      %122 = vector.broadcast %121 : vector<16x1xf32> to vector<16x32xf32>
      %123 = arith.mulf %113, %122 : vector<16x32xf32>
      %c0_41 = arith.constant 0 : index
      %c0_42 = arith.constant 0 : index
      %124 = vector.load %arg7[%c0_41, %c0_42] : memref<1x32xf32, #tpu.memory_space<vmem>>, vector<1x32xf32>
      %125 = vector.broadcast %124 : vector<1x32xf32> to vector<16x32xf32>
      %126 = arith.mulf %123, %125 : vector<16x32xf32>
      %c0_43 = arith.constant 0 : index
      %c0_44 = arith.constant 0 : index
      %127 = vector.load %arg8[%c0_43, %c0_44] : memref<1x32xf32, #tpu.memory_space<vmem>>, vector<1x32xf32>
      %128 = vector.broadcast %127 : vector<1x32xf32> to vector<16x32xf32>
      %129 = arith.addf %126, %128 : vector<16x32xf32>
      %c0_45 = arith.constant 0 : index
      %c0_46 = arith.constant 0 : index
      %130 = vector.load %arg16[%c0_45, %c0_46] : memref<16x32xf32, #tpu.memory_space<vmem>>, vector<16x32xf32>
      tpu.vector_store %arg16[%c0_45, %c0_46], %129 {strides = array<i32>} : memref<16x32xf32, #tpu.memory_space<vmem>>, vector<16x32xf32>,
      %cst_47 = arith.constant 0.000000e+00 : f32
      %131 = vector.broadcast %cst_47 : f32 to vector<16x32xf32>
      %c0_48 = arith.constant 0 : index
      %c0_49 = arith.constant 0 : index
      %132 = vector.load %arg17[%c0_48, %c0_49] : memref<16x32xf32, #tpu.memory_space<vmem>>, vector<16x32xf32>
      tpu.vector_store %arg17[%c0_48, %c0_49], %131 {strides = array<i32>} : memref<16x32xf32, #tpu.memory_space<vmem>>, vector<16x32xf32>,
    } else {
    }
    %c0 = arith.constant 0 : index
    %c0_1 = arith.constant 0 : index
    %3 = vector.load %arg16[%c0, %c0_1] : memref<16x32xf32, #tpu.memory_space<vmem>>, vector<16x32xf32>
    %4 = arith.truncf %3 : vector<16x32xf32> to vector<16x32xbf16>
    %c0_2 = arith.constant 0 : index
    %c0_3 = arith.constant 0 : index
    %5 = vector.load %arg9[%c0_2, %c0_3] : memref<32x64xbf16, #tpu.memory_space<vmem>>, vector<32x64xbf16>
    %cst = arith.constant dense<0.000000e+00> : vector<16x64xf32>
    %6 = tpu.matmul %4, %5, %cst {dimension_numbers = #tpu.dot_dimension_numbers<[1], [0], [0], [1], [0, 0, 1, 1], [], []>} : vector<16x32xbf16>, vector<32x64xbf16>, vector<16x64xf32> -> vector<16x64xf32>
    %c0_4 = arith.constant 0 : index
    %c0_5 = arith.constant 0 : index
    %7 = vector.load %arg10[%c0_4, %c0_5] : memref<1x64xf32, #tpu.memory_space<vmem>>, vector<1x64xf32>
    %8 = vector.broadcast %7 : vector<1x64xf32> to vector<16x64xf32>
    %9 = arith.addf %6, %8 : vector<16x64xf32>
    %cst_6 = arith.constant 0.000000e+00 : f32
    %10 = vector.broadcast %cst_6 : f32 to vector<16x64xf32>
    %11 = arith.maximumf %9, %10 : vector<16x64xf32>
    %c0_7 = arith.constant 0 : index
    %c0_8 = arith.constant 0 : index
    %12 = vector.load %arg17[%c0_7, %c0_8] : memref<16x32xf32, #tpu.memory_space<vmem>>, vector<16x32xf32>
    %13 = arith.truncf %11 : vector<16x64xf32> to vector<16x64xbf16>
    %c0_9 = arith.constant 0 : index
    %c0_10 = arith.constant 0 : index
    %14 = vector.load %arg11[%c0_9, %c0_10] : memref<64x32xbf16, #tpu.memory_space<vmem>>, vector<64x32xbf16>
    %cst_11 = arith.constant dense<0.000000e+00> : vector<16x32xf32>
    %15 = tpu.matmul %13, %14, %cst_11 {dimension_numbers = #tpu.dot_dimension_numbers<[1], [0], [0], [1], [0, 0, 1, 1], [], []>} : vector<16x64xbf16>, vector<64x32xbf16>, vector<16x32xf32> -> vector<16x32xf32>
    %16 = arith.addf %12, %15 : vector<16x32xf32>
    %c0_12 = arith.constant 0 : index
    %c0_13 = arith.constant 0 : index
    %17 = vector.load %arg17[%c0_12, %c0_13] : memref<16x32xf32, #tpu.memory_space<vmem>>, vector<16x32xf32>
    tpu.vector_store %arg17[%c0_12, %c0_13], %16 {strides = array<i32>} : memref<16x32xf32, #tpu.memory_space<vmem>>, vector<16x32xf32>,
    %c0_i32_14 = arith.constant 0 : i32
    %18 = arith.cmpi eq, %arg1, %c0_i32_14 : i32
    %19 = arith.extui %18 : i1 to i32
    %c0_i32_15 = arith.constant 0 : i32
    %20 = arith.cmpi ne, %19, %c0_i32_15 : i32
    scf.if %20 {
      %c0_16 = arith.constant 0 : index
      %c0_17 = arith.constant 0 : index
      %21 = vector.load %arg16[%c0_16, %c0_17] : memref<16x32xf32, #tpu.memory_space<vmem>>, vector<16x32xf32>
      %c0_18 = arith.constant 0 : index
      %c0_19 = arith.constant 0 : index
      %22 = vector.load %arg17[%c0_18, %c0_19] : memref<16x32xf32, #tpu.memory_space<vmem>>, vector<16x32xf32>
      %23 = arith.addf %21, %22 : vector<16x32xf32>
      %c0_20 = arith.constant 0 : index
      %c0_21 = arith.constant 0 : index
      %24 = vector.load %arg12[%c0_20, %c0_21] : memref<1x32xf32, #tpu.memory_space<vmem>>, vector<1x32xf32>
      %25 = vector.broadcast %24 : vector<1x32xf32> to vector<16x32xf32>
      %26 = arith.addf %23, %25 : vector<16x32xf32>
      %cst_22 = arith.constant dense<0.000000e+00> : vector<16xf32>
      %27 = vector.multi_reduction <add>, %26, %cst_22 [1] : vector<16x32xf32> to vector<16xf32>
      %28 = vector.shape_cast %27 : vector<16xf32> to vector<16x1xf32>
      %cst_23 = arith.constant 3.200000e+01 : f32
      %29 = vector.broadcast %cst_23 : f32 to vector<16x1xf32>
      %30 = arith.divf %28, %29 : vector<16x1xf32>
      %31 = vector.broadcast %30 : vector<16x1xf32> to vector<16x32xf32>
      %32 = arith.subf %26, %31 : vector<16x32xf32>
      %33 = arith.mulf %32, %32 : vector<16x32xf32>
      %cst_24 = arith.constant dense<0.000000e+00> : vector<16xf32>
      %34 = vector.multi_reduction <add>, %33, %cst_24 [1] : vector<16x32xf32> to vector<16xf32>
      %35 = vector.shape_cast %34 : vector<16xf32> to vector<16x1xf32>
      %cst_25 = arith.constant 3.200000e+01 : f32
      %36 = vector.broadcast %cst_25 : f32 to vector<16x1xf32>
      %37 = arith.divf %35, %36 : vector<16x1xf32>
      %cst_26 = arith.constant 9.99999974E-6 : f32
      %38 = vector.broadcast %cst_26 : f32 to vector<16x1xf32>
      %39 = arith.addf %37, %38 : vector<16x1xf32>
      %40 = math.rsqrt %39 : vector<16x1xf32>
      %41 = vector.broadcast %40 : vector<16x1xf32> to vector<16x32xf32>
      %42 = arith.mulf %32, %41 : vector<16x32xf32>
      %c0_27 = arith.constant 0 : index
      %c0_28 = arith.constant 0 : index
      %43 = vector.load %arg13[%c0_27, %c0_28] : memref<1x32xf32, #tpu.memory_space<vmem>>, vector<1x32xf32>
      %44 = vector.broadcast %43 : vector<1x32xf32> to vector<16x32xf32>
      %45 = arith.mulf %42, %44 : vector<16x32xf32>
      %c0_29 = arith.constant 0 : index
      %c0_30 = arith.constant 0 : index
      %46 = vector.load %arg14[%c0_29, %c0_30] : memref<1x32xf32, #tpu.memory_space<vmem>>, vector<1x32xf32>
      %47 = vector.broadcast %46 : vector<1x32xf32> to vector<16x32xf32>
      %48 = arith.addf %45, %47 : vector<16x32xf32>
      %c0_31 = arith.constant 0 : index
      %c0_32 = arith.constant 0 : index
      %49 = vector.load %arg15[%c0_31, %c0_32] : memref<16x32xf32, #tpu.memory_space<vmem>>, vector<16x32xf32>
      tpu.vector_store %arg15[%c0_31, %c0_32], %48 {strides = array<i32>} : memref<16x32xf32, #tpu.memory_space<vmem>>, vector<16x32xf32>,
    } else {
    }
    return
  }
  func.func @transform_0(%arg0: i32, %arg1: i32) -> (i32, i32) {
    %c0_i32 = arith.constant 0 : i32
    %c0_i32_0 = arith.constant 0 : i32
    return %arg0, %c0_i32 : i32, i32
  }
  func.func @transform_1(%arg0: i32, %arg1: i32) -> (i32, i32) {
    %c0_i32 = arith.constant 0 : i32
    %c0_i32_0 = arith.constant 0 : i32
    %c0_i32_1 = arith.constant 0 : i32
    return %c0_i32, %c0_i32_0 : i32, i32
  }
  func.func @transform_2(%arg0: i32, %arg1: i32) -> (i32, i32) {
    %c0_i32 = arith.constant 0 : i32
    %c0_i32_0 = arith.constant 0 : i32
    %c0_i32_1 = arith.constant 0 : i32
    return %c0_i32, %c0_i32_0 : i32, i32
  }
  func.func @transform_3(%arg0: i32, %arg1: i32) -> (i32, i32) {
    %c0_i32 = arith.constant 0 : i32
    %c0_i32_0 = arith.constant 0 : i32
    %c0_i32_1 = arith.constant 0 : i32
    return %c0_i32, %c0_i32_0 : i32, i32
  }
  func.func @transform_4(%arg0: i32, %arg1: i32) -> (i32, i32) {
    %c0_i32 = arith.constant 0 : i32
    %c0_i32_0 = arith.constant 0 : i32
    %c0_i32_1 = arith.constant 0 : i32
    return %c0_i32, %c0_i32_0 : i32, i32
  }
  func.func @transform_5(%arg0: i32, %arg1: i32) -> (i32, i32) {
    %c0_i32 = arith.constant 0 : i32
    %c0_i32_0 = arith.constant 0 : i32
    %c0_i32_1 = arith.constant 0 : i32
    return %c0_i32, %c0_i32_0 : i32, i32
  }
  func.func @transform_6(%arg0: i32, %arg1: i32) -> (i32, i32) {
    %c0_i32 = arith.constant 0 : i32
    %c0_i32_0 = arith.constant 0 : i32
    %c0_i32_1 = arith.constant 0 : i32
    return %c0_i32, %c0_i32_0 : i32, i32
  }
  func.func @transform_7(%arg0: i32, %arg1: i32) -> (i32, i32) {
    %c0_i32 = arith.constant 0 : i32
    %c0_i32_0 = arith.constant 0 : i32
    return %c0_i32, %arg1 : i32, i32
  }
  func.func @transform_8(%arg0: i32, %arg1: i32) -> (i32, i32) {
    %c0_i32 = arith.constant 0 : i32
    %c0_i32_0 = arith.constant 0 : i32
    return %c0_i32, %arg1 : i32, i32
  }
  func.func @transform_9(%arg0: i32, %arg1: i32) -> (i32, i32) {
    %c0_i32 = arith.constant 0 : i32
    %c0_i32_0 = arith.constant 0 : i32
    return %arg1, %c0_i32 : i32, i32
  }
  func.func @transform_10(%arg0: i32, %arg1: i32) -> (i32, i32) {
    %c0_i32 = arith.constant 0 : i32
    %c0_i32_0 = arith.constant 0 : i32
    %c0_i32_1 = arith.constant 0 : i32
    return %c0_i32, %c0_i32_0 : i32, i32
  }
  func.func @transform_11(%arg0: i32, %arg1: i32) -> (i32, i32) {
    %c0_i32 = arith.constant 0 : i32
    %c0_i32_0 = arith.constant 0 : i32
    %c0_i32_1 = arith.constant 0 : i32
    return %c0_i32, %c0_i32_0 : i32, i32
  }
  func.func @transform_12(%arg0: i32, %arg1: i32) -> (i32, i32) {
    %c0_i32 = arith.constant 0 : i32
    %c0_i32_0 = arith.constant 0 : i32
    %c0_i32_1 = arith.constant 0 : i32
    return %c0_i32, %c0_i32_0 : i32, i32
  }
  func.func @transform_13(%arg0: i32, %arg1: i32) -> (i32, i32) {
    %c0_i32 = arith.constant 0 : i32
    %c0_i32_0 = arith.constant 0 : i32
    return %arg0, %c0_i32 : i32, i32
  }
}

</mosaic_0001>

<llo_original>
// kernel: tpu_custom_call.1
$region0: #{tpu_custom_call.1}
  #allocation0 [shape = 'u32[]', space=smem, size = 0x4, offset = 0x4, fixed_abs, tag = 'smem constant byte address 0x4 - core index']
  #allocation1 [shape = 'u32[144,128]{1,0:T(1,128)}', space=vmem, size = 0x12000, scoped, tag = 'internal scratch']
  #allocation2 [shape = 'f32[16,32]{1,0:T(8,128)}', space=vmem, size = 0x2000, scoped, tag = 'scratch operand']
  #allocation3 [shape = 'f32[16,32]{1,0:T(8,128)}', space=vmem, size = 0x2000, scoped, tag = 'scratch operand']
  %s0 = inlined_call_operand.vmem [shape: f32[16,32], index: 0, kind: input, shape index: {}]
  %s1 = inlined_call_operand.vmem [shape: bf16[32,96], index: 1, kind: input, shape index: {}]
  %s2 = inlined_call_operand.hbm [shape: f32[1,96], index: 2, kind: input, shape index: {}]
  %s3 = inlined_call_operand.vmem [shape: bf16[32,32], index: 3, kind: input, shape index: {}]
  %s4 = inlined_call_operand.hbm [shape: f32[1,32], index: 4, kind: input, shape index: {}]
  %s5 = inlined_call_operand.hbm [shape: f32[1,32], index: 5, kind: input, shape index: {}]
  %s6 = inlined_call_operand.hbm [shape: f32[1,32], index: 6, kind: input, shape index: {}]
  %s7 = inlined_call_operand.hbm [shape: bf16[32,64], index: 7, kind: input, shape index: {}]
  %s8 = inlined_call_operand.hbm [shape: f32[1,64], index: 8, kind: input, shape index: {}]
  %s9 = inlined_call_operand.vmem [shape: bf16[64,32], index: 9, kind: input, shape index: {}]
  %s10 = inlined_call_operand.vmem [shape: f32[1,32], index: 10, kind: input, shape index: {}]
  %s11 = inlined_call_operand.vmem [shape: f32[1,32], index: 11, kind: input, shape index: {}]
  %s12 = inlined_call_operand.vmem [shape: f32[1,32], index: 12, kind: input, shape index: {}]
  %s13 = inlined_call_operand.hbm [shape: f32[16,32], index: 13, kind: output, shape index: {}]
  %s14 = sld [smem:[#allocation0]]
  $region94: #{tpu_custom_call.1} parent=0
    _
  %s16 = ssub.s32 1, %s14
  %s17 = scalar_select 0, %s16, %s14
  $region1: #{tpu_custom_call.1} parent=0
    #allocation4 [shape = 'u8[512]{0}', space=vmem, size = 0x400, scoped, tag = 'input window, operand 2, single buffered']
    #allocation5 [shape = 's32[1]{0}', space=sflag, size = 0x4, scoped, tag = 'scoped memory for tpu_custom_call.1']
    #allocation6 [shape = 's32[1]{0}', space=sflag, size = 0x4, scoped, tag = 'scoped memory for tpu_custom_call.1']
    #allocation7 [shape = 'u8[512]{0}', space=vmem, size = 0x400, scoped, tag = 'input window, operand 4, single buffered']
    #allocation8 [shape = 's32[1]{0}', space=sflag, size = 0x4, scoped, tag = 'scoped memory for tpu_custom_call.1']
    #allocation9 [shape = 'u8[512]{0}', space=vmem, size = 0x400, scoped, tag = 'input window, operand 5, single buffered']
    #allocation10 [shape = 'u8[512]{0}', space=vmem, size = 0x400, scoped, tag = 'input window, operand 6, single buffered']
    #allocation11 [shape = 's32[1]{0}', space=sflag, size = 0x4, scoped, tag = 'scoped memory for tpu_custom_call.1']
    #allocation12 [shape = 'u8[8192]{0}', space=vmem, size = 0x2000, scoped, tag = 'input window, operand 7, single buffered']
    #allocation13 [shape = 'u8[512]{0}', space=vmem, size = 0x400, scoped, tag = 'input window, operand 8, single buffered']
    #allocation14 [shape = 's32[1]{0}', space=sflag, size = 0x4, scoped, tag = 'scoped memory for tpu_custom_call.1']
    #allocation15 [shape = 'u8[8192]{0}', space=vmem, size = 0x2000, scoped, tag = 'output window, operand 0, single buffered']
    %18 = vsyncpa [#allocation5], 0
    %19 = vsyncpa [#allocation8], 0
    %20 = vsyncpa [#allocation11], 0
    %21 = vsyncpa [#allocation14], 0
    %22 = vsyncpa [#allocation6], 0
    // Predicated region
    $region2: #{tpu_custom_call.1} parent=1 // pred_check
      _
    $region3: #{tpu_custom_call.1} parent=1 // pred_check_branch
      %24 = sbr.rel (0) target = $region5
    $region4: #{tpu_custom_call.1} parent=1 // pred_region
      _
    $region5: #{tpu_custom_call.1} parent=1 // pred_fallthru
      _
    // Predicated region
    $region6: #{tpu_custom_call.1} parent=1 // pred_check
      _
    $region7: #{tpu_custom_call.1} parent=1 // pred_check_branch
      %26 = sbr.rel (0) target = $region9
    $region8: #{tpu_custom_call.1} parent=1 // pred_region
      _
    $region9: #{tpu_custom_call.1} parent=1 // pred_fallthru
      _
    // Predicated region
    $region10: #{tpu_custom_call.1} parent=1 // pred_check
      _
    $region11: #{tpu_custom_call.1} parent=1 // pred_check_branch
      %28 = sbr.rel (0) target = $region13
    $region12: #{tpu_custom_call.1} parent=1 // pred_region
      %s30 = ssub.s32 16, 16
      %31 = vsyncadd [#allocation5], %s30
      %s33 = sshll.u32 [#allocation4], 4
      %s34 = int_to_ptr.vmem [resolvable:$true] %s33
      %36 = dma.hbm_to_vmem [thread:$0]  %s2, 16, %s34, [#allocation5]
    $region13: #{tpu_custom_call.1} parent=1 // pred_fallthru
      _
    // Predicated region
    $region14: #{tpu_custom_call.1} parent=1 // pred_check
      _
    $region15: #{tpu_custom_call.1} parent=1 // pred_check_branch
      %38 = sbr.rel (0) target = $region17
    $region16: #{tpu_custom_call.1} parent=1 // pred_region
      _
    $region17: #{tpu_custom_call.1} parent=1 // pred_fallthru
      _
    // Predicated region
    $region18: #{tpu_custom_call.1} parent=1 // pred_check
      _
    $region19: #{tpu_custom_call.1} parent=1 // pred_check_branch
      %40 = sbr.rel (0) target = $region21
    $region20: #{tpu_custom_call.1} parent=1 // pred_region
      %s42 = ssub.s32 16, 16
      %43 = vsyncadd [#allocation8], %s42
      %s45 = sshll.u32 [#allocation7], 4
      %s46 = int_to_ptr.vmem [resolvable:$true] %s45
      %48 = dma.hbm_to_vmem [thread:$0]  %s4, 16, %s46, [#allocation8]
    $region21: #{tpu_custom_call.1} parent=1 // pred_fallthru
      _
    // Predicated region
    $region22: #{tpu_custom_call.1} parent=1 // pred_check
      _
    $region23: #{tpu_custom_call.1} parent=1 // pred_check_branch
      %50 = sbr.rel (0) target = $region25
    $region24: #{tpu_custom_call.1} parent=1 // pred_region
      %s52 = ssub.s32 16, 16
      %53 = vsyncadd [#allocation8], %s52
      %s55 = sshll.u32 [#allocation9], 4
      %s56 = int_to_ptr.vmem [resolvable:$true] %s55
      %58 = dma.hbm_to_vmem [thread:$0]  %s5, 16, %s56, [#allocation8]
    $region25: #{tpu_custom_call.1} parent=1 // pred_fallthru
      _
    // Predicated region
    $region26: #{tpu_custom_call.1} parent=1 // pred_check
      _
    $region27: #{tpu_custom_call.1} parent=1 // pred_check_branch
      %60 = sbr.rel (0) target = $region29
    $region28: #{tpu_custom_call.1} parent=1 // pred_region
      %s62 = ssub.s32 16, 16
      %63 = vsyncadd [#allocation11], %s62
      %s65 = sshll.u32 [#allocation10], 4
      %s66 = int_to_ptr.vmem [resolvable:$true] %s65
      %68 = dma.hbm_to_vmem [thread:$0]  %s6, 16, %s66, [#allocation11]
    $region29: #{tpu_custom_call.1} parent=1 // pred_fallthru
      _
    // Predicated region
    $region30: #{tpu_custom_call.1} parent=1 // pred_check
      _
    $region31: #{tpu_custom_call.1} parent=1 // pred_check_branch
      %70 = sbr.rel (0) target = $region33
    $region32: #{tpu_custom_call.1} parent=1 // pred_region
      %s72 = ssub.s32 256, 256
      %73 = vsyncadd [#allocation11], %s72
      %s74 = sshll.u32 [#allocation12], 4
      %s75 = int_to_ptr.vmem [resolvable:$true] %s74
      %80 = dma.hbm_to_vmem [thread:$0]  %s7, 256, %s75, [#allocation11], 64, 64, 4
    $region33: #{tpu_custom_call.1} parent=1 // pred_fallthru
      _
    // Predicated region
    $region34: #{tpu_custom_call.1} parent=1 // pred_check
      _
    $region35: #{tpu_custom_call.1} parent=1 // pred_check_branch
      %82 = sbr.rel (0) target = $region37
    $region36: #{tpu_custom_call.1} parent=1 // pred_region
      %s84 = ssub.s32 16, 16
      %85 = vsyncadd [#allocation14], %s84
      %s87 = sshll.u32 [#allocation13], 4
      %s88 = int_to_ptr.vmem [resolvable:$true] %s87
      %90 = dma.hbm_to_vmem [thread:$0]  %s8, 16, %s88, [#allocation14]
    $region37: #{tpu_custom_call.1} parent=1 // pred_fallthru
      _
    // Predicated region
    $region38: #{tpu_custom_call.1} parent=1 // pred_check
      _
    $region39: #{tpu_custom_call.1} parent=1 // pred_check_branch
      %92 = sbr.rel (0) target = $region41
    $region40: #{tpu_custom_call.1} parent=1 // pred_region
      _
    $region41: #{tpu_custom_call.1} parent=1 // pred_fallthru
      _
    // Predicated region
    $region42: #{tpu_custom_call.1} parent=1 // pred_check
      _
    $region43: #{tpu_custom_call.1} parent=1 // pred_check_branch
      %94 = sbr.rel (0) target = $region45
    $region44: #{tpu_custom_call.1} parent=1 // pred_region
      _
    $region45: #{tpu_custom_call.1} parent=1 // pred_fallthru
      _
    // Predicated region
    $region46: #{tpu_custom_call.1} parent=1 // pred_check
      _
    $region47: #{tpu_custom_call.1} parent=1 // pred_check_branch
      %96 = sbr.rel (0) target = $region49
    $region48: #{tpu_custom_call.1} parent=1 // pred_region
      _
    $region49: #{tpu_custom_call.1} parent=1 // pred_fallthru
      _
    // Predicated region
    $region50: #{tpu_custom_call.1} parent=1 // pred_check
      _
    $region51: #{tpu_custom_call.1} parent=1 // pred_check_branch
      %98 = sbr.rel (0) target = $region53
    $region52: #{tpu_custom_call.1} parent=1 // pred_region
      _
    $region53: #{tpu_custom_call.1} parent=1 // pred_fallthru
      _
    // Predicated region
    $region54: #{tpu_custom_call.1} parent=1 // pred_check
      _
    $region55: #{tpu_custom_call.1} parent=1 // pred_check_branch
      %100 = sbr.rel (0) target = $region57
    $region56: #{tpu_custom_call.1} parent=1 // pred_region
      %101 = dma.done [#allocation5], 16
    $region57: #{tpu_custom_call.1} parent=1 // pred_fallthru
      _
    // Predicated region
    $region58: #{tpu_custom_call.1} parent=1 // pred_check
      _
    $region59: #{tpu_custom_call.1} parent=1 // pred_check_branch
      %103 = sbr.rel (0) target = $region61
    $region60: #{tpu_custom_call.1} parent=1 // pred_region
      %104 = dma.done [#allocation8], 16
    $region61: #{tpu_custom_call.1} parent=1 // pred_fallthru
      _
    // Predicated region
    $region62: #{tpu_custom_call.1} parent=1 // pred_check
      _
    $region63: #{tpu_custom_call.1} parent=1 // pred_check_branch
      %106 = sbr.rel (0) target = $region65
    $region64: #{tpu_custom_call.1} parent=1 // pred_region
      %107 = dma.done [#allocation8], 16
    $region65: #{tpu_custom_call.1} parent=1 // pred_fallthru
      _
    // Predicated region
    $region66: #{tpu_custom_call.1} parent=1 // pred_check
      _
    $region67: #{tpu_custom_call.1} parent=1 // pred_check_branch
      %109 = sbr.rel (0) target = $region69
    $region68: #{tpu_custom_call.1} parent=1 // pred_region
      %110 = dma.done [#allocation11], 16
    $region69: #{tpu_custom_call.1} parent=1 // pred_fallthru
      _
    // Predicated region
    $region70: #{tpu_custom_call.1} parent=1 // pred_check
      _
    $region71: #{tpu_custom_call.1} parent=1 // pred_check_branch
      %112 = sbr.rel (0) target = $region73
    $region72: #{tpu_custom_call.1} parent=1 // pred_region
      %113 = dma.done [#allocation11], 256
    $region73: #{tpu_custom_call.1} parent=1 // pred_fallthru
      _
    // Predicated region
    $region74: #{tpu_custom_call.1} parent=1 // pred_check
      _
    $region75: #{tpu_custom_call.1} parent=1 // pred_check_branch
      %115 = sbr.rel (0) target = $region77
    $region76: #{tpu_custom_call.1} parent=1 // pred_region
      %116 = dma.done [#allocation14], 16
    $region77: #{tpu_custom_call.1} parent=1 // pred_fallthru
      _
    %p118 = scmp.eq.s32.totalorder 0, 0
    // Predicated region
    $region78: #{tpu_custom_call.1} parent=1 // pred_check
      %p119 = pneg %p118
    $region79: #{tpu_custom_call.1} parent=1 // pred_check_branch
      %121 = sbr.rel (%p119) target = $region81
    $region80: #{tpu_custom_call.1} parent=1 // pred_region
      %v122 = vld [vmem:[%s0] sm:$0xff]
      %v123 = vld [vmem:[%s0 + $0x8] sm:$0xff]
      %v124 = vpack.c.bf16 %v123, %v122
      %v125 = vld [vmem:[%s1] sm:$0xf]
      %v126 = vld [vmem:[%s1 + $0x4] sm:$0xf]
      %v127 = vld [vmem:[%s1 + $0x8] sm:$0xf]
      %v128 = vld [vmem:[%s1 + $0xc] sm:$0xf]
      %v129 = vld [vmem:[#allocation4] sm:$0x1]
      %v131 = vlaneseq
      %v132 = vshrl.u32 %v131, 7
      %v133 = vsub.s32 0, %v132
      %v134 = vrot.slane %v129, %v133
      %v140 = vunpack.c.l.b16 %v125
      %v141 = vunpack.c.l.b16 %v126
      %v142 = vunpack.c.l.b16 %v127
      %v143 = vunpack.c.l.b16 %v128
      %v144 = vpack.c.b16 %v141, %v140
      %v145 = vpack.c.b16 %v143, %v142
      %vm148 = vcmask 261120
      %v150 = vsel %vm148, %v124, 0
      %152 = vmatprep.subr.bf16.mxu0 0
      %153 = vmatpush1.bf16.msra.mxu0 0
      %154 = vmatprep.subr.bf16.mxu0 0
      %155 = vmatpush1.bf16.msra.mxu0 0
      %156 = vmatprep.subr.bf16.mxu0 0
      %157 = vmatpush1.bf16.msra.mxu0 0
      %158 = vmatprep.subr.bf16.mxu0 0
      %159 = vmatpush1.bf16.msra.mxu0 0
      %160 = vmatprep.subr.bf16.mxu0 0
      %161 = vmatpush1.bf16.msra.mxu0 0
      %162 = vmatprep.subr.bf16.mxu0 0
      %163 = vmatpush1.bf16.msra.mxu0 0
      %164 = vmatprep.subr.bf16.mxu0 0
      %165 = vmatpush1.bf16.msra.mxu0 %v145
      %166 = vmatprep.subr.bf16.mxu0 0
      %167 = vmatpush1.bf16.msra.mxu0 %v144
      %168 = vmatprep.subr.bf16.mxu0 0
      %169 = vmatpush2.bf16.msra.mxu0 0
      %170 = vmatprep.subr.bf16.mxu0 0
      %171 = vmatpush2.bf16.msra.mxu0 0
      %172 = vmatprep.subr.bf16.mxu0 0
      %173 = vmatpush2.bf16.msra.mxu0 0
      %174 = vmatprep.subr.bf16.mxu0 0
      %175 = vmatpush2.bf16.msra.mxu0 0
      %176 = vmatprep.subr.bf16.mxu0 0
      %177 = vmatpush2.bf16.msra.mxu0 0
      %178 = vmatprep.subr.bf16.mxu0 0
      %179 = vmatpush2.bf16.msra.mxu0 0
      %180 = vmatprep.subr.bf16.mxu0 0
      %181 = vmatpush2.bf16.msra.mxu0 0
      %182 = vmatprep.subr.bf16.mxu0 0
      %183 = vmatpush2.bf16.msra.mxu0 0
      %184 = vmatprep.mubr.bf16.mxu0 0
      %185 = vmatmul.mubr.bf16.gmra.mxu0 %v150
      %v186 = vpop.f32.mrf.mxu0
      %v187 = vadd.f32 %v134, %v186
      %v188 = vpop.f32.mrf.mxu0
      %v189 = vpop.f32.mrf.mxu0
      %v190 = vadd.f32 %v134, %v189
      %v191 = vpop.f32.mrf.mxu0
      %192 = vdwg.mxu0
      %v193 = vpack.c.bf16 %v187, %v187
      %195 = vrot.lane.b32.xlu0 %v193, 104
      %v196 = vpop.permute.xlu0 %195
      %197 = vrot.lane.b32.xlu0 %v193, 80
      %v198 = vpop.permute.xlu0 %197
      %199 = vrot.lane.b32.xlu0 %v193, 56
      %v200 = vpop.permute.xlu0 %199
      %201 = vrot.lane.b32.xlu0 %v193, 120
      %v202 = vpop.permute.xlu0 %201
      %vm203 = vcmask 64512
      %v205 = vsel %vm203, %v193, 0
      %v208 = vsel %vm203, %v202, 0
      %210 = vmatprep.subr.bf16.mxu0 0
      %211 = vmatpush1.bf16.xpose.msra.mxu0 0
      %212 = vmatprep.subr.bf16.mxu0 0
      %213 = vmatpush1.bf16.xpose.msra.mxu0 0
      %214 = vmatprep.subr.bf16.mxu0 0
      %215 = vmatpush1.bf16.xpose.msra.mxu0 0
      %216 = vmatprep.subr.bf16.mxu0 0
      %217 = vmatpush1.bf16.xpose.msra.mxu0 0
      %218 = vmatprep.subr.bf16.mxu0 0
      %219 = vmatpush1.bf16.xpose.msra.mxu0 0
      %220 = vmatprep.subr.bf16.mxu0 0
      %221 = vmatpush1.bf16.xpose.msra.mxu0 0
      %222 = vmatprep.subr.bf16.mxu0 0
      %223 = vmatpush1.bf16.xpose.msra.mxu0 0
      %224 = vmatprep.subr.bf16.mxu0 0
      %225 = vmatpush1.bf16.xpose.msra.mxu0 %v208
      %226 = vmatprep.subr.bf16.mxu0 0
      %227 = vmatpush2.bf16.xpose.msra.mxu0 0
      %228 = vmatprep.subr.bf16.mxu0 0
      %229 = vmatpush2.bf16.xpose.msra.mxu0 0
      %230 = vmatprep.subr.bf16.mxu0 0
      %231 = vmatpush2.bf16.xpose.msra.mxu0 0
      %232 = vmatprep.subr.bf16.mxu0 0
      %233 = vmatpush2.bf16.xpose.msra.mxu0 0
      %234 = vmatprep.subr.bf16.mxu0 0
      %235 = vmatpush2.bf16.xpose.msra.mxu0 0
      %236 = vmatprep.subr.bf16.mxu0 0
      %237 = vmatpush2.bf16.xpose.msra.mxu0 0
      %238 = vmatprep.subr.bf16.mxu0 0
      %239 = vmatpush2.bf16.xpose.msra.mxu0 0
      %240 = vmatprep.subr.bf16.mxu0 0
      %241 = vmatpush2.bf16.xpose.msra.mxu0 0
      %242 = vmatprep.mubr.bf16.mxu0 0
      %243 = vmatmul.mubr.bf16.gmra.mxu0 %v205
      %v244 = vpop.f32.mrf.mxu0
      %v245 = vadd.f32 0.0, %v244
      %v246 = vpop.f32.mrf.mxu0
      %v247 = vpop.f32.mrf.mxu0
      %v248 = vpop.f32.mrf.mxu0
      %249 = vdwg.mxu0
      %250 = vrot.lane.b32.xlu0 %v196, 120
      %v251 = vpop.permute.xlu0 %250
      %v253 = vsel %vm203, %v196, 0
      %v256 = vsel %vm203, %v251, 0
      %258 = vmatprep.subr.bf16.mxu0 0
      %259 = vmatpush1.bf16.xpose.msra.mxu0 0
      %260 = vmatprep.subr.bf16.mxu0 0
      %261 = vmatpush1.bf16.xpose.msra.mxu0 0
      %262 = vmatprep.subr.bf16.mxu0 0
      %263 = vmatpush1.bf16.xpose.msra.mxu0 0
      %264 = vmatprep.subr.bf16.mxu0 0
      %265 = vmatpush1.bf16.xpose.msra.mxu0 0
      %266 = vmatprep.subr.bf16.mxu0 0
      %267 = vmatpush1.bf16.xpose.msra.mxu0 0
      %268 = vmatprep.subr.bf16.mxu0 0
      %269 = vmatpush1.bf16.xpose.msra.mxu0 0
      %270 = vmatprep.subr.bf16.mxu0 0
      %271 = vmatpush1.bf16.xpose.msra.mxu0 0
      %272 = vmatprep.subr.bf16.mxu0 0
      %273 = vmatpush1.bf16.xpose.msra.mxu0 %v256
      %274 = vmatprep.subr.bf16.mxu0 0
      %275 = vmatpush2.bf16.xpose.msra.mxu0 0
      %276 = vmatprep.subr.bf16.mxu0 0
      %277 = vmatpush2.bf16.xpose.msra.mxu0 0
      %278 = vmatprep.subr.bf16.mxu0 0
      %279 = vmatpush2.bf16.xpose.msra.mxu0 0
      %280 = vmatprep.subr.bf16.mxu0 0
      %281 = vmatpush2.bf16.xpose.msra.mxu0 0
      %282 = vmatprep.subr.bf16.mxu0 0
      %283 = vmatpush2.bf16.xpose.msra.mxu0 0
      %284 = vmatprep.subr.bf16.mxu0 0
      %285 = vmatpush2.bf16.xpose.msra.mxu0 0
      %286 = vmatprep.subr.bf16.mxu0 0
      %287 = vmatpush2.bf16.xpose.msra.mxu0 0
      %288 = vmatprep.subr.bf16.mxu0 0
      %289 = vmatpush2.bf16.xpose.msra.mxu0 0
      %290 = vmatprep.mubr.bf16.mxu0 0
      %291 = vmatmul.mubr.bf16.gmra.mxu0 %v253
      %v292 = vpop.f32.mrf.mxu0
      %v293 = vadd.f32 0.0, %v292
      %v294 = vpop.f32.mrf.mxu0
      %v295 = vpop.f32.mrf.mxu0
      %v296 = vpop.f32.mrf.mxu0
      %297 = vdwg.mxu0
      %298 = vrot.lane.b32.xlu0 %v198, 120
      %v299 = vpop.permute.xlu0 %298
      %v301 = vsel %vm203, %v198, 0
      %v304 = vsel %vm203, %v299, 0
      %306 = vmatprep.subr.bf16.mxu0 0
      %307 = vmatpush1.bf16.xpose.msra.mxu0 0
      %308 = vmatprep.subr.bf16.mxu0 0
      %309 = vmatpush1.bf16.xpose.msra.mxu0 0
      %310 = vmatprep.subr.bf16.mxu0 0
      %311 = vmatpush1.bf16.xpose.msra.mxu0 0
      %312 = vmatprep.subr.bf16.mxu0 0
      %313 = vmatpush1.bf16.xpose.msra.mxu0 0
      %314 = vmatprep.subr.bf16.mxu0 0
      %315 = vmatpush1.bf16.xpose.msra.mxu0 0
      %316 = vmatprep.subr.bf16.mxu0 0
      %317 = vmatpush1.bf16.xpose.msra.mxu0 0
      %318 = vmatprep.subr.bf16.mxu0 0
      %319 = vmatpush1.bf16.xpose.msra.mxu0 0
      %320 = vmatprep.subr.bf16.mxu0 0
      %321 = vmatpush1.bf16.xpose.msra.mxu0 %v304
      %322 = vmatprep.subr.bf16.mxu0 0
      %323 = vmatpush2.bf16.xpose.msra.mxu0 0
      %324 = vmatprep.subr.bf16.mxu0 0
      %325 = vmatpush2.bf16.xpose.msra.mxu0 0
      %326 = vmatprep.subr.bf16.mxu0 0
      %327 = vmatpush2.bf16.xpose.msra.mxu0 0
      %328 = vmatprep.subr.bf16.mxu0 0
      %329 = vmatpush2.bf16.xpose.msra.mxu0 0
      %330 = vmatprep.subr.bf16.mxu0 0
      %331 = vmatpush2.bf16.xpose.msra.mxu0 0
      %332 = vmatprep.subr.bf16.mxu0 0
      %333 = vmatpush2.bf16.xpose.msra.mxu0 0
      %334 = vmatprep.subr.bf16.mxu0 0
      %335 = vmatpush2.bf16.xpose.msra.mxu0 0
      %336 = vmatprep.subr.bf16.mxu0 0
      %337 = vmatpush2.bf16.xpose.msra.mxu0 0
      %338 = vmatprep.mubr.bf16.mxu0 0
      %339 = vmatmul.mubr.bf16.gmra.mxu0 %v301
      %v340 = vpop.f32.mrf.mxu0
      %v341 = vadd.f32 0.0, %v340
      %v342 = vpop.f32.mrf.mxu0
      %v343 = vpop.f32.mrf.mxu0
      %v344 = vpop.f32.mrf.mxu0
      %345 = vdwg.mxu0
      %346 = vrot.lane.b32.xlu0 %v200, 120
      %v347 = vpop.permute.xlu0 %346
      %v349 = vsel %vm203, %v200, 0
      %v352 = vsel %vm203, %v347, 0
      %354 = vmatprep.subr.bf16.mxu0 0
      %355 = vmatpush1.bf16.xpose.msra.mxu0 0
      %356 = vmatprep.subr.bf16.mxu0 0
      %357 = vmatpush1.bf16.xpose.msra.mxu0 0
      %358 = vmatprep.subr.bf16.mxu0 0
      %359 = vmatpush1.bf16.xpose.msra.mxu0 0
      %360 = vmatprep.subr.bf16.mxu0 0
      %361 = vmatpush1.bf16.xpose.msra.mxu0 0
      %362 = vmatprep.subr.bf16.mxu0 0
      %363 = vmatpush1.bf16.xpose.msra.mxu0 0
      %364 = vmatprep.subr.bf16.mxu0 0
      %365 = vmatpush1.bf16.xpose.msra.mxu0 0
      %366 = vmatprep.subr.bf16.mxu0 0
      %367 = vmatpush1.bf16.xpose.msra.mxu0 0
      %368 = vmatprep.subr.bf16.mxu0 0
      %369 = vmatpush1.bf16.xpose.msra.mxu0 %v352
      %370 = vmatprep.subr.bf16.mxu0 0
      %371 = vmatpush2.bf16.xpose.msra.mxu0 0
      %372 = vmatprep.subr.bf16.mxu0 0
      %373 = vmatpush2.bf16.xpose.msra.mxu0 0
      %374 = vmatprep.subr.bf16.mxu0 0
      %375 = vmatpush2.bf16.xpose.msra.mxu0 0
      %376 = vmatprep.subr.bf16.mxu0 0
      %377 = vmatpush2.bf16.xpose.msra.mxu0 0
      %378 = vmatprep.subr.bf16.mxu0 0
      %379 = vmatpush2.bf16.xpose.msra.mxu0 0
      %380 = vmatprep.subr.bf16.mxu0 0
      %381 = vmatpush2.bf16.xpose.msra.mxu0 0
      %382 = vmatprep.subr.bf16.mxu0 0
      %383 = vmatpush2.bf16.xpose.msra.mxu0 0
      %384 = vmatprep.subr.bf16.mxu0 0
      %385 = vmatpush2.bf16.xpose.msra.mxu0 0
      %386 = vmatprep.mubr.bf16.mxu0 0
      %387 = vmatmul.mubr.bf16.gmra.mxu0 %v349
      %v388 = vpop.f32.mrf.mxu0
      %v389 = vadd.f32 0.0, %v388
      %v390 = vpop.f32.mrf.mxu0
      %v391 = vpop.f32.mrf.mxu0
      %v392 = vpop.f32.mrf.mxu0
      %393 = vdwg.mxu0
      %v394 = vsel %vm203, %v245, -inf
      %395 = vmax.xlane.f32.xlu0 %v394
      %v396 = vpop.xlane.xlu0 %395
      %v397 = vsel %vm203, %v293, -inf
      %398 = vmax.xlane.f32.xlu0 %v397
      %v399 = vpop.xlane.xlu0 %398
      %v400 = vsel %vm203, %v341, -inf
      %401 = vmax.xlane.f32.xlu0 %v400
      %v402 = vpop.xlane.xlu0 %401
      %v403 = vsel %vm203, %v389, -inf
      %404 = vmax.xlane.f32.xlu0 %v403
      %v405 = vpop.xlane.xlu0 %404
      %v406 = vsub.f32 %v245, %v396
      %v407 = vsub.f32 %v293, %v399
      %v408 = vsub.f32 %v341, %v402
      %v409 = vsub.f32 %v389, %v405
      %v410 = vmul.f32 %v406, 1.442695
      %v411 = vpow.pop %v410
      %v412 = vmul.f32 %v407, 1.442695
      %v413 = vpow.pop %v412
      %v414 = vmul.f32 %v408, 1.442695
      %v415 = vpow.pop %v414
      %v416 = vmul.f32 %v409, 1.442695
      %v417 = vpow.pop %v416
      %v418 = vsel %vm203, %v411, 0.0
      %419 = vadd.xlane.f32.xlu0 %v418
      %v420 = vpop.xlane.xlu0 %419
      %v421 = vsel %vm203, %v413, 0.0
      %422 = vadd.xlane.f32.xlu0 %v421
      %v423 = vpop.xlane.xlu0 %422
      %v424 = vsel %vm203, %v415, 0.0
      %425 = vadd.xlane.f32.xlu0 %v424
      %v426 = vpop.xlane.xlu0 %425
      %v427 = vsel %vm203, %v417, 0.0
      %428 = vadd.xlane.f32.xlu0 %v427
      %v429 = vpop.xlane.xlu0 %428
      %v430 = vpack.c.bf16 %v411, %v411
      %v431 = vpack.c.bf16 %v413, %v413
      %v432 = vpack.c.bf16 %v415, %v415
      %v433 = vpack.c.bf16 %v417, %v417
      %434 = vrot.lane.b32.xlu0 %v193, 112
      %v435 = vpop.permute.xlu0 %434
      %v437 = vsel %vm203, %v430, 0
      %vm439 = vcmask 1043456
      %v441 = vsel %vm439, %v435, 0
      %443 = vmatprep.subr.bf16.mxu0 0
      %444 = vmatpush1.bf16.msra.mxu0 0
      %445 = vmatprep.subr.bf16.mxu0 0
      %446 = vmatpush1.bf16.msra.mxu0 0
      %447 = vmatprep.subr.bf16.mxu0 0
      %448 = vmatpush1.bf16.msra.mxu0 0
      %449 = vmatprep.subr.bf16.mxu0 0
      %450 = vmatpush1.bf16.msra.mxu0 0
      %451 = vmatprep.subr.bf16.mxu0 0
      %452 = vmatpush1.bf16.msra.mxu0 0
      %453 = vmatprep.subr.bf16.mxu0 0
      %454 = vmatpush1.bf16.msra.mxu0 0
      %455 = vmatprep.subr.bf16.mxu0 0
      %456 = vmatpush1.bf16.msra.mxu0 0
      %457 = vmatprep.subr.bf16.mxu0 0
      %458 = vmatpush1.bf16.msra.mxu0 %v441
      %459 = vmatprep.subr.bf16.mxu0 0
      %460 = vmatpush2.bf16.msra.mxu0 0
      %461 = vmatprep.subr.bf16.mxu0 0
      %462 = vmatpush2.bf16.msra.mxu0 0
      %463 = vmatprep.subr.bf16.mxu0 0
      %464 = vmatpush2.bf16.msra.mxu0 0
      %465 = vmatprep.subr.bf16.mxu0 0
      %466 = vmatpush2.bf16.msra.mxu0 0
      %467 = vmatprep.subr.bf16.mxu0 0
      %468 = vmatpush2.bf16.msra.mxu0 0
      %469 = vmatprep.subr.bf16.mxu0 0
      %470 = vmatpush2.bf16.msra.mxu0 0
      %471 = vmatprep.subr.bf16.mxu0 0
      %472 = vmatpush2.bf16.msra.mxu0 0
      %473 = vmatprep.subr.bf16.mxu0 0
      %474 = vmatpush2.bf16.msra.mxu0 0
      %475 = vmatprep.mubr.bf16.mxu0 0
      %476 = vmatmul.mubr.bf16.gmra.mxu0 %v437
      %v477 = vpop.f32.mrf.mxu0
      %v478 = vadd.f32 0.0, %v477
      %v479 = vpop.f32.mrf.mxu0
      %v480 = vpop.f32.mrf.mxu0
      %v481 = vpop.f32.mrf.mxu0
      %482 = vdwg.mxu0
      %483 = vrot.lane.b32.xlu0 %v196, 112
      %v484 = vpop.permute.xlu0 %483
      %v486 = vsel %vm203, %v431, 0
      %v489 = vsel %vm439, %v484, 0
      %491 = vmatprep.subr.bf16.mxu0 0
      %492 = vmatpush1.bf16.msra.mxu0 0
      %493 = vmatprep.subr.bf16.mxu0 0
      %494 = vmatpush1.bf16.msra.mxu0 0
      %495 = vmatprep.subr.bf16.mxu0 0
      %496 = vmatpush1.bf16.msra.mxu0 0
      %497 = vmatprep.subr.bf16.mxu0 0
      %498 = vmatpush1.bf16.msra.mxu0 0
      %499 = vmatprep.subr.bf16.mxu0 0
      %500 = vmatpush1.bf16.msra.mxu0 0
      %501 = vmatprep.subr.bf16.mxu0 0
      %502 = vmatpush1.bf16.msra.mxu0 0
      %503 = vmatprep.subr.bf16.mxu0 0
      %504 = vmatpush1.bf16.msra.mxu0 0
      %505 = vmatprep.subr.bf16.mxu0 0
      %506 = vmatpush1.bf16.msra.mxu0 %v489
      %507 = vmatprep.subr.bf16.mxu0 0
      %508 = vmatpush2.bf16.msra.mxu0 0
      %509 = vmatprep.subr.bf16.mxu0 0
      %510 = vmatpush2.bf16.msra.mxu0 0
      %511 = vmatprep.subr.bf16.mxu0 0
      %512 = vmatpush2.bf16.msra.mxu0 0
      %513 = vmatprep.subr.bf16.mxu0 0
      %514 = vmatpush2.bf16.msra.mxu0 0
      %515 = vmatprep.subr.bf16.mxu0 0
      %516 = vmatpush2.bf16.msra.mxu0 0
      %517 = vmatprep.subr.bf16.mxu0 0
      %518 = vmatpush2.bf16.msra.mxu0 0
      %519 = vmatprep.subr.bf16.mxu0 0
      %520 = vmatpush2.bf16.msra.mxu0 0
      %521 = vmatprep.subr.bf16.mxu0 0
      %522 = vmatpush2.bf16.msra.mxu0 0
      %523 = vmatprep.mubr.bf16.mxu0 0
      %524 = vmatmul.mubr.bf16.gmra.mxu0 %v486
      %v525 = vpop.f32.mrf.mxu0
      %v526 = vadd.f32 0.0, %v525
      %v527 = vpop.f32.mrf.mxu0
      %v528 = vpop.f32.mrf.mxu0
      %v529 = vpop.f32.mrf.mxu0
      %530 = vdwg.mxu0
      %531 = vrot.lane.b32.xlu0 %v198, 112
      %v532 = vpop.permute.xlu0 %531
      %v534 = vsel %vm203, %v432, 0
      %v537 = vsel %vm439, %v532, 0
      %539 = vmatprep.subr.bf16.mxu0 0
      %540 = vmatpush1.bf16.msra.mxu0 0
      %541 = vmatprep.subr.bf16.mxu0 0
      %542 = vmatpush1.bf16.msra.mxu0 0
      %543 = vmatprep.subr.bf16.mxu0 0
      %544 = vmatpush1.bf16.msra.mxu0 0
      %545 = vmatprep.subr.bf16.mxu0 0
      %546 = vmatpush1.bf16.msra.mxu0 0
      %547 = vmatprep.subr.bf16.mxu0 0
      %548 = vmatpush1.bf16.msra.mxu0 0
      %549 = vmatprep.subr.bf16.mxu0 0
      %550 = vmatpush1.bf16.msra.mxu0 0
      %551 = vmatprep.subr.bf16.mxu0 0
      %552 = vmatpush1.bf16.msra.mxu0 0
      %553 = vmatprep.subr.bf16.mxu0 0
      %554 = vmatpush1.bf16.msra.mxu0 %v537
      %555 = vmatprep.subr.bf16.mxu0 0
      %556 = vmatpush2.bf16.msra.mxu0 0
      %557 = vmatprep.subr.bf16.mxu0 0
      %558 = vmatpush2.bf16.msra.mxu0 0
      %559 = vmatprep.subr.bf16.mxu0 0
      %560 = vmatpush2.bf16.msra.mxu0 0
      %561 = vmatprep.subr.bf16.mxu0 0
      %562 = vmatpush2.bf16.msra.mxu0 0
      %563 = vmatprep.subr.bf16.mxu0 0
      %564 = vmatpush2.bf16.msra.mxu0 0
      %565 = vmatprep.subr.bf16.mxu0 0
      %566 = vmatpush2.bf16.msra.mxu0 0
      %567 = vmatprep.subr.bf16.mxu0 0
      %568 = vmatpush2.bf16.msra.mxu0 0
      %569 = vmatprep.subr.bf16.mxu0 0
      %570 = vmatpush2.bf16.msra.mxu0 0
      %571 = vmatprep.mubr.bf16.mxu0 0
      %572 = vmatmul.mubr.bf16.gmra.mxu0 %v534
      %v573 = vpop.f32.mrf.mxu0
      %v574 = vadd.f32 0.0, %v573
      %v575 = vpop.f32.mrf.mxu0
      %v576 = vpop.f32.mrf.mxu0
      %v577 = vpop.f32.mrf.mxu0
      %578 = vdwg.mxu0
      %579 = vrot.lane.b32.xlu0 %v200, 112
      %v580 = vpop.permute.xlu0 %579
      %v582 = vsel %vm203, %v433, 0
      %v585 = vsel %vm439, %v580, 0
      %587 = vmatprep.subr.bf16.mxu0 0
      %588 = vmatpush1.bf16.msra.mxu0 0
      %589 = vmatprep.subr.bf16.mxu0 0
      %590 = vmatpush1.bf16.msra.mxu0 0
      %591 = vmatprep.subr.bf16.mxu0 0
      %592 = vmatpush1.bf16.msra.mxu0 0
      %593 = vmatprep.subr.bf16.mxu0 0
      %594 = vmatpush1.bf16.msra.mxu0 0
      %595 = vmatprep.subr.bf16.mxu0 0
      %596 = vmatpush1.bf16.msra.mxu0 0
      %597 = vmatprep.subr.bf16.mxu0 0
      %598 = vmatpush1.bf16.msra.mxu0 0
      %599 = vmatprep.subr.bf16.mxu0 0
      %600 = vmatpush1.bf16.msra.mxu0 0
      %601 = vmatprep.subr.bf16.mxu0 0
      %602 = vmatpush1.bf16.msra.mxu0 %v585
      %603 = vmatprep.subr.bf16.mxu0 0
      %604 = vmatpush2.bf16.msra.mxu0 0
      %605 = vmatprep.subr.bf16.mxu0 0
      %606 = vmatpush2.bf16.msra.mxu0 0
      %607 = vmatprep.subr.bf16.mxu0 0
      %608 = vmatpush2.bf16.msra.mxu0 0
      %609 = vmatprep.subr.bf16.mxu0 0
      %610 = vmatpush2.bf16.msra.mxu0 0
      %611 = vmatprep.subr.bf16.mxu0 0
      %612 = vmatpush2.bf16.msra.mxu0 0
      %613 = vmatprep.subr.bf16.mxu0 0
      %614 = vmatpush2.bf16.msra.mxu0 0
      %615 = vmatprep.subr.bf16.mxu0 0
      %616 = vmatpush2.bf16.msra.mxu0 0
      %617 = vmatprep.subr.bf16.mxu0 0
      %618 = vmatpush2.bf16.msra.mxu0 0
      %619 = vmatprep.mubr.bf16.mxu0 0
      %620 = vmatmul.mubr.bf16.gmra.mxu0 %v582
      %v621 = vpop.f32.mrf.mxu0
      %v622 = vadd.f32 0.0, %v621
      %v623 = vpop.f32.mrf.mxu0
      %v624 = vpop.f32.mrf.mxu0
      %v625 = vpop.f32.mrf.mxu0
      %626 = vdwg.mxu0
      %v627 = vrcp.pop %v420
      %v628 = vrcp.pop %v423
      %v629 = vrcp.pop %v426
      %v630 = vrcp.pop %v429
      %v631 = vmul.f32 %v478, %v627
      %v632 = vmul.f32 %v526, %v628
      %v633 = vmul.f32 %v574, %v629
      %v634 = vmul.f32 %v622, %v630
      %636 = vrot.lane.b32.xlu0 %v632, 8
      %v637 = vpop.permute.xlu0 %636
      %640 = vrot.lane.b32.xlu0 %v633, 16
      %v641 = vpop.permute.xlu0 %640
      %644 = vrot.lane.b32.xlu0 %v634, 24
      %v645 = vpop.permute.xlu0 %644
      %v647 = vsel %vm203, %v631, %v637
      %vm648 = vcmask 130048
      %v649 = vsel %vm648, %v647, %v641
      %vm650 = vcmask 195584
      %v651 = vsel %vm650, %v649, %v645
      %v652 = vpack.c.bf16 %v190, %v190
      %654 = vrot.lane.b32.xlu0 %v652, 104
      %v655 = vpop.permute.xlu0 %654
      %656 = vrot.lane.b32.xlu0 %v652, 80
      %v657 = vpop.permute.xlu0 %656
      %658 = vrot.lane.b32.xlu0 %v652, 56
      %v659 = vpop.permute.xlu0 %658
      %660 = vrot.lane.b32.xlu0 %v652, 120
      %v661 = vpop.permute.xlu0 %660
      %v663 = vsel %vm203, %v652, 0
      %v666 = vsel %vm203, %v661, 0
      %668 = vmatprep.subr.bf16.mxu0 0
      %669 = vmatpush1.bf16.xpose.msra.mxu0 0
      %670 = vmatprep.subr.bf16.mxu0 0
      %671 = vmatpush1.bf16.xpose.msra.mxu0 0
      %672 = vmatprep.subr.bf16.mxu0 0
      %673 = vmatpush1.bf16.xpose.msra.mxu0 0
      %674 = vmatprep.subr.bf16.mxu0 0
      %675 = vmatpush1.bf16.xpose.msra.mxu0 0
      %676 = vmatprep.subr.bf16.mxu0 0
      %677 = vmatpush1.bf16.xpose.msra.mxu0 0
      %678 = vmatprep.subr.bf16.mxu0 0
      %679 = vmatpush1.bf16.xpose.msra.mxu0 0
      %680 = vmatprep.subr.bf16.mxu0 0
      %681 = vmatpush1.bf16.xpose.msra.mxu0 0
      %682 = vmatprep.subr.bf16.mxu0 0
      %683 = vmatpush1.bf16.xpose.msra.mxu0 %v666
      %684 = vmatprep.subr.bf16.mxu0 0
      %685 = vmatpush2.bf16.xpose.msra.mxu0 0
      %686 = vmatprep.subr.bf16.mxu0 0
      %687 = vmatpush2.bf16.xpose.msra.mxu0 0
      %688 = vmatprep.subr.bf16.mxu0 0
      %689 = vmatpush2.bf16.xpose.msra.mxu0 0
      %690 = vmatprep.subr.bf16.mxu0 0
      %691 = vmatpush2.bf16.xpose.msra.mxu0 0
      %692 = vmatprep.subr.bf16.mxu0 0
      %693 = vmatpush2.bf16.xpose.msra.mxu0 0
      %694 = vmatprep.subr.bf16.mxu0 0
      %695 = vmatpush2.bf16.xpose.msra.mxu0 0
      %696 = vmatprep.subr.bf16.mxu0 0
      %697 = vmatpush2.bf16.xpose.msra.mxu0 0
      %698 = vmatprep.subr.bf16.mxu0 0
      %699 = vmatpush2.bf16.xpose.msra.mxu0 0
      %700 = vmatprep.mubr.bf16.mxu0 0
      %701 = vmatmul.mubr.bf16.gmra.mxu0 %v663
      %v702 = vpop.f32.mrf.mxu0
      %v703 = vadd.f32 0.0, %v702
      %v704 = vpop.f32.mrf.mxu0
      %v705 = vpop.f32.mrf.mxu0
      %v706 = vpop.f32.mrf.mxu0
      %707 = vdwg.mxu0
      %708 = vrot.lane.b32.xlu0 %v655, 120
      %v709 = vpop.permute.xlu0 %708
      %v711 = vsel %vm203, %v655, 0
      %v714 = vsel %vm203, %v709, 0
      %716 = vmatprep.subr.bf16.mxu0 0
      %717 = vmatpush1.bf16.xpose.msra.mxu0 0
      %718 = vmatprep.subr.bf16.mxu0 0
      %719 = vmatpush1.bf16.xpose.msra.mxu0 0
      %720 = vmatprep.subr.bf16.mxu0 0
      %721 = vmatpush1.bf16.xpose.msra.mxu0 0
      %722 = vmatprep.subr.bf16.mxu0 0
      %723 = vmatpush1.bf16.xpose.msra.mxu0 0
      %724 = vmatprep.subr.bf16.mxu0 0
      %725 = vmatpush1.bf16.xpose.msra.mxu0 0
      %726 = vmatprep.subr.bf16.mxu0 0
      %727 = vmatpush1.bf16.xpose.msra.mxu0 0
      %728 = vmatprep.subr.bf16.mxu0 0
      %729 = vmatpush1.bf16.xpose.msra.mxu0 0
      %730 = vmatprep.subr.bf16.mxu0 0
      %731 = vmatpush1.bf16.xpose.msra.mxu0 %v714
      %732 = vmatprep.subr.bf16.mxu0 0
      %733 = vmatpush2.bf16.xpose.msra.mxu0 0
      %734 = vmatprep.subr.bf16.mxu0 0
      %735 = vmatpush2.bf16.xpose.msra.mxu0 0
      %736 = vmatprep.subr.bf16.mxu0 0
      %737 = vmatpush2.bf16.xpose.msra.mxu0 0
      %738 = vmatprep.subr.bf16.mxu0 0
      %739 = vmatpush2.bf16.xpose.msra.mxu0 0
      %740 = vmatprep.subr.bf16.mxu0 0
      %741 = vmatpush2.bf16.xpose.msra.mxu0 0
      %742 = vmatprep.subr.bf16.mxu0 0
      %743 = vmatpush2.bf16.xpose.msra.mxu0 0
      %744 = vmatprep.subr.bf16.mxu0 0
      %745 = vmatpush2.bf16.xpose.msra.mxu0 0
      %746 = vmatprep.subr.bf16.mxu0 0
      %747 = vmatpush2.bf16.xpose.msra.mxu0 0
      %748 = vmatprep.mubr.bf16.mxu0 0
      %749 = vmatmul.mubr.bf16.gmra.mxu0 %v711
      %v750 = vpop.f32.mrf.mxu0
      %v751 = vadd.f32 0.0, %v750
      %v752 = vpop.f32.mrf.mxu0
      %v753 = vpop.f32.mrf.mxu0
      %v754 = vpop.f32.mrf.mxu0
      %755 = vdwg.mxu0
      %756 = vrot.lane.b32.xlu0 %v657, 120
      %v757 = vpop.permute.xlu0 %756
      %v759 = vsel %vm203, %v657, 0
      %v762 = vsel %vm203, %v757, 0
      %764 = vmatprep.subr.bf16.mxu0 0
      %765 = vmatpush1.bf16.xpose.msra.mxu0 0
      %766 = vmatprep.subr.bf16.mxu0 0
      %767 = vmatpush1.bf16.xpose.msra.mxu0 0
      %768 = vmatprep.subr.bf16.mxu0 0
      %769 = vmatpush1.bf16.xpose.msra.mxu0 0
      %770 = vmatprep.subr.bf16.mxu0 0
      %771 = vmatpush1.bf16.xpose.msra.mxu0 0
      %772 = vmatprep.subr.bf16.mxu0 0
      %773 = vmatpush1.bf16.xpose.msra.mxu0 0
      %774 = vmatprep.subr.bf16.mxu0 0
      %775 = vmatpush1.bf16.xpose.msra.mxu0 0
      %776 = vmatprep.subr.bf16.mxu0 0
      %777 = vmatpush1.bf16.xpose.msra.mxu0 0
      %778 = vmatprep.subr.bf16.mxu0 0
      %779 = vmatpush1.bf16.xpose.msra.mxu0 %v762
      %780 = vmatprep.subr.bf16.mxu0 0
      %781 = vmatpush2.bf16.xpose.msra.mxu0 0
      %782 = vmatprep.subr.bf16.mxu0 0
      %783 = vmatpush2.bf16.xpose.msra.mxu0 0
      %784 = vmatprep.subr.bf16.mxu0 0
      %785 = vmatpush2.bf16.xpose.msra.mxu0 0
      %786 = vmatprep.subr.bf16.mxu0 0
      %787 = vmatpush2.bf16.xpose.msra.mxu0 0
      %788 = vmatprep.subr.bf16.mxu0 0
      %789 = vmatpush2.bf16.xpose.msra.mxu0 0
      %790 = vmatprep.subr.bf16.mxu0 0
      %791 = vmatpush2.bf16.xpose.msra.mxu0 0
      %792 = vmatprep.subr.bf16.mxu0 0
      %793 = vmatpush2.bf16.xpose.msra.mxu0 0
      %794 = vmatprep.subr.bf16.mxu0 0
      %795 = vmatpush2.bf16.xpose.msra.mxu0 0
      %796 = vmatprep.mubr.bf16.mxu0 0
      %797 = vmatmul.mubr.bf16.gmra.mxu0 %v759
      %v798 = vpop.f32.mrf.mxu0
      %v799 = vadd.f32 0.0, %v798
      %v800 = vpop.f32.mrf.mxu0
      %v801 = vpop.f32.mrf.mxu0
      %v802 = vpop.f32.mrf.mxu0
      %803 = vdwg.mxu0
      %804 = vrot.lane.b32.xlu0 %v659, 120
      %v805 = vpop.permute.xlu0 %804
      %v807 = vsel %vm203, %v659, 0
      %v810 = vsel %vm203, %v805, 0
      %812 = vmatprep.subr.bf16.mxu0 0
      %813 = vmatpush1.bf16.xpose.msra.mxu0 0
      %814 = vmatprep.subr.bf16.mxu0 0
      %815 = vmatpush1.bf16.xpose.msra.mxu0 0
      %816 = vmatprep.subr.bf16.mxu0 0
      %817 = vmatpush1.bf16.xpose.msra.mxu0 0
      %818 = vmatprep.subr.bf16.mxu0 0
      %819 = vmatpush1.bf16.xpose.msra.mxu0 0
      %820 = vmatprep.subr.bf16.mxu0 0
      %821 = vmatpush1.bf16.xpose.msra.mxu0 0
      %822 = vmatprep.subr.bf16.mxu0 0
      %823 = vmatpush1.bf16.xpose.msra.mxu0 0
      %824 = vmatprep.subr.bf16.mxu0 0
      %825 = vmatpush1.bf16.xpose.msra.mxu0 0
      %826 = vmatprep.subr.bf16.mxu0 0
      %827 = vmatpush1.bf16.xpose.msra.mxu0 %v810
      %828 = vmatprep.subr.bf16.mxu0 0
      %829 = vmatpush2.bf16.xpose.msra.mxu0 0
      %830 = vmatprep.subr.bf16.mxu0 0
      %831 = vmatpush2.bf16.xpose.msra.mxu0 0
      %832 = vmatprep.subr.bf16.mxu0 0
      %833 = vmatpush2.bf16.xpose.msra.mxu0 0
      %834 = vmatprep.subr.bf16.mxu0 0
      %835 = vmatpush2.bf16.xpose.msra.mxu0 0
      %836 = vmatprep.subr.bf16.mxu0 0
      %837 = vmatpush2.bf16.xpose.msra.mxu0 0
      %838 = vmatprep.subr.bf16.mxu0 0
      %839 = vmatpush2.bf16.xpose.msra.mxu0 0
      %840 = vmatprep.subr.bf16.mxu0 0
      %841 = vmatpush2.bf16.xpose.msra.mxu0 0
      %842 = vmatprep.subr.bf16.mxu0 0
      %843 = vmatpush2.bf16.xpose.msra.mxu0 0
      %844 = vmatprep.mubr.bf16.mxu0 0
      %845 = vmatmul.mubr.bf16.gmra.mxu0 %v807
      %v846 = vpop.f32.mrf.mxu0
      %v847 = vadd.f32 0.0, %v846
      %v848 = vpop.f32.mrf.mxu0
      %v849 = vpop.f32.mrf.mxu0
      %v850 = vpop.f32.mrf.mxu0
      %851 = vdwg.mxu0
      %v852 = vsel %vm203, %v703, -inf
      %853 = vmax.xlane.f32.xlu0 %v852
      %v854 = vpop.xlane.xlu0 %853
      %v855 = vsel %vm203, %v751, -inf
      %856 = vmax.xlane.f32.xlu0 %v855
      %v857 = vpop.xlane.xlu0 %856
      %v858 = vsel %vm203, %v799, -inf
      %859 = vmax.xlane.f32.xlu0 %v858
      %v860 = vpop.xlane.xlu0 %859
      %v861 = vsel %vm203, %v847, -inf
      %862 = vmax.xlane.f32.xlu0 %v861
      %v863 = vpop.xlane.xlu0 %862
      %v864 = vsub.f32 %v703, %v854
      %v865 = vsub.f32 %v751, %v857
      %v866 = vsub.f32 %v799, %v860
      %v867 = vsub.f32 %v847, %v863
      %v868 = vmul.f32 %v864, 1.442695
      %v869 = vpow.pop %v868
      %v870 = vmul.f32 %v865, 1.442695
      %v871 = vpow.pop %v870
      %v872 = vmul.f32 %v866, 1.442695
      %v873 = vpow.pop %v872
      %v874 = vmul.f32 %v867, 1.442695
      %v875 = vpow.pop %v874
      %v876 = vsel %vm203, %v869, 0.0
      %877 = vadd.xlane.f32.xlu0 %v876
      %v878 = vpop.xlane.xlu0 %877
      %v879 = vsel %vm203, %v871, 0.0
      %880 = vadd.xlane.f32.xlu0 %v879
      %v881 = vpop.xlane.xlu0 %880
      %v882 = vsel %vm203, %v873, 0.0
      %883 = vadd.xlane.f32.xlu0 %v882
      %v884 = vpop.xlane.xlu0 %883
      %v885 = vsel %vm203, %v875, 0.0
      %886 = vadd.xlane.f32.xlu0 %v885
      %v887 = vpop.xlane.xlu0 %886
      %v888 = vpack.c.bf16 %v869, %v869
      %v889 = vpack.c.bf16 %v871, %v871
      %v890 = vpack.c.bf16 %v873, %v873
      %v891 = vpack.c.bf16 %v875, %v875
      %892 = vrot.lane.b32.xlu0 %v652, 112
      %v893 = vpop.permute.xlu0 %892
      %v895 = vsel %vm203, %v888, 0
      %v898 = vsel %vm439, %v893, 0
      %900 = vmatprep.subr.bf16.mxu0 0
      %901 = vmatpush1.bf16.msra.mxu0 0
      %902 = vmatprep.subr.bf16.mxu0 0
      %903 = vmatpush1.bf16.msra.mxu0 0
      %904 = vmatprep.subr.bf16.mxu0 0
      %905 = vmatpush1.bf16.msra.mxu0 0
      %906 = vmatprep.subr.bf16.mxu0 0
      %907 = vmatpush1.bf16.msra.mxu0 0
      %908 = vmatprep.subr.bf16.mxu0 0
      %909 = vmatpush1.bf16.msra.mxu0 0
      %910 = vmatprep.subr.bf16.mxu0 0
      %911 = vmatpush1.bf16.msra.mxu0 0
      %912 = vmatprep.subr.bf16.mxu0 0
      %913 = vmatpush1.bf16.msra.mxu0 0
      %914 = vmatprep.subr.bf16.mxu0 0
      %915 = vmatpush1.bf16.msra.mxu0 %v898
      %916 = vmatprep.subr.bf16.mxu0 0
      %917 = vmatpush2.bf16.msra.mxu0 0
      %918 = vmatprep.subr.bf16.mxu0 0
      %919 = vmatpush2.bf16.msra.mxu0 0
      %920 = vmatprep.subr.bf16.mxu0 0
      %921 = vmatpush2.bf16.msra.mxu0 0
      %922 = vmatprep.subr.bf16.mxu0 0
      %923 = vmatpush2.bf16.msra.mxu0 0
      %924 = vmatprep.subr.bf16.mxu0 0
      %925 = vmatpush2.bf16.msra.mxu0 0
      %926 = vmatprep.subr.bf16.mxu0 0
      %927 = vmatpush2.bf16.msra.mxu0 0
      %928 = vmatprep.subr.bf16.mxu0 0
      %929 = vmatpush2.bf16.msra.mxu0 0
      %930 = vmatprep.subr.bf16.mxu0 0
      %931 = vmatpush2.bf16.msra.mxu0 0
      %932 = vmatprep.mubr.bf16.mxu0 0
      %933 = vmatmul.mubr.bf16.gmra.mxu0 %v895
      %v934 = vpop.f32.mrf.mxu0
      %v935 = vadd.f32 0.0, %v934
      %v936 = vpop.f32.mrf.mxu0
      %v937 = vpop.f32.mrf.mxu0
      %v938 = vpop.f32.mrf.mxu0
      %939 = vdwg.mxu0
      %940 = vrot.lane.b32.xlu0 %v655, 112
      %v941 = vpop.permute.xlu0 %940
      %v943 = vsel %vm203, %v889, 0
      %v946 = vsel %vm439, %v941, 0
      %948 = vmatprep.subr.bf16.mxu0 0
      %949 = vmatpush1.bf16.msra.mxu0 0
      %950 = vmatprep.subr.bf16.mxu0 0
      %951 = vmatpush1.bf16.msra.mxu0 0
      %952 = vmatprep.subr.bf16.mxu0 0
      %953 = vmatpush1.bf16.msra.mxu0 0
      %954 = vmatprep.subr.bf16.mxu0 0
      %955 = vmatpush1.bf16.msra.mxu0 0
      %956 = vmatprep.subr.bf16.mxu0 0
      %957 = vmatpush1.bf16.msra.mxu0 0
      %958 = vmatprep.subr.bf16.mxu0 0
      %959 = vmatpush1.bf16.msra.mxu0 0
      %960 = vmatprep.subr.bf16.mxu0 0
      %961 = vmatpush1.bf16.msra.mxu0 0
      %962 = vmatprep.subr.bf16.mxu0 0
      %963 = vmatpush1.bf16.msra.mxu0 %v946
      %964 = vmatprep.subr.bf16.mxu0 0
      %965 = vmatpush2.bf16.msra.mxu0 0
      %966 = vmatprep.subr.bf16.mxu0 0
      %967 = vmatpush2.bf16.msra.mxu0 0
      %968 = vmatprep.subr.bf16.mxu0 0
      %969 = vmatpush2.bf16.msra.mxu0 0
      %970 = vmatprep.subr.bf16.mxu0 0
      %971 = vmatpush2.bf16.msra.mxu0 0
      %972 = vmatprep.subr.bf16.mxu0 0
      %973 = vmatpush2.bf16.msra.mxu0 0
      %974 = vmatprep.subr.bf16.mxu0 0
      %975 = vmatpush2.bf16.msra.mxu0 0
      %976 = vmatprep.subr.bf16.mxu0 0
      %977 = vmatpush2.bf16.msra.mxu0 0
      %978 = vmatprep.subr.bf16.mxu0 0
      %979 = vmatpush2.bf16.msra.mxu0 0
      %980 = vmatprep.mubr.bf16.mxu0 0
      %981 = vmatmul.mubr.bf16.gmra.mxu0 %v943
      %v982 = vpop.f32.mrf.mxu0
      %v983 = vadd.f32 0.0, %v982
      %v984 = vpop.f32.mrf.mxu0
      %v985 = vpop.f32.mrf.mxu0
      %v986 = vpop.f32.mrf.mxu0
      %987 = vdwg.mxu0
      %988 = vrot.lane.b32.xlu0 %v657, 112
      %v989 = vpop.permute.xlu0 %988
      %v991 = vsel %vm203, %v890, 0
      %v994 = vsel %vm439, %v989, 0
      %996 = vmatprep.subr.bf16.mxu0 0
      %997 = vmatpush1.bf16.msra.mxu0 0
      %998 = vmatprep.subr.bf16.mxu0 0
      %999 = vmatpush1.bf16.msra.mxu0 0
      %1000 = vmatprep.subr.bf16.mxu0 0
      %1001 = vmatpush1.bf16.msra.mxu0 0
      %1002 = vmatprep.subr.bf16.mxu0 0
      %1003 = vmatpush1.bf16.msra.mxu0 0
      %1004 = vmatprep.subr.bf16.mxu0 0
      %1005 = vmatpush1.bf16.msra.mxu0 0
      %1006 = vmatprep.subr.bf16.mxu0 0
      %1007 = vmatpush1.bf16.msra.mxu0 0
      %1008 = vmatprep.subr.bf16.mxu0 0
      %1009 = vmatpush1.bf16.msra.mxu0 0
      %1010 = vmatprep.subr.bf16.mxu0 0
      %1011 = vmatpush1.bf16.msra.mxu0 %v994
      %1012 = vmatprep.subr.bf16.mxu0 0
      %1013 = vmatpush2.bf16.msra.mxu0 0
      %1014 = vmatprep.subr.bf16.mxu0 0
      %1015 = vmatpush2.bf16.msra.mxu0 0
      %1016 = vmatprep.subr.bf16.mxu0 0
      %1017 = vmatpush2.bf16.msra.mxu0 0
      %1018 = vmatprep.subr.bf16.mxu0 0
      %1019 = vmatpush2.bf16.msra.mxu0 0
      %1020 = vmatprep.subr.bf16.mxu0 0
      %1021 = vmatpush2.bf16.msra.mxu0 0
      %1022 = vmatprep.subr.bf16.mxu0 0
      %1023 = vmatpush2.bf16.msra.mxu0 0
      %1024 = vmatprep.subr.bf16.mxu0 0
      %1025 = vmatpush2.bf16.msra.mxu0 0
      %1026 = vmatprep.subr.bf16.mxu0 0
      %1027 = vmatpush2.bf16.msra.mxu0 0
      %1028 = vmatprep.mubr.bf16.mxu0 0
      %1029 = vmatmul.mubr.bf16.gmra.mxu0 %v991
      %v1030 = vpop.f32.mrf.mxu0
      %v1031 = vadd.f32 0.0, %v1030
      %v1032 = vpop.f32.mrf.mxu0
      %v1033 = vpop.f32.mrf.mxu0
      %v1034 = vpop.f32.mrf.mxu0
      %1035 = vdwg.mxu0
      %1036 = vrot.lane.b32.xlu0 %v659, 112
      %v1037 = vpop.permute.xlu0 %1036
      %v1039 = vsel %vm203, %v891, 0
      %v1042 = vsel %vm439, %v1037, 0
      %1044 = vmatprep.subr.bf16.mxu0 0
      %1045 = vmatpush1.bf16.msra.mxu0 0
      %1046 = vmatprep.subr.bf16.mxu0 0
      %1047 = vmatpush1.bf16.msra.mxu0 0
      %1048 = vmatprep.subr.bf16.mxu0 0
      %1049 = vmatpush1.bf16.msra.mxu0 0
      %1050 = vmatprep.subr.bf16.mxu0 0
      %1051 = vmatpush1.bf16.msra.mxu0 0
      %1052 = vmatprep.subr.bf16.mxu0 0
      %1053 = vmatpush1.bf16.msra.mxu0 0
      %1054 = vmatprep.subr.bf16.mxu0 0
      %1055 = vmatpush1.bf16.msra.mxu0 0
      %1056 = vmatprep.subr.bf16.mxu0 0
      %1057 = vmatpush1.bf16.msra.mxu0 0
      %1058 = vmatprep.subr.bf16.mxu0 0
      %1059 = vmatpush1.bf16.msra.mxu0 %v1042
      %1060 = vmatprep.subr.bf16.mxu0 0
      %1061 = vmatpush2.bf16.msra.mxu0 0
      %1062 = vmatprep.subr.bf16.mxu0 0
      %1063 = vmatpush2.bf16.msra.mxu0 0
      %1064 = vmatprep.subr.bf16.mxu0 0
      %1065 = vmatpush2.bf16.msra.mxu0 0
      %1066 = vmatprep.subr.bf16.mxu0 0
      %1067 = vmatpush2.bf16.msra.mxu0 0
      %1068 = vmatprep.subr.bf16.mxu0 0
      %1069 = vmatpush2.bf16.msra.mxu0 0
      %1070 = vmatprep.subr.bf16.mxu0 0
      %1071 = vmatpush2.bf16.msra.mxu0 0
      %1072 = vmatprep.subr.bf16.mxu0 0
      %1073 = vmatpush2.bf16.msra.mxu0 0
      %1074 = vmatprep.subr.bf16.mxu0 0
      %1075 = vmatpush2.bf16.msra.mxu0 0
      %1076 = vmatprep.mubr.bf16.mxu0 0
      %1077 = vmatmul.mubr.bf16.gmra.mxu0 %v1039
      %v1078 = vpop.f32.mrf.mxu0
      %v1079 = vadd.f32 0.0, %v1078
      %v1080 = vpop.f32.mrf.mxu0
      %v1081 = vpop.f32.mrf.mxu0
      %v1082 = vpop.f32.mrf.mxu0
      %1083 = vdwg.mxu0
      %v1084 = vrcp.pop %v878
      %v1085 = vrcp.pop %v881
      %v1086 = vrcp.pop %v884
      %v1087 = vrcp.pop %v887
      %v1088 = vmul.f32 %v935, %v1084
      %v1089 = vmul.f32 %v983, %v1085
      %v1090 = vmul.f32 %v1031, %v1086
      %v1091 = vmul.f32 %v1079, %v1087
      %1093 = vrot.lane.b32.xlu0 %v1089, 8
      %v1094 = vpop.permute.xlu0 %1093
      %1097 = vrot.lane.b32.xlu0 %v1090, 16
      %v1098 = vpop.permute.xlu0 %1097
      %1101 = vrot.lane.b32.xlu0 %v1091, 24
      %v1102 = vpop.permute.xlu0 %1101
      %v1104 = vsel %vm203, %v1088, %v1094
      %v1105 = vsel %vm648, %v1104, %v1098
      %v1106 = vsel %vm650, %v1105, %v1102
      %v1107 = vpack.c.bf16 %v1106, %v651
      %v1108 = vld [vmem:[%s3] sm:$0xf]
      %v1109 = vld [vmem:[%s3 + $0x4] sm:$0xf]
      %v1110 = vld [vmem:[%s3 + $0x8] sm:$0xf]
      %v1111 = vld [vmem:[%s3 + $0xc] sm:$0xf]
      %v1112 = vld [vmem:[#allocation7] sm:$0x1]
      %v1114 = vlaneseq
      %v1115 = vshrl.u32 %v1114, 7
      %v1116 = vsub.s32 0, %v1115
      %v1117 = vrot.slane %v1112, %v1116
      %v1123 = vunpack.c.l.b16 %v1108
      %v1124 = vunpack.c.l.b16 %v1109
      %v1125 = vunpack.c.l.b16 %v1110
      %v1126 = vunpack.c.l.b16 %v1111
      %v1127 = vpack.c.b16 %v1124, %v1123
      %v1128 = vpack.c.b16 %v1126, %v1125
      %v1132 = vsel %vm148, %v1107, 0
      %1134 = vmatprep.subr.bf16.mxu0 0
      %1135 = vmatpush1.bf16.msra.mxu0 0
      %1136 = vmatprep.subr.bf16.mxu0 0
      %1137 = vmatpush1.bf16.msra.mxu0 0
      %1138 = vmatprep.subr.bf16.mxu0 0
      %1139 = vmatpush1.bf16.msra.mxu0 0
      %1140 = vmatprep.subr.bf16.mxu0 0
      %1141 = vmatpush1.bf16.msra.mxu0 0
      %1142 = vmatprep.subr.bf16.mxu0 0
      %1143 = vmatpush1.bf16.msra.mxu0 0
      %1144 = vmatprep.subr.bf16.mxu0 0
      %1145 = vmatpush1.bf16.msra.mxu0 0
      %1146 = vmatprep.subr.bf16.mxu0 0
      %1147 = vmatpush1.bf16.msra.mxu0 %v1128
      %1148 = vmatprep.subr.bf16.mxu0 0
      %1149 = vmatpush1.bf16.msra.mxu0 %v1127
      %1150 = vmatprep.subr.bf16.mxu0 0
      %1151 = vmatpush2.bf16.msra.mxu0 0
      %1152 = vmatprep.subr.bf16.mxu0 0
      %1153 = vmatpush2.bf16.msra.mxu0 0
      %1154 = vmatprep.subr.bf16.mxu0 0
      %1155 = vmatpush2.bf16.msra.mxu0 0
      %1156 = vmatprep.subr.bf16.mxu0 0
      %1157 = vmatpush2.bf16.msra.mxu0 0
      %1158 = vmatprep.subr.bf16.mxu0 0
      %1159 = vmatpush2.bf16.msra.mxu0 0
      %1160 = vmatprep.subr.bf16.mxu0 0
      %1161 = vmatpush2.bf16.msra.mxu0 0
      %1162 = vmatprep.subr.bf16.mxu0 0
      %1163 = vmatpush2.bf16.msra.mxu0 0
      %1164 = vmatprep.subr.bf16.mxu0 0
      %1165 = vmatpush2.bf16.msra.mxu0 0
      %1166 = vmatprep.mubr.bf16.mxu0 0
      %1167 = vmatmul.mubr.bf16.gmra.mxu0 %v1132
      %v1168 = vpop.f32.mrf.mxu0
      %v1169 = vadd.f32 %v1117, %v1168
      %v1170 = vpop.f32.mrf.mxu0
      %v1171 = vpop.f32.mrf.mxu0
      %v1172 = vadd.f32 %v1117, %v1171
      %v1173 = vpop.f32.mrf.mxu0
      %1174 = vdwg.mxu0
      %v1175 = vadd.f32 %v122, %v1169
      %v1176 = vadd.f32 %v123, %v1172
      %v1177 = vsel %vm148, %v1175, 0.0
      %1178 = vadd.xlane.f32.xlu0 %v1177
      %v1179 = vpop.xlane.xlu0 %1178
      %v1180 = vsel %vm148, %v1176, 0.0
      %1181 = vadd.xlane.f32.xlu0 %v1180
      %v1182 = vpop.xlane.xlu0 %1181
      %v1183 = vrcp.pop 32.0
      %v1184 = vmul.f32 %v1179, %v1183
      %v1185 = vmul.f32 %v1182, %v1183
      %v1186 = vsub.f32 %v1175, %v1184
      %v1187 = vsub.f32 %v1176, %v1185
      %v1188 = vmul.f32 %v1186, %v1186
      %v1189 = vmul.f32 %v1187, %v1187
      %v1190 = vsel %vm148, %v1188, 0.0
      %1191 = vadd.xlane.f32.xlu0 %v1190
      %v1192 = vpop.xlane.xlu0 %1191
      %v1193 = vsel %vm148, %v1189, 0.0
      %1194 = vadd.xlane.f32.xlu0 %v1193
      %v1195 = vpop.xlane.xlu0 %1194
      %v1196 = vmul.f32 %v1192, %v1183
      %v1197 = vmul.f32 %v1195, %v1183
      %v1198 = vadd.f32 %v1196, 1e-05
      %v1199 = vadd.f32 %v1197, 1e-05
      %v1200 = vrsqrt.pop %v1198
      %v1201 = vrsqrt.pop %v1199
      %v1202 = vmul.f32 %v1186, %v1200
      %v1203 = vmul.f32 %v1187, %v1201
      %v1204 = vld [vmem:[#allocation9] sm:$0x1]
      %v1206 = vlaneseq
      %v1207 = vshrl.u32 %v1206, 7
      %v1208 = vsub.s32 0, %v1207
      %v1209 = vrot.slane %v1204, %v1208
      %v1211 = vmul.f32 %v1202, %v1209
      %v1212 = vmul.f32 %v1203, %v1209
      %v1213 = vld [vmem:[#allocation10] sm:$0x1]
      %v1215 = vlaneseq
      %v1216 = vshrl.u32 %v1215, 7
      %v1217 = vsub.s32 0, %v1216
      %v1218 = vrot.slane %v1213, %v1217
      %v1220 = vadd.f32 %v1211, %v1218
      %v1221 = vadd.f32 %v1212, %v1218
      %1222 = vst.msk [vmem:[#allocation2] sm:$0xff] %vm148, %v1220
      %1223 = vst.msk [vmem:[#allocation2 + $0x8] sm:$0xff] %vm148, %v1221
      %1224 = vst.msk [vmem:[#allocation3] sm:$0xff] %vm148, 0.0
      %1225 = vst.msk [vmem:[#allocation3 + $0x8] sm:$0xff] %vm148, 0.0
    $region81: #{tpu_custom_call.1} parent=1 // pred_fallthru
      _
    %v1226 = vld [vmem:[#allocation2] sm:$0xff]
    %v1227 = vld [vmem:[#allocation2 + $0x8] sm:$0xff]
    %v1228 = vpack.c.bf16 %v1227, %v1226
    %v1229 = vld [vmem:[#allocation12] sm:$0xf]
    %v1230 = vld [vmem:[#allocation12 + $0x4] sm:$0xf]
    %v1231 = vld [vmem:[#allocation12 + $0x8] sm:$0xf]
    %v1232 = vld [vmem:[#allocation12 + $0xc] sm:$0xf]
    %v1233 = vld [vmem:[#allocation13] sm:$0x1]
    %v1235 = vlaneseq
    %v1236 = vshrl.u32 %v1235, 7
    %v1237 = vsub.s32 0, %v1236
    %v1238 = vrot.slane %v1233, %v1237
    %v1244 = vunpack.c.l.b16 %v1229
    %v1245 = vunpack.c.l.b16 %v1230
    %v1246 = vunpack.c.l.b16 %v1231
    %v1247 = vunpack.c.l.b16 %v1232
    %v1248 = vpack.c.b16 %v1245, %v1244
    %v1249 = vpack.c.b16 %v1247, %v1246
    %vm1252 = vcmask 261120
    %v1254 = vsel %vm1252, %v1228, 0
    %1256 = vmatprep.subr.bf16.mxu0 0
    %1257 = vmatpush1.bf16.msra.mxu0 0
    %1258 = vmatprep.subr.bf16.mxu0 0
    %1259 = vmatpush1.bf16.msra.mxu0 0
    %1260 = vmatprep.subr.bf16.mxu0 0
    %1261 = vmatpush1.bf16.msra.mxu0 0
    %1262 = vmatprep.subr.bf16.mxu0 0
    %1263 = vmatpush1.bf16.msra.mxu0 0
    %1264 = vmatprep.subr.bf16.mxu0 0
    %1265 = vmatpush1.bf16.msra.mxu0 0
    %1266 = vmatprep.subr.bf16.mxu0 0
    %1267 = vmatpush1.bf16.msra.mxu0 0
    %1268 = vmatprep.subr.bf16.mxu0 0
    %1269 = vmatpush1.bf16.msra.mxu0 %v1249
    %1270 = vmatprep.subr.bf16.mxu0 0
    %1271 = vmatpush1.bf16.msra.mxu0 %v1248
    %1272 = vmatprep.subr.bf16.mxu0 0
    %1273 = vmatpush2.bf16.msra.mxu0 0
    %1274 = vmatprep.subr.bf16.mxu0 0
    %1275 = vmatpush2.bf16.msra.mxu0 0
    %1276 = vmatprep.subr.bf16.mxu0 0
    %1277 = vmatpush2.bf16.msra.mxu0 0
    %1278 = vmatprep.subr.bf16.mxu0 0
    %1279 = vmatpush2.bf16.msra.mxu0 0
    %1280 = vmatprep.subr.bf16.mxu0 0
    %1281 = vmatpush2.bf16.msra.mxu0 0
    %1282 = vmatprep.subr.bf16.mxu0 0
    %1283 = vmatpush2.bf16.msra.mxu0 0
    %1284 = vmatprep.subr.bf16.mxu0 0
    %1285 = vmatpush2.bf16.msra.mxu0 0
    %1286 = vmatprep.subr.bf16.mxu0 0
    %1287 = vmatpush2.bf16.msra.mxu0 0
    %1288 = vmatprep.mubr.bf16.mxu0 0
    %1289 = vmatmul.mubr.bf16.gmra.mxu0 %v1254
    %v1290 = vpop.f32.mrf.mxu0
    %v1291 = vadd.f32 %v1238, %v1290
    %v1292 = vpop.f32.mrf.mxu0
    %v1293 = vpop.f32.mrf.mxu0
    %v1294 = vadd.f32 %v1238, %v1293
    %v1295 = vpop.f32.mrf.mxu0
    %1296 = vdwg.mxu0
    %v1297 = vmax.f32 %v1291, 0.0
    %v1298 = vmax.f32 %v1294, 0.0
    %v1299 = vld [vmem:[#allocation3] sm:$0xff]
    %v1300 = vld [vmem:[#allocation3 + $0x8] sm:$0xff]
    %v1301 = vpack.c.bf16 %v1298, %v1297
    %v1302 = vld [vmem:[%s9] sm:$0xf]
    %v1303 = vld [vmem:[%s9 + $0x4] sm:$0xf]
    %v1304 = vld [vmem:[%s9 + $0x8] sm:$0xf]
    %v1305 = vld [vmem:[%s9 + $0xc] sm:$0xf]
    %v1306 = vld [vmem:[%s9 + $0x10] sm:$0xf]
    %v1307 = vld [vmem:[%s9 + $0x14] sm:$0xf]
    %v1308 = vld [vmem:[%s9 + $0x18] sm:$0xf]
    %v1309 = vld [vmem:[%s9 + $0x1c] sm:$0xf]
    %v1318 = vunpack.c.l.b16 %v1302
    %v1319 = vunpack.c.l.b16 %v1303
    %v1320 = vunpack.c.l.b16 %v1304
    %v1321 = vunpack.c.l.b16 %v1305
    %v1322 = vunpack.c.l.b16 %v1306
    %v1323 = vunpack.c.l.b16 %v1307
    %v1324 = vunpack.c.l.b16 %v1308
    %v1325 = vunpack.c.l.b16 %v1309
    %v1326 = vpack.c.b16 %v1319, %v1318
    %v1327 = vpack.c.b16 %v1321, %v1320
    %v1328 = vpack.c.b16 %v1323, %v1322
    %v1329 = vpack.c.b16 %v1325, %v1324
    %vm1334 = vcmask 523264
    %v1336 = vsel %vm1334, %v1301, 0
    %1338 = vmatprep.subr.bf16.mxu0 0
    %1339 = vmatpush1.bf16.msra.mxu0 0
    %1340 = vmatprep.subr.bf16.mxu0 0
    %1341 = vmatpush1.bf16.msra.mxu0 0
    %1342 = vmatprep.subr.bf16.mxu0 0
    %1343 = vmatpush1.bf16.msra.mxu0 0
    %1344 = vmatprep.subr.bf16.mxu0 0
    %1345 = vmatpush1.bf16.msra.mxu0 0
    %1346 = vmatprep.subr.bf16.mxu0 0
    %1347 = vmatpush1.bf16.msra.mxu0 %v1329
    %1348 = vmatprep.subr.bf16.mxu0 0
    %1349 = vmatpush1.bf16.msra.mxu0 %v1328
    %1350 = vmatprep.subr.bf16.mxu0 0
    %1351 = vmatpush1.bf16.msra.mxu0 %v1327
    %1352 = vmatprep.subr.bf16.mxu0 0
    %1353 = vmatpush1.bf16.msra.mxu0 %v1326
    %1354 = vmatprep.subr.bf16.mxu0 0
    %1355 = vmatpush2.bf16.msra.mxu0 0
    %1356 = vmatprep.subr.bf16.mxu0 0
    %1357 = vmatpush2.bf16.msra.mxu0 0
    %1358 = vmatprep.subr.bf16.mxu0 0
    %1359 = vmatpush2.bf16.msra.mxu0 0
    %1360 = vmatprep.subr.bf16.mxu0 0
    %1361 = vmatpush2.bf16.msra.mxu0 0
    %1362 = vmatprep.subr.bf16.mxu0 0
    %1363 = vmatpush2.bf16.msra.mxu0 0
    %1364 = vmatprep.subr.bf16.mxu0 0
    %1365 = vmatpush2.bf16.msra.mxu0 0
    %1366 = vmatprep.subr.bf16.mxu0 0
    %1367 = vmatpush2.bf16.msra.mxu0 0
    %1368 = vmatprep.subr.bf16.mxu0 0
    %1369 = vmatpush2.bf16.msra.mxu0 0
    %1370 = vmatprep.mubr.bf16.mxu0 0
    %1371 = vmatmul.mubr.bf16.gmra.mxu0 %v1336
    %v1372 = vpop.f32.mrf.mxu0
    %v1373 = vadd.f32 0.0, %v1372
    %v1374 = vpop.f32.mrf.mxu0
    %v1375 = vpop.f32.mrf.mxu0
    %v1376 = vadd.f32 0.0, %v1375
    %v1377 = vpop.f32.mrf.mxu0
    %1378 = vdwg.mxu0
    %v1379 = vadd.f32 %v1299, %v1373
    %v1380 = vadd.f32 %v1300, %v1376
    %1381 = vst.msk [vmem:[#allocation3] sm:$0xff] %vm1252, %v1379
    %1382 = vst.msk [vmem:[#allocation3 + $0x8] sm:$0xff] %vm1252, %v1380
    // Predicated region
    $region82: #{tpu_custom_call.1} parent=1 // pred_check
      %p1383 = pneg %p118
    $region83: #{tpu_custom_call.1} parent=1 // pred_check_branch
      %1385 = sbr.rel (%p1383) target = $region85
    $region84: #{tpu_custom_call.1} parent=1 // pred_region
      %v1386 = vld [vmem:[#allocation2] sm:$0xff]
      %v1387 = vld [vmem:[#allocation2 + $0x8] sm:$0xff]
      %v1388 = vld [vmem:[#allocation3] sm:$0xff]
      %v1389 = vld [vmem:[#allocation3 + $0x8] sm:$0xff]
      %v1390 = vadd.f32 %v1386, %v1388
      %v1391 = vadd.f32 %v1387, %v1389
      %v1392 = vld [vmem:[%s10] sm:$0x1]
      %v1394 = vlaneseq
      %v1395 = vshrl.u32 %v1394, 7
      %v1396 = vsub.s32 0, %v1395
      %v1397 = vrot.slane %v1392, %v1396
      %v1399 = vadd.f32 %v1390, %v1397
      %v1400 = vadd.f32 %v1391, %v1397
      %v1401 = vsel %vm1252, %v1399, 0.0
      %1402 = vadd.xlane.f32.xlu0 %v1401
      %v1403 = vpop.xlane.xlu0 %1402
      %v1404 = vsel %vm1252, %v1400, 0.0
      %1405 = vadd.xlane.f32.xlu0 %v1404
      %v1406 = vpop.xlane.xlu0 %1405
      %v1407 = vrcp.pop 32.0
      %v1408 = vmul.f32 %v1403, %v1407
      %v1409 = vmul.f32 %v1406, %v1407
      %v1410 = vsub.f32 %v1399, %v1408
      %v1411 = vsub.f32 %v1400, %v1409
      %v1412 = vmul.f32 %v1410, %v1410
      %v1413 = vmul.f32 %v1411, %v1411
      %v1414 = vsel %vm1252, %v1412, 0.0
      %1415 = vadd.xlane.f32.xlu0 %v1414
      %v1416 = vpop.xlane.xlu0 %1415
      %v1417 = vsel %vm1252, %v1413, 0.0
      %1418 = vadd.xlane.f32.xlu0 %v1417
      %v1419 = vpop.xlane.xlu0 %1418
      %v1420 = vmul.f32 %v1416, %v1407
      %v1421 = vmul.f32 %v1419, %v1407
      %v1422 = vadd.f32 %v1420, 1e-05
      %v1423 = vadd.f32 %v1421, 1e-05
      %v1424 = vrsqrt.pop %v1422
      %v1425 = vrsqrt.pop %v1423
      %v1426 = vmul.f32 %v1410, %v1424
      %v1427 = vmul.f32 %v1411, %v1425
      %v1428 = vld [vmem:[%s11] sm:$0x1]
      %v1430 = vlaneseq
      %v1431 = vshrl.u32 %v1430, 7
      %v1432 = vsub.s32 0, %v1431
      %v1433 = vrot.slane %v1428, %v1432
      %v1435 = vmul.f32 %v1426, %v1433
      %v1436 = vmul.f32 %v1427, %v1433
      %v1437 = vld [vmem:[%s12] sm:$0x1]
      %v1439 = vlaneseq
      %v1440 = vshrl.u32 %v1439, 7
      %v1441 = vsub.s32 0, %v1440
      %v1442 = vrot.slane %v1437, %v1441
      %v1444 = vadd.f32 %v1435, %v1442
      %v1445 = vadd.f32 %v1436, %v1442
      %1446 = vst.msk [vmem:[#allocation15] sm:$0xff] %vm1252, %v1444
      %1447 = vst.msk [vmem:[#allocation15 + $0x8] sm:$0xff] %vm1252, %v1445
    $region85: #{tpu_custom_call.1} parent=1 // pred_fallthru
      _
    // Predicated region
    $region86: #{tpu_custom_call.1} parent=1 // pred_check
      _
    $region87: #{tpu_custom_call.1} parent=1 // pred_check_branch
      %1449 = sbr.rel (0) target = $region89
    $region88: #{tpu_custom_call.1} parent=1 // pred_region
      %s1451 = ssub.s32 256, 256
      %1452 = vsyncadd [#allocation6], %s1451
      %s1453 = sshll.u32 [#allocation15], 4
      %s1454 = int_to_ptr.vmem [resolvable:$true] %s1453
      %1459 = dma.vmem_to_hbm [thread:$0]  %s1454, 256, %s13, [#allocation6], 128, 128, 8
    $region89: #{tpu_custom_call.1} parent=1 // pred_fallthru
      _
    // Predicated region
    $region90: #{tpu_custom_call.1} parent=1 // pred_check
      _
    $region91: #{tpu_custom_call.1} parent=1 // pred_check_branch
      %1461 = sbr.rel (0) target = $region93
    $region92: #{tpu_custom_call.1} parent=1 // pred_region
      %1462 = dma.done [#allocation6], 256
    $region93: #{tpu_custom_call.1} parent=1 // pred_fallthru
      _
    %1463 = vsyncpa [#allocation5], 1
    %1464 = vsyncpa [#allocation8], 1
    %1465 = vsyncpa [#allocation11], 1
    %1466 = vsyncpa [#allocation14], 1
    %1467 = vsyncpa [#allocation6], 1

// kernel: tpu_custom_call.1
$region0: #{tpu_custom_call.1}
  #allocation0 [shape = 'u32[]', space=smem, size = 0x4, offset = 0x4, fixed_abs, tag = 'smem constant byte address 0x4 - core index']
  #allocation1 [shape = 'u32[144,128]{1,0:T(1,128)}', space=vmem, size = 0x12000, scoped, tag = 'internal scratch']
  #allocation2 [shape = 'f32[16,32]{1,0:T(8,128)}', space=vmem, size = 0x2000, scoped, tag = 'scratch operand']
  #allocation3 [shape = 'f32[16,32]{1,0:T(8,128)}', space=vmem, size = 0x2000, scoped, tag = 'scratch operand']
  %s0 = inlined_call_operand.vmem [shape: f32[16,32], index: 0, kind: input, shape index: {}]
  %s1 = inlined_call_operand.vmem [shape: bf16[32,96], index: 1, kind: input, shape index: {}]
  %s2 = inlined_call_operand.hbm [shape: f32[1,96], index: 2, kind: input, shape index: {}]
  %s3 = inlined_call_operand.vmem [shape: bf16[32,32], index: 3, kind: input, shape index: {}]
  %s4 = inlined_call_operand.hbm [shape: f32[1,32], index: 4, kind: input, shape index: {}]
  %s5 = inlined_call_operand.hbm [shape: f32[1,32], index: 5, kind: input, shape index: {}]
  %s6 = inlined_call_operand.hbm [shape: f32[1,32], index: 6, kind: input, shape index: {}]
  %s7 = inlined_call_operand.hbm [shape: bf16[32,64], index: 7, kind: input, shape index: {}]
  %s8 = inlined_call_operand.hbm [shape: f32[1,64], index: 8, kind: input, shape index: {}]
  %s9 = inlined_call_operand.vmem [shape: bf16[64,32], index: 9, kind: input, shape index: {}]
  %s10 = inlined_call_operand.vmem [shape: f32[1,32], index: 10, kind: input, shape index: {}]
  %s11 = inlined_call_operand.vmem [shape: f32[1,32], index: 11, kind: input, shape index: {}]
  %s12 = inlined_call_operand.vmem [shape: f32[1,32], index: 12, kind: input, shape index: {}]
  %s13 = inlined_call_operand.hbm [shape: f32[16,32], index: 13, kind: output, shape index: {}]
  %s14 = sld [smem:[#allocation0]]
  $region94: #{tpu_custom_call.1} parent=0
    _
  %s16 = ssub.s32 1, %s14
  %s17 = scalar_select 0, %s16, %s14
  $region1: #{tpu_custom_call.1} parent=0
    #allocation4 [shape = 'u8[512]{0}', space=vmem, size = 0x400, scoped, tag = 'input window, operand 2, single buffered']
    #allocation5 [shape = 's32[1]{0}', space=sflag, size = 0x4, scoped, tag = 'scoped memory for tpu_custom_call.1']
    #allocation6 [shape = 's32[1]{0}', space=sflag, size = 0x4, scoped, tag = 'scoped memory for tpu_custom_call.1']
    #allocation7 [shape = 'u8[512]{0}', space=vmem, size = 0x400, scoped, tag = 'input window, operand 4, single buffered']
    #allocation8 [shape = 's32[1]{0}', space=sflag, size = 0x4, scoped, tag = 'scoped memory for tpu_custom_call.1']
    #allocation9 [shape = 'u8[512]{0}', space=vmem, size = 0x400, scoped, tag = 'input window, operand 5, single buffered']
    #allocation10 [shape = 'u8[512]{0}', space=vmem, size = 0x400, scoped, tag = 'input window, operand 6, single buffered']
    #allocation11 [shape = 's32[1]{0}', space=sflag, size = 0x4, scoped, tag = 'scoped memory for tpu_custom_call.1']
    #allocation12 [shape = 'u8[8192]{0}', space=vmem, size = 0x2000, scoped, tag = 'input window, operand 7, single buffered']
    #allocation13 [shape = 'u8[512]{0}', space=vmem, size = 0x400, scoped, tag = 'input window, operand 8, single buffered']
    #allocation14 [shape = 's32[1]{0}', space=sflag, size = 0x4, scoped, tag = 'scoped memory for tpu_custom_call.1']
    #allocation15 [shape = 'u8[8192]{0}', space=vmem, size = 0x2000, scoped, tag = 'output window, operand 0, single buffered']
    %18 = vsyncpa [#allocation5], 0
    %19 = vsyncpa [#allocation8], 0
    %20 = vsyncpa [#allocation11], 0
    %21 = vsyncpa [#allocation14], 0
    %22 = vsyncpa [#allocation6], 0
    // Predicated region
    $region2: #{tpu_custom_call.1} parent=1 // pred_check
      _
    $region3: #{tpu_custom_call.1} parent=1 // pred_check_branch
      %24 = sbr.rel (0) target = $region5
    $region4: #{tpu_custom_call.1} parent=1 // pred_region
      _
    $region5: #{tpu_custom_call.1} parent=1 // pred_fallthru
      _
    // Predicated region
    $region6: #{tpu_custom_call.1} parent=1 // pred_check
      _
    $region7: #{tpu_custom_call.1} parent=1 // pred_check_branch
      %26 = sbr.rel (0) target = $region9
    $region8: #{tpu_custom_call.1} parent=1 // pred_region
      _
    $region9: #{tpu_custom_call.1} parent=1 // pred_fallthru
      _
    // Predicated region
    $region10: #{tpu_custom_call.1} parent=1 // pred_check
      _
    $region11: #{tpu_custom_call.1} parent=1 // pred_check_branch
      %28 = sbr.rel (0) target = $region13
    $region12: #{tpu_custom_call.1} parent=1 // pred_region
      %s30 = ssub.s32 16, 16
      %31 = vsyncadd [#allocation5], %s30
      %s33 = sshll.u32 [#allocation4], 4
      %s34 = int_to_ptr.vmem [resolvable:$true] %s33
      %36 = dma.hbm_to_vmem [thread:$0]  %s2, 16, %s34, [#allocation5]
    $region13: #{tpu_custom_call.1} parent=1 // pred_fallthru
      _
    // Predicated region
    $region14: #{tpu_custom_call.1} parent=1 // pred_check
      _
    $region15: #{tpu_custom_call.1} parent=1 // pred_check_branch
      %38 = sbr.rel (0) target = $region17
    $region16: #{tpu_custom_call.1} parent=1 // pred_region
      _
    $region17: #{tpu_custom_call.1} parent=1 // pred_fallthru
      _
    // Predicated region
    $region18: #{tpu_custom_call.1} parent=1 // pred_check
      _
    $region19: #{tpu_custom_call.1} parent=1 // pred_check_branch
      %40 = sbr.rel (0) target = $region21
    $region20: #{tpu_custom_call.1} parent=1 // pred_region
      %s42 = ssub.s32 16, 16
      %43 = vsyncadd [#allocation8], %s42
      %s45 = sshll.u32 [#allocation7], 4
      %s46 = int_to_ptr.vmem [resolvable:$true] %s45
      %48 = dma.hbm_to_vmem [thread:$0]  %s4, 16, %s46, [#allocation8]
    $region21: #{tpu_custom_call.1} parent=1 // pred_fallthru
      _
    // Predicated region
    $region22: #{tpu_custom_call.1} parent=1 // pred_check
      _
    $region23: #{tpu_custom_call.1} parent=1 // pred_check_branch
      %50 = sbr.rel (0) target = $region25
    $region24: #{tpu_custom_call.1} parent=1 // pred_region
      %s52 = ssub.s32 16, 16
      %53 = vsyncadd [#allocation8], %s52
      %s55 = sshll.u32 [#allocation9], 4
      %s56 = int_to_ptr.vmem [resolvable:$true] %s55
      %58 = dma.hbm_to_vmem [thread:$0]  %s5, 16, %s56, [#allocation8]
    $region25: #{tpu_custom_call.1} parent=1 // pred_fallthru
      _
    // Predicated region
    $region26: #{tpu_custom_call.1} parent=1 // pred_check
      _
    $region27: #{tpu_custom_call.1} parent=1 // pred_check_branch
      %60 = sbr.rel (0) target = $region29
    $region28: #{tpu_custom_call.1} parent=1 // pred_region
      %s62 = ssub.s32 16, 16
      %63 = vsyncadd [#allocation11], %s62
      %s65 = sshll.u32 [#allocation10], 4
      %s66 = int_to_ptr.vmem [resolvable:$true] %s65
      %68 = dma.hbm_to_vmem [thread:$0]  %s6, 16, %s66, [#allocation11]
    $region29: #{tpu_custom_call.1} parent=1 // pred_fallthru
      _
    // Predicated region
    $region30: #{tpu_custom_call.1} parent=1 // pred_check
      _
    $region31: #{tpu_custom_call.1} parent=1 // pred_check_branch
      %70 = sbr.rel (0) target = $region33
    $region32: #{tpu_custom_call.1} parent=1 // pred_region
      %s72 = ssub.s32 256, 256
      %73 = vsyncadd [#allocation11], %s72
      %s74 = sshll.u32 [#allocation12], 4
      %s75 = int_to_ptr.vmem [resolvable:$true] %s74
      %80 = dma.hbm_to_vmem [thread:$0]  %s7, 256, %s75, [#allocation11], 64, 64, 4
    $region33: #{tpu_custom_call.1} parent=1 // pred_fallthru
      _
    // Predicated region
    $region34: #{tpu_custom_call.1} parent=1 // pred_check
      _
    $region35: #{tpu_custom_call.1} parent=1 // pred_check_branch
      %82 = sbr.rel (0) target = $region37
    $region36: #{tpu_custom_call.1} parent=1 // pred_region
      %s84 = ssub.s32 16, 16
      %85 = vsyncadd [#allocation14], %s84
      %s87 = sshll.u32 [#allocation13], 4
      %s88 = int_to_ptr.vmem [resolvable:$true] %s87
      %90 = dma.hbm_to_vmem [thread:$0]  %s8, 16, %s88, [#allocation14]
    $region37: #{tpu_custom_call.1} parent=1 // pred_fallthru
      _
    // Predicated region
    $region38: #{tpu_custom_call.1} parent=1 // pred_check
      _
    $region39: #{tpu_custom_call.1} parent=1 // pred_check_branch
      %92 = sbr.rel (0) target = $region41
    $region40: #{tpu_custom_call.1} parent=1 // pred_region
      _
    $region41: #{tpu_custom_call.1} parent=1 // pred_fallthru
      _
    // Predicated region
    $region42: #{tpu_custom_call.1} parent=1 // pred_check
      _
    $region43: #{tpu_custom_call.1} parent=1 // pred_check_branch
      %94 = sbr.rel (0) target = $region45
    $region44: #{tpu_custom_call.1} parent=1 // pred_region
      _
    $region45: #{tpu_custom_call.1} parent=1 // pred_fallthru
      _
    // Predicated region
    $region46: #{tpu_custom_call.1} parent=1 // pred_check
      _
    $region47: #{tpu_custom_call.1} parent=1 // pred_check_branch
      %96 = sbr.rel (0) target = $region49
    $region48: #{tpu_custom_call.1} parent=1 // pred_region
      _
    $region49: #{tpu_custom_call.1} parent=1 // pred_fallthru
      _
    // Predicated region
    $region50: #{tpu_custom_call.1} parent=1 // pred_check
      _
    $region51: #{tpu_custom_call.1} parent=1 // pred_check_branch
      %98 = sbr.rel (0) target = $region53
    $region52: #{tpu_custom_call.1} parent=1 // pred_region
      _
    $region53: #{tpu_custom_call.1} parent=1 // pred_fallthru
      _
    // Predicated region
    $region54: #{tpu_custom_call.1} parent=1 // pred_check
      _
    $region55: #{tpu_custom_call.1} parent=1 // pred_check_branch
      %100 = sbr.rel (0) target = $region57
    $region56: #{tpu_custom_call.1} parent=1 // pred_region
      %101 = dma.done [#allocation5], 16
    $region57: #{tpu_custom_call.1} parent=1 // pred_fallthru
      _
    // Predicated region
    $region58: #{tpu_custom_call.1} parent=1 // pred_check
      _
    $region59: #{tpu_custom_call.1} parent=1 // pred_check_branch
      %103 = sbr.rel (0) target = $region61
    $region60: #{tpu_custom_call.1} parent=1 // pred_region
      %104 = dma.done [#allocation8], 16
    $region61: #{tpu_custom_call.1} parent=1 // pred_fallthru
      _
    // Predicated region
    $region62: #{tpu_custom_call.1} parent=1 // pred_check
      _
    $region63: #{tpu_custom_call.1} parent=1 // pred_check_branch
      %106 = sbr.rel (0) target = $region65
    $region64: #{tpu_custom_call.1} parent=1 // pred_region
      %107 = dma.done [#allocation8], 16
    $region65: #{tpu_custom_call.1} parent=1 // pred_fallthru
      _
    // Predicated region
    $region66: #{tpu_custom_call.1} parent=1 // pred_check
      _
    $region67: #{tpu_custom_call.1} parent=1 // pred_check_branch
      %109 = sbr.rel (0) target = $region69
    $region68: #{tpu_custom_call.1} parent=1 // pred_region
      %110 = dma.done [#allocation11], 16
    $region69: #{tpu_custom_call.1} parent=1 // pred_fallthru
      _
    // Predicated region
    $region70: #{tpu_custom_call.1} parent=1 // pred_check
      _
    $region71: #{tpu_custom_call.1} parent=1 // pred_check_branch
      %112 = sbr.rel (0) target = $region73
    $region72: #{tpu_custom_call.1} parent=1 // pred_region
      %113 = dma.done [#allocation11], 256
    $region73: #{tpu_custom_call.1} parent=1 // pred_fallthru
      _
    // Predicated region
    $region74: #{tpu_custom_call.1} parent=1 // pred_check
      _
    $region75: #{tpu_custom_call.1} parent=1 // pred_check_branch
      %115 = sbr.rel (0) target = $region77
    $region76: #{tpu_custom_call.1} parent=1 // pred_region
      %116 = dma.done [#allocation14], 16
    $region77: #{tpu_custom_call.1} parent=1 // pred_fallthru
      _
    %p118 = scmp.eq.s32.totalorder 0, 0
    // Predicated region
    $region78: #{tpu_custom_call.1} parent=1 // pred_check
      %p119 = pneg %p118
    $region79: #{tpu_custom_call.1} parent=1 // pred_check_branch
      %121 = sbr.rel (%p119) target = $region81
    $region80: #{tpu_custom_call.1} parent=1 // pred_region
      %v122 = vld [vmem:[%s0] sm:$0xff]
      %v123 = vld [vmem:[%s0 + $0x8] sm:$0xff]
      %v124 = vpack.c.bf16 %v123, %v122
      %v125 = vld [vmem:[%s1] sm:$0xf]
      %v126 = vld [vmem:[%s1 + $0x4] sm:$0xf]
      %v127 = vld [vmem:[%s1 + $0x8] sm:$0xf]
      %v128 = vld [vmem:[%s1 + $0xc] sm:$0xf]
      %v129 = vld [vmem:[#allocation4] sm:$0x1]
      %v131 = vlaneseq
      %v132 = vshrl.u32 %v131, 7
      %v133 = vsub.s32 0, %v132
      %v134 = vrot.slane %v129, %v133
      %v140 = vunpack.c.l.b16 %v125
      %v141 = vunpack.c.l.b16 %v126
      %v142 = vunpack.c.l.b16 %v127
      %v143 = vunpack.c.l.b16 %v128
      %v144 = vpack.c.b16 %v141, %v140
      %v145 = vpack.c.b16 %v143, %v142
      %vm148 = vcmask 261120
      %v150 = vsel %vm148, %v124, 0
      %152 = vmatprep.subr.bf16.mxu0 0
      %153 = vmatpush1.bf16.msra.mxu0 0
      %154 = vmatprep.subr.bf16.mxu0 0
      %155 = vmatpush1.bf16.msra.mxu0 0
      %156 = vmatprep.subr.bf16.mxu0 0
      %157 = vmatpush1.bf16.msra.mxu0 0
      %158 = vmatprep.subr.bf16.mxu0 0
      %159 = vmatpush1.bf16.msra.mxu0 0
      %160 = vmatprep.subr.bf16.mxu0 0
      %161 = vmatpush1.bf16.msra.mxu0 0
      %162 = vmatprep.subr.bf16.mxu0 0
      %163 = vmatpush1.bf16.msra.mxu0 0
      %164 = vmatprep.subr.bf16.mxu0 0
      %165 = vmatpush1.bf16.msra.mxu0 %v145
      %166 = vmatprep.subr.bf16.mxu0 0
      %167 = vmatpush1.bf16.msra.mxu0 %v144
      %168 = vmatprep.subr.bf16.mxu0 0
      %169 = vmatpush2.bf16.msra.mxu0 0
      %170 = vmatprep.subr.bf16.mxu0 0
      %171 = vmatpush2.bf16.msra.mxu0 0
      %172 = vmatprep.subr.bf16.mxu0 0
      %173 = vmatpush2.bf16.msra.mxu0 0
      %174 = vmatprep.subr.bf16.mxu0 0
      %175 = vmatpush2.bf16.msra.mxu0 0
      %176 = vmatprep.subr.bf16.mxu0 0
      %177 = vmatpush2.bf16.msra.mxu0 0
      %178 = vmatprep.subr.bf16.mxu0 0
      %179 = vmatpush2.bf16.msra.mxu0 0
      %180 = vmatprep.subr.bf16.mxu0 0
      %181 = vmatpush2.bf16.msra.mxu0 0
      %182 = vmatprep.subr.bf16.mxu0 0
      %183 = vmatpush2.bf16.msra.mxu0 0
      %184 = vmatprep.mubr.bf16.mxu0 0
      %185 = vmatmul.mubr.bf16.gmra.mxu0 %v150
      %v186 = vpop.f32.mrf.mxu0
      %v187 = vadd.f32 %v134, %v186
      %v188 = vpop.f32.mrf.mxu0
      %v189 = vpop.f32.mrf.mxu0
      %v190 = vadd.f32 %v134, %v189
      %v191 = vpop.f32.mrf.mxu0
      %192 = vdwg.mxu0
      %v193 = vpack.c.bf16 %v187, %v187
      %195 = vrot.lane.b32.xlu0 %v193, 104
      %v196 = vpop.permute.xlu0 %195
      %197 = vrot.lane.b32.xlu0 %v193, 80
      %v198 = vpop.permute.xlu0 %197
      %199 = vrot.lane.b32.xlu0 %v193, 56
      %v200 = vpop.permute.xlu0 %199
      %201 = vrot.lane.b32.xlu0 %v193, 120
      %v202 = vpop.permute.xlu0 %201
      %vm203 = vcmask 64512
      %v205 = vsel %vm203, %v193, 0
      %v208 = vsel %vm203, %v202, 0
      %210 = vmatprep.subr.bf16.mxu0 0
      %211 = vmatpush1.bf16.xpose.msra.mxu0 0
      %212 = vmatprep.subr.bf16.mxu0 0
      %213 = vmatpush1.bf16.xpose.msra.mxu0 0
      %214 = vmatprep.subr.bf16.mxu0 0
      %215 = vmatpush1.bf16.xpose.msra.mxu0 0
      %216 = vmatprep.subr.bf16.mxu0 0
      %217 = vmatpush1.bf16.xpose.msra.mxu0 0
      %218 = vmatprep.subr.bf16.mxu0 0
      %219 = vmatpush1.bf16.xpose.msra.mxu0 0
      %220 = vmatprep.subr.bf16.mxu0 0
      %221 = vmatpush1.bf16.xpose.msra.mxu0 0
      %222 = vmatprep.subr.bf16.mxu0 0
      %223 = vmatpush1.bf16.xpose.msra.mxu0 0
      %224 = vmatprep.subr.bf16.mxu0 0
      %225 = vmatpush1.bf16.xpose.msra.mxu0 %v208
      %226 = vmatprep.subr.bf16.mxu0 0
      %227 = vmatpush2.bf16.xpose.msra.mxu0 0
      %228 = vmatprep.subr.bf16.mxu0 0
      %229 = vmatpush2.bf16.xpose.msra.mxu0 0
      %230 = vmatprep.subr.bf16.mxu0 0
      %231 = vmatpush2.bf16.xpose.msra.mxu0 0
      %232 = vmatprep.subr.bf16.mxu0 0
      %233 = vmatpush2.bf16.xpose.msra.mxu0 0
      %234 = vmatprep.subr.bf16.mxu0 0
      %235 = vmatpush2.bf16.xpose.msra.mxu0 0
      %236 = vmatprep.subr.bf16.mxu0 0
      %237 = vmatpush2.bf16.xpose.msra.mxu0 0
      %238 = vmatprep.subr.bf16.mxu0 0
      %239 = vmatpush2.bf16.xpose.msra.mxu0 0
      %240 = vmatprep.subr.bf16.mxu0 0
      %241 = vmatpush2.bf16.xpose.msra.mxu0 0
      %242 = vmatprep.mubr.bf16.mxu0 0
      %243 = vmatmul.mubr.bf16.gmra.mxu0 %v205
      %v244 = vpop.f32.mrf.mxu0
      %v245 = vadd.f32 0.0, %v244
      %v246 = vpop.f32.mrf.mxu0
      %v247 = vpop.f32.mrf.mxu0
      %v248 = vpop.f32.mrf.mxu0
      %249 = vdwg.mxu0
      %250 = vrot.lane.b32.xlu0 %v196, 120
      %v251 = vpop.permute.xlu0 %250
      %v253 = vsel %vm203, %v196, 0
      %v256 = vsel %vm203, %v251, 0
      %258 = vmatprep.subr.bf16.mxu0 0
      %259 = vmatpush1.bf16.xpose.msra.mxu0 0
      %260 = vmatprep.subr.bf16.mxu0 0
      %261 = vmatpush1.bf16.xpose.msra.mxu0 0
      %262 = vmatprep.subr.bf16.mxu0 0
      %263 = vmatpush1.bf16.xpose.msra.mxu0 0
      %264 = vmatprep.subr.bf16.mxu0 0
      %265 = vmatpush1.bf16.xpose.msra.mxu0 0
      %266 = vmatprep.subr.bf16.mxu0 0
      %267 = vmatpush1.bf16.xpose.msra.mxu0 0
      %268 = vmatprep.subr.bf16.mxu0 0
      %269 = vmatpush1.bf16.xpose.msra.mxu0 0
      %270 = vmatprep.subr.bf16.mxu0 0
      %271 = vmatpush1.bf16.xpose.msra.mxu0 0
      %272 = vmatprep.subr.bf16.mxu0 0
      %273 = vmatpush1.bf16.xpose.msra.mxu0 %v256
      %274 = vmatprep.subr.bf16.mxu0 0
      %275 = vmatpush2.bf16.xpose.msra.mxu0 0
      %276 = vmatprep.subr.bf16.mxu0 0
      %277 = vmatpush2.bf16.xpose.msra.mxu0 0
      %278 = vmatprep.subr.bf16.mxu0 0
      %279 = vmatpush2.bf16.xpose.msra.mxu0 0
      %280 = vmatprep.subr.bf16.mxu0 0
      %281 = vmatpush2.bf16.xpose.msra.mxu0 0
      %282 = vmatprep.subr.bf16.mxu0 0
      %283 = vmatpush2.bf16.xpose.msra.mxu0 0
      %284 = vmatprep.subr.bf16.mxu0 0
      %285 = vmatpush2.bf16.xpose.msra.mxu0 0
      %286 = vmatprep.subr.bf16.mxu0 0
      %287 = vmatpush2.bf16.xpose.msra.mxu0 0
      %288 = vmatprep.subr.bf16.mxu0 0
      %289 = vmatpush2.bf16.xpose.msra.mxu0 0
      %290 = vmatprep.mubr.bf16.mxu0 0
      %291 = vmatmul.mubr.bf16.gmra.mxu0 %v253
      %v292 = vpop.f32.mrf.mxu0
      %v293 = vadd.f32 0.0, %v292
      %v294 = vpop.f32.mrf.mxu0
      %v295 = vpop.f32.mrf.mxu0
      %v296 = vpop.f32.mrf.mxu0
      %297 = vdwg.mxu0
      %298 = vrot.lane.b32.xlu0 %v198, 120
      %v299 = vpop.permute.xlu0 %298
      %v301 = vsel %vm203, %v198, 0
      %v304 = vsel %vm203, %v299, 0
      %306 = vmatprep.subr.bf16.mxu0 0
      %307 = vmatpush1.bf16.xpose.msra.mxu0 0
      %308 = vmatprep.subr.bf16.mxu0 0
      %309 = vmatpush1.bf16.xpose.msra.mxu0 0
      %310 = vmatprep.subr.bf16.mxu0 0
      %311 = vmatpush1.bf16.xpose.msra.mxu0 0
      %312 = vmatprep.subr.bf16.mxu0 0
      %313 = vmatpush1.bf16.xpose.msra.mxu0 0
      %314 = vmatprep.subr.bf16.mxu0 0
      %315 = vmatpush1.bf16.xpose.msra.mxu0 0
      %316 = vmatprep.subr.bf16.mxu0 0
      %317 = vmatpush1.bf16.xpose.msra.mxu0 0
      %318 = vmatprep.subr.bf16.mxu0 0
      %319 = vmatpush1.bf16.xpose.msra.mxu0 0
      %320 = vmatprep.subr.bf16.mxu0 0
      %321 = vmatpush1.bf16.xpose.msra.mxu0 %v304
      %322 = vmatprep.subr.bf16.mxu0 0
      %323 = vmatpush2.bf16.xpose.msra.mxu0 0
      %324 = vmatprep.subr.bf16.mxu0 0
      %325 = vmatpush2.bf16.xpose.msra.mxu0 0
      %326 = vmatprep.subr.bf16.mxu0 0
      %327 = vmatpush2.bf16.xpose.msra.mxu0 0
      %328 = vmatprep.subr.bf16.mxu0 0
      %329 = vmatpush2.bf16.xpose.msra.mxu0 0
      %330 = vmatprep.subr.bf16.mxu0 0
      %331 = vmatpush2.bf16.xpose.msra.mxu0 0
      %332 = vmatprep.subr.bf16.mxu0 0
      %333 = vmatpush2.bf16.xpose.msra.mxu0 0
      %334 = vmatprep.subr.bf16.mxu0 0
      %335 = vmatpush2.bf16.xpose.msra.mxu0 0
      %336 = vmatprep.subr.bf16.mxu0 0
      %337 = vmatpush2.bf16.xpose.msra.mxu0 0
      %338 = vmatprep.mubr.bf16.mxu0 0
      %339 = vmatmul.mubr.bf16.gmra.mxu0 %v301
      %v340 = vpop.f32.mrf.mxu0
      %v341 = vadd.f32 0.0, %v340
      %v342 = vpop.f32.mrf.mxu0
      %v343 = vpop.f32.mrf.mxu0
      %v344 = vpop.f32.mrf.mxu0
      %345 = vdwg.mxu0
      %346 = vrot.lane.b32.xlu0 %v200, 120
      %v347 = vpop.permute.xlu0 %346
      %v349 = vsel %vm203, %v200, 0
      %v352 = vsel %vm203, %v347, 0
      %354 = vmatprep.subr.bf16.mxu0 0
      %355 = vmatpush1.bf16.xpose.msra.mxu0 0
      %356 = vmatprep.subr.bf16.mxu0 0
      %357 = vmatpush1.bf16.xpose.msra.mxu0 0
      %358 = vmatprep.subr.bf16.mxu0 0
      %359 = vmatpush1.bf16.xpose.msra.mxu0 0
      %360 = vmatprep.subr.bf16.mxu0 0
      %361 = vmatpush1.bf16.xpose.msra.mxu0 0
      %362 = vmatprep.subr.bf16.mxu0 0
      %363 = vmatpush1.bf16.xpose.msra.mxu0 0
      %364 = vmatprep.subr.bf16.mxu0 0
      %365 = vmatpush1.bf16.xpose.msra.mxu0 0
      %366 = vmatprep.subr.bf16.mxu0 0
      %367 = vmatpush1.bf16.xpose.msra.mxu0 0
      %368 = vmatprep.subr.bf16.mxu0 0
      %369 = vmatpush1.bf16.xpose.msra.mxu0 %v352
      %370 = vmatprep.subr.bf16.mxu0 0
      %371 = vmatpush2.bf16.xpose.msra.mxu0 0
      %372 = vmatprep.subr.bf16.mxu0 0
      %373 = vmatpush2.bf16.xpose.msra.mxu0 0
      %374 = vmatprep.subr.bf16.mxu0 0
      %375 = vmatpush2.bf16.xpose.msra.mxu0 0
      %376 = vmatprep.subr.bf16.mxu0 0
      %377 = vmatpush2.bf16.xpose.msra.mxu0 0
      %378 = vmatprep.subr.bf16.mxu0 0
      %379 = vmatpush2.bf16.xpose.msra.mxu0 0
      %380 = vmatprep.subr.bf16.mxu0 0
      %381 = vmatpush2.bf16.xpose.msra.mxu0 0
      %382 = vmatprep.subr.bf16.mxu0 0
      %383 = vmatpush2.bf16.xpose.msra.mxu0 0
      %384 = vmatprep.subr.bf16.mxu0 0
      %385 = vmatpush2.bf16.xpose.msra.mxu0 0
      %386 = vmatprep.mubr.bf16.mxu0 0
      %387 = vmatmul.mubr.bf16.gmra.mxu0 %v349
      %v388 = vpop.f32.mrf.mxu0
      %v389 = vadd.f32 0.0, %v388
      %v390 = vpop.f32.mrf.mxu0
      %v391 = vpop.f32.mrf.mxu0
      %v392 = vpop.f32.mrf.mxu0
      %393 = vdwg.mxu0
      %v394 = vsel %vm203, %v245, -inf
      %395 = vmax.xlane.f32.xlu0 %v394
      %v396 = vpop.xlane.xlu0 %395
      %v397 = vsel %vm203, %v293, -inf
      %398 = vmax.xlane.f32.xlu0 %v397
      %v399 = vpop.xlane.xlu0 %398
      %v400 = vsel %vm203, %v341, -inf
      %401 = vmax.xlane.f32.xlu0 %v400
      %v402 = vpop.xlane.xlu0 %401
      %v403 = vsel %vm203, %v389, -inf
      %404 = vmax.xlane.f32.xlu0 %v403
      %v405 = vpop.xlane.xlu0 %404
      %v406 = vsub.f32 %v245, %v396
      %v407 = vsub.f32 %v293, %v399
      %v408 = vsub.f32 %v341, %v402
      %v409 = vsub.f32 %v389, %v405
      %v410 = vmul.f32 %v406, 1.442695
      %v411 = vpow.pop %v410
      %v412 = vmul.f32 %v407, 1.442695
      %v413 = vpow.pop %v412
      %v414 = vmul.f32 %v408, 1.442695
      %v415 = vpow.pop %v414
      %v416 = vmul.f32 %v409, 1.442695
      %v417 = vpow.pop %v416
      %v418 = vsel %vm203, %v411, 0.0
      %419 = vadd.xlane.f32.xlu0 %v418
      %v420 = vpop.xlane.xlu0 %419
      %v421 = vsel %vm203, %v413, 0.0
      %422 = vadd.xlane.f32.xlu0 %v421
      %v423 = vpop.xlane.xlu0 %422
      %v424 = vsel %vm203, %v415, 0.0
      %425 = vadd.xlane.f32.xlu0 %v424
      %v426 = vpop.xlane.xlu0 %425
      %v427 = vsel %vm203, %v417, 0.0
      %428 = vadd.xlane.f32.xlu0 %v427
      %v429 = vpop.xlane.xlu0 %428
      %v430 = vpack.c.bf16 %v411, %v411
      %v431 = vpack.c.bf16 %v413, %v413
      %v432 = vpack.c.bf16 %v415, %v415
      %v433 = vpack.c.bf16 %v417, %v417
      %434 = vrot.lane.b32.xlu0 %v193, 112
      %v435 = vpop.permute.xlu0 %434
      %v437 = vsel %vm203, %v430, 0
      %vm439 = vcmask 1043456
      %v441 = vsel %vm439, %v435, 0
      %443 = vmatprep.subr.bf16.mxu0 0
      %444 = vmatpush1.bf16.msra.mxu0 0
      %445 = vmatprep.subr.bf16.mxu0 0
      %446 = vmatpush1.bf16.msra.mxu0 0
      %447 = vmatprep.subr.bf16.mxu0 0
      %448 = vmatpush1.bf16.msra.mxu0 0
      %449 = vmatprep.subr.bf16.mxu0 0
      %450 = vmatpush1.bf16.msra.mxu0 0
      %451 = vmatprep.subr.bf16.mxu0 0
      %452 = vmatpush1.bf16.msra.mxu0 0
      %453 = vmatprep.subr.bf16.mxu0 0
      %454 = vmatpush1.bf16.msra.mxu0 0
      %455 = vmatprep.subr.bf16.mxu0 0
      %456 = vmatpush1.bf16.msra.mxu0 0
      %457 = vmatprep.subr.bf16.mxu0 0
      %458 = vmatpush1.bf16.msra.mxu0 %v441
      %459 = vmatprep.subr.bf16.mxu0 0
      %460 = vmatpush2.bf16.msra.mxu0 0
      %461 = vmatprep.subr.bf16.mxu0 0
      %462 = vmatpush2.bf16.msra.mxu0 0
      %463 = vmatprep.subr.bf16.mxu0 0
      %464 = vmatpush2.bf16.msra.mxu0 0
      %465 = vmatprep.subr.bf16.mxu0 0
      %466 = vmatpush2.bf16.msra.mxu0 0
      %467 = vmatprep.subr.bf16.mxu0 0
      %468 = vmatpush2.bf16.msra.mxu0 0
      %469 = vmatprep.subr.bf16.mxu0 0
      %470 = vmatpush2.bf16.msra.mxu0 0
      %471 = vmatprep.subr.bf16.mxu0 0
      %472 = vmatpush2.bf16.msra.mxu0 0
      %473 = vmatprep.subr.bf16.mxu0 0
      %474 = vmatpush2.bf16.msra.mxu0 0
      %475 = vmatprep.mubr.bf16.mxu0 0
      %476 = vmatmul.mubr.bf16.gmra.mxu0 %v437
      %v477 = vpop.f32.mrf.mxu0
      %v478 = vadd.f32 0.0, %v477
      %v479 = vpop.f32.mrf.mxu0
      %v480 = vpop.f32.mrf.mxu0
      %v481 = vpop.f32.mrf.mxu0
      %482 = vdwg.mxu0
      %483 = vrot.lane.b32.xlu0 %v196, 112
      %v484 = vpop.permute.xlu0 %483
      %v486 = vsel %vm203, %v431, 0
      %v489 = vsel %vm439, %v484, 0
      %491 = vmatprep.subr.bf16.mxu0 0
      %492 = vmatpush1.bf16.msra.mxu0 0
      %493 = vmatprep.subr.bf16.mxu0 0
      %494 = vmatpush1.bf16.msra.mxu0 0
      %495 = vmatprep.subr.bf16.mxu0 0
      %496 = vmatpush1.bf16.msra.mxu0 0
      %497 = vmatprep.subr.bf16.mxu0 0
      %498 = vmatpush1.bf16.msra.mxu0 0
      %499 = vmatprep.subr.bf16.mxu0 0
      %500 = vmatpush1.bf16.msra.mxu0 0
      %501 = vmatprep.subr.bf16.mxu0 0
      %502 = vmatpush1.bf16.msra.mxu0 0
      %503 = vmatprep.subr.bf16.mxu0 0
      %504 = vmatpush1.bf16.msra.mxu0 0
      %505 = vmatprep.subr.bf16.mxu0 0
      %506 = vmatpush1.bf16.msra.mxu0 %v489
      %507 = vmatprep.subr.bf16.mxu0 0
      %508 = vmatpush2.bf16.msra.mxu0 0
      %509 = vmatprep.subr.bf16.mxu0 0
      %510 = vmatpush2.bf16.msra.mxu0 0
      %511 = vmatprep.subr.bf16.mxu0 0
      %512 = vmatpush2.bf16.msra.mxu0 0
      %513 = vmatprep.subr.bf16.mxu0 0
      %514 = vmatpush2.bf16.msra.mxu0 0
      %515 = vmatprep.subr.bf16.mxu0 0
      %516 = vmatpush2.bf16.msra.mxu0 0
      %517 = vmatprep.subr.bf16.mxu0 0
      %518 = vmatpush2.bf16.msra.mxu0 0
      %519 = vmatprep.subr.bf16.mxu0 0
      %520 = vmatpush2.bf16.msra.mxu0 0
      %521 = vmatprep.subr.bf16.mxu0 0
      %522 = vmatpush2.bf16.msra.mxu0 0
      %523 = vmatprep.mubr.bf16.mxu0 0
      %524 = vmatmul.mubr.bf16.gmra.mxu0 %v486
      %v525 = vpop.f32.mrf.mxu0
      %v526 = vadd.f32 0.0, %v525
      %v527 = vpop.f32.mrf.mxu0
      %v528 = vpop.f32.mrf.mxu0
      %v529 = vpop.f32.mrf.mxu0
      %530 = vdwg.mxu0
      %531 = vrot.lane.b32.xlu0 %v198, 112
      %v532 = vpop.permute.xlu0 %531
      %v534 = vsel %vm203, %v432, 0
      %v537 = vsel %vm439, %v532, 0
      %539 = vmatprep.subr.bf16.mxu0 0
      %540 = vmatpush1.bf16.msra.mxu0 0
      %541 = vmatprep.subr.bf16.mxu0 0
      %542 = vmatpush1.bf16.msra.mxu0 0
      %543 = vmatprep.subr.bf16.mxu0 0
      %544 = vmatpush1.bf16.msra.mxu0 0
      %545 = vmatprep.subr.bf16.mxu0 0
      %546 = vmatpush1.bf16.msra.mxu0 0
      %547 = vmatprep.subr.bf16.mxu0 0
      %548 = vmatpush1.bf16.msra.mxu0 0
      %549 = vmatprep.subr.bf16.mxu0 0
      %550 = vmatpush1.bf16.msra.mxu0 0
      %551 = vmatprep.subr.bf16.mxu0 0
      %552 = vmatpush1.bf16.msra.mxu0 0
      %553 = vmatprep.subr.bf16.mxu0 0
      %554 = vmatpush1.bf16.msra.mxu0 %v537
      %555 = vmatprep.subr.bf16.mxu0 0
      %556 = vmatpush2.bf16.msra.mxu0 0
      %557 = vmatprep.subr.bf16.mxu0 0
      %558 = vmatpush2.bf16.msra.mxu0 0
      %559 = vmatprep.subr.bf16.mxu0 0
      %560 = vmatpush2.bf16.msra.mxu0 0
      %561 = vmatprep.subr.bf16.mxu0 0
      %562 = vmatpush2.bf16.msra.mxu0 0
      %563 = vmatprep.subr.bf16.mxu0 0
      %564 = vmatpush2.bf16.msra.mxu0 0
      %565 = vmatprep.subr.bf16.mxu0 0
      %566 = vmatpush2.bf16.msra.mxu0 0
      %567 = vmatprep.subr.bf16.mxu0 0
      %568 = vmatpush2.bf16.msra.mxu0 0
      %569 = vmatprep.subr.bf16.mxu0 0
      %570 = vmatpush2.bf16.msra.mxu0 0
      %571 = vmatprep.mubr.bf16.mxu0 0
      %572 = vmatmul.mubr.bf16.gmra.mxu0 %v534
      %v573 = vpop.f32.mrf.mxu0
      %v574 = vadd.f32 0.0, %v573
      %v575 = vpop.f32.mrf.mxu0
      %v576 = vpop.f32.mrf.mxu0
      %v577 = vpop.f32.mrf.mxu0
      %578 = vdwg.mxu0
      %579 = vrot.lane.b32.xlu0 %v200, 112
      %v580 = vpop.permute.xlu0 %579
      %v582 = vsel %vm203, %v433, 0
      %v585 = vsel %vm439, %v580, 0
      %587 = vmatprep.subr.bf16.mxu0 0
      %588 = vmatpush1.bf16.msra.mxu0 0
      %589 = vmatprep.subr.bf16.mxu0 0
      %590 = vmatpush1.bf16.msra.mxu0 0
      %591 = vmatprep.subr.bf16.mxu0 0
      %592 = vmatpush1.bf16.msra.mxu0 0
      %593 = vmatprep.subr.bf16.mxu0 0
      %594 = vmatpush1.bf16.msra.mxu0 0
      %595 = vmatprep.subr.bf16.mxu0 0
      %596 = vmatpush1.bf16.msra.mxu0 0
      %597 = vmatprep.subr.bf16.mxu0 0
      %598 = vmatpush1.bf16.msra.mxu0 0
      %599 = vmatprep.subr.bf16.mxu0 0
      %600 = vmatpush1.bf16.msra.mxu0 0
      %601 = vmatprep.subr.bf16.mxu0 0
      %602 = vmatpush1.bf16.msra.mxu0 %v585
      %603 = vmatprep.subr.bf16.mxu0 0
      %604 = vmatpush2.bf16.msra.mxu0 0
      %605 = vmatprep.subr.bf16.mxu0 0
      %606 = vmatpush2.bf16.msra.mxu0 0
      %607 = vmatprep.subr.bf16.mxu0 0
      %608 = vmatpush2.bf16.msra.mxu0 0
      %609 = vmatprep.subr.bf16.mxu0 0
      %610 = vmatpush2.bf16.msra.mxu0 0
      %611 = vmatprep.subr.bf16.mxu0 0
      %612 = vmatpush2.bf16.msra.mxu0 0
      %613 = vmatprep.subr.bf16.mxu0 0
      %614 = vmatpush2.bf16.msra.mxu0 0
      %615 = vmatprep.subr.bf16.mxu0 0
      %616 = vmatpush2.bf16.msra.mxu0 0
      %617 = vmatprep.subr.bf16.mxu0 0
      %618 = vmatpush2.bf16.msra.mxu0 0
      %619 = vmatprep.mubr.bf16.mxu0 0
      %620 = vmatmul.mubr.bf16.gmra.mxu0 %v582
      %v621 = vpop.f32.mrf.mxu0
      %v622 = vadd.f32 0.0, %v621
      %v623 = vpop.f32.mrf.mxu0
      %v624 = vpop.f32.mrf.mxu0
      %v625 = vpop.f32.mrf.mxu0
      %626 = vdwg.mxu0
      %v627 = vrcp.pop %v420
      %v628 = vrcp.pop %v423
      %v629 = vrcp.pop %v426
      %v630 = vrcp.pop %v429
      %v631 = vmul.f32 %v478, %v627
      %v632 = vmul.f32 %v526, %v628
      %v633 = vmul.f32 %v574, %v629
      %v634 = vmul.f32 %v622, %v630
      %636 = vrot.lane.b32.xlu0 %v632, 8
      %v637 = vpop.permute.xlu0 %636
      %640 = vrot.lane.b32.xlu0 %v633, 16
      %v641 = vpop.permute.xlu0 %640
      %644 = vrot.lane.b32.xlu0 %v634, 24
      %v645 = vpop.permute.xlu0 %644
      %v647 = vsel %vm203, %v631, %v637
      %vm648 = vcmask 130048
      %v649 = vsel %vm648, %v647, %v641
      %vm650 = vcmask 195584
      %v651 = vsel %vm650, %v649, %v645
      %v652 = vpack.c.bf16 %v190, %v190
      %654 = vrot.lane.b32.xlu0 %v652, 104
      %v655 = vpop.permute.xlu0 %654
      %656 = vrot.lane.b32.xlu0 %v652, 80
      %v657 = vpop.permute.xlu0 %656
      %658 = vrot.lane.b32.xlu0 %v652, 56
      %v659 = vpop.permute.xlu0 %658
      %660 = vrot.lane.b32.xlu0 %v652, 120
      %v661 = vpop.permute.xlu0 %660
      %v663 = vsel %vm203, %v652, 0
      %v666 = vsel %vm203, %v661, 0
      %668 = vmatprep.subr.bf16.mxu0 0
      %669 = vmatpush1.bf16.xpose.msra.mxu0 0
      %670 = vmatprep.subr.bf16.mxu0 0
      %671 = vmatpush1.bf16.xpose.msra.mxu0 0
      %672 = vmatprep.subr.bf16.mxu0 0
      %673 = vmatpush1.bf16.xpose.msra.mxu0 0
      %674 = vmatprep.subr.bf16.mxu0 0
      %675 = vmatpush1.bf16.xpose.msra.mxu0 0
      %676 = vmatprep.subr.bf16.mxu0 0
      %677 = vmatpush1.bf16.xpose.msra.mxu0 0
      %678 = vmatprep.subr.bf16.mxu0 0
      %679 = vmatpush1.bf16.xpose.msra.mxu0 0
      %680 = vmatprep.subr.bf16.mxu0 0
      %681 = vmatpush1.bf16.xpose.msra.mxu0 0
      %682 = vmatprep.subr.bf16.mxu0 0
      %683 = vmatpush1.bf16.xpose.msra.mxu0 %v666
      %684 = vmatprep.subr.bf16.mxu0 0
      %685 = vmatpush2.bf16.xpose.msra.mxu0 0
      %686 = vmatprep.subr.bf16.mxu0 0
      %687 = vmatpush2.bf16.xpose.msra.mxu0 0
      %688 = vmatprep.subr.bf16.mxu0 0
      %689 = vmatpush2.bf16.xpose.msra.mxu0 0
      %690 = vmatprep.subr.bf16.mxu0 0
      %691 = vmatpush2.bf16.xpose.msra.mxu0 0
      %692 = vmatprep.subr.bf16.mxu0 0
      %693 = vmatpush2.bf16.xpose.msra.mxu0 0
      %694 = vmatprep.subr.bf16.mxu0 0
      %695 = vmatpush2.bf16.xpose.msra.mxu0 0
      %696 = vmatprep.subr.bf16.mxu0 0
      %697 = vmatpush2.bf16.xpose.msra.mxu0 0
      %698 = vmatprep.subr.bf16.mxu0 0
      %699 = vmatpush2.bf16.xpose.msra.mxu0 0
      %700 = vmatprep.mubr.bf16.mxu0 0
      %701 = vmatmul.mubr.bf16.gmra.mxu0 %v663
      %v702 = vpop.f32.mrf.mxu0
      %v703 = vadd.f32 0.0, %v702
      %v704 = vpop.f32.mrf.mxu0
      %v705 = vpop.f32.mrf.mxu0
      %v706 = vpop.f32.mrf.mxu0
      %707 = vdwg.mxu0
      %708 = vrot.lane.b32.xlu0 %v655, 120
      %v709 = vpop.permute.xlu0 %708
      %v711 = vsel %vm203, %v655, 0
      %v714 = vsel %vm203, %v709, 0
      %716 = vmatprep.subr.bf16.mxu0 0
      %717 = vmatpush1.bf16.xpose.msra.mxu0 0
      %718 = vmatprep.subr.bf16.mxu0 0
      %719 = vmatpush1.bf16.xpose.msra.mxu0 0
      %720 = vmatprep.subr.bf16.mxu0 0
      %721 = vmatpush1.bf16.xpose.msra.mxu0 0
      %722 = vmatprep.subr.bf16.mxu0 0
      %723 = vmatpush1.bf16.xpose.msra.mxu0 0
      %724 = vmatprep.subr.bf16.mxu0 0
      %725 = vmatpush1.bf16.xpose.msra.mxu0 0
      %726 = vmatprep.subr.bf16.mxu0 0
      %727 = vmatpush1.bf16.xpose.msra.mxu0 0
      %728 = vmatprep.subr.bf16.mxu0 0
      %729 = vmatpush1.bf16.xpose.msra.mxu0 0
      %730 = vmatprep.subr.bf16.mxu0 0
      %731 = vmatpush1.bf16.xpose.msra.mxu0 %v714
      %732 = vmatprep.subr.bf16.mxu0 0
      %733 = vmatpush2.bf16.xpose.msra.mxu0 0
      %734 = vmatprep.subr.bf16.mxu0 0
      %735 = vmatpush2.bf16.xpose.msra.mxu0 0
      %736 = vmatprep.subr.bf16.mxu0 0
      %737 = vmatpush2.bf16.xpose.msra.mxu0 0
      %738 = vmatprep.subr.bf16.mxu0 0
      %739 = vmatpush2.bf16.xpose.msra.mxu0 0
      %740 = vmatprep.subr.bf16.mxu0 0
      %741 = vmatpush2.bf16.xpose.msra.mxu0 0
      %742 = vmatprep.subr.bf16.mxu0 0
      %743 = vmatpush2.bf16.xpose.msra.mxu0 0
      %744 = vmatprep.subr.bf16.mxu0 0
      %745 = vmatpush2.bf16.xpose.msra.mxu0 0
      %746 = vmatprep.subr.bf16.mxu0 0
      %747 = vmatpush2.bf16.xpose.msra.mxu0 0
      %748 = vmatprep.mubr.bf16.mxu0 0
      %749 = vmatmul.mubr.bf16.gmra.mxu0 %v711
      %v750 = vpop.f32.mrf.mxu0
      %v751 = vadd.f32 0.0, %v750
      %v752 = vpop.f32.mrf.mxu0
      %v753 = vpop.f32.mrf.mxu0
      %v754 = vpop.f32.mrf.mxu0
      %755 = vdwg.mxu0
      %756 = vrot.lane.b32.xlu0 %v657, 120
      %v757 = vpop.permute.xlu0 %756
      %v759 = vsel %vm203, %v657, 0
      %v762 = vsel %vm203, %v757, 0
      %764 = vmatprep.subr.bf16.mxu0 0
      %765 = vmatpush1.bf16.xpose.msra.mxu0 0
      %766 = vmatprep.subr.bf16.mxu0 0
      %767 = vmatpush1.bf16.xpose.msra.mxu0 0
      %768 = vmatprep.subr.bf16.mxu0 0
      %769 = vmatpush1.bf16.xpose.msra.mxu0 0
      %770 = vmatprep.subr.bf16.mxu0 0
      %771 = vmatpush1.bf16.xpose.msra.mxu0 0
      %772 = vmatprep.subr.bf16.mxu0 0
      %773 = vmatpush1.bf16.xpose.msra.mxu0 0
      %774 = vmatprep.subr.bf16.mxu0 0
      %775 = vmatpush1.bf16.xpose.msra.mxu0 0
      %776 = vmatprep.subr.bf16.mxu0 0
      %777 = vmatpush1.bf16.xpose.msra.mxu0 0
      %778 = vmatprep.subr.bf16.mxu0 0
      %779 = vmatpush1.bf16.xpose.msra.mxu0 %v762
      %780 = vmatprep.subr.bf16.mxu0 0
      %781 = vmatpush2.bf16.xpose.msra.mxu0 0
      %782 = vmatprep.subr.bf16.mxu0 0
      %783 = vmatpush2.bf16.xpose.msra.mxu0 0
      %784 = vmatprep.subr.bf16.mxu0 0
      %785 = vmatpush2.bf16.xpose.msra.mxu0 0
      %786 = vmatprep.subr.bf16.mxu0 0
      %787 = vmatpush2.bf16.xpose.msra.mxu0 0
      %788 = vmatprep.subr.bf16.mxu0 0
      %789 = vmatpush2.bf16.xpose.msra.mxu0 0
      %790 = vmatprep.subr.bf16.mxu0 0
      %791 = vmatpush2.bf16.xpose.msra.mxu0 0
      %792 = vmatprep.subr.bf16.mxu0 0
      %793 = vmatpush2.bf16.xpose.msra.mxu0 0
      %794 = vmatprep.subr.bf16.mxu0 0
      %795 = vmatpush2.bf16.xpose.msra.mxu0 0
      %796 = vmatprep.mubr.bf16.mxu0 0
      %797 = vmatmul.mubr.bf16.gmra.mxu0 %v759
      %v798 = vpop.f32.mrf.mxu0
      %v799 = vadd.f32 0.0, %v798
      %v800 = vpop.f32.mrf.mxu0
      %v801 = vpop.f32.mrf.mxu0
      %v802 = vpop.f32.mrf.mxu0
      %803 = vdwg.mxu0
      %804 = vrot.lane.b32.xlu0 %v659, 120
      %v805 = vpop.permute.xlu0 %804
      %v807 = vsel %vm203, %v659, 0
      %v810 = vsel %vm203, %v805, 0
      %812 = vmatprep.subr.bf16.mxu0 0
      %813 = vmatpush1.bf16.xpose.msra.mxu0 0
      %814 = vmatprep.subr.bf16.mxu0 0
      %815 = vmatpush1.bf16.xpose.msra.mxu0 0
      %816 = vmatprep.subr.bf16.mxu0 0
      %817 = vmatpush1.bf16.xpose.msra.mxu0 0
      %818 = vmatprep.subr.bf16.mxu0 0
      %819 = vmatpush1.bf16.xpose.msra.mxu0 0
      %820 = vmatprep.subr.bf16.mxu0 0
      %821 = vmatpush1.bf16.xpose.msra.mxu0 0
      %822 = vmatprep.subr.bf16.mxu0 0
      %823 = vmatpush1.bf16.xpose.msra.mxu0 0
      %824 = vmatprep.subr.bf16.mxu0 0
      %825 = vmatpush1.bf16.xpose.msra.mxu0 0
      %826 = vmatprep.subr.bf16.mxu0 0
      %827 = vmatpush1.bf16.xpose.msra.mxu0 %v810
      %828 = vmatprep.subr.bf16.mxu0 0
      %829 = vmatpush2.bf16.xpose.msra.mxu0 0
      %830 = vmatprep.subr.bf16.mxu0 0
      %831 = vmatpush2.bf16.xpose.msra.mxu0 0
      %832 = vmatprep.subr.bf16.mxu0 0
      %833 = vmatpush2.bf16.xpose.msra.mxu0 0
      %834 = vmatprep.subr.bf16.mxu0 0
      %835 = vmatpush2.bf16.xpose.msra.mxu0 0
      %836 = vmatprep.subr.bf16.mxu0 0
      %837 = vmatpush2.bf16.xpose.msra.mxu0 0
      %838 = vmatprep.subr.bf16.mxu0 0
      %839 = vmatpush2.bf16.xpose.msra.mxu0 0
      %840 = vmatprep.subr.bf16.mxu0 0
      %841 = vmatpush2.bf16.xpose.msra.mxu0 0
      %842 = vmatprep.subr.bf16.mxu0 0
      %843 = vmatpush2.bf16.xpose.msra.mxu0 0
      %844 = vmatprep.mubr.bf16.mxu0 0
      %845 = vmatmul.mubr.bf16.gmra.mxu0 %v807
      %v846 = vpop.f32.mrf.mxu0
      %v847 = vadd.f32 0.0, %v846
      %v848 = vpop.f32.mrf.mxu0
      %v849 = vpop.f32.mrf.mxu0
      %v850 = vpop.f32.mrf.mxu0
      %851 = vdwg.mxu0
      %v852 = vsel %vm203, %v703, -inf
      %853 = vmax.xlane.f32.xlu0 %v852
      %v854 = vpop.xlane.xlu0 %853
      %v855 = vsel %vm203, %v751, -inf
      %856 = vmax.xlane.f32.xlu0 %v855
      %v857 = vpop.xlane.xlu0 %856
      %v858 = vsel %vm203, %v799, -inf
      %859 = vmax.xlane.f32.xlu0 %v858
      %v860 = vpop.xlane.xlu0 %859
      %v861 = vsel %vm203, %v847, -inf
      %862 = vmax.xlane.f32.xlu0 %v861
      %v863 = vpop.xlane.xlu0 %862
      %v864 = vsub.f32 %v703, %v854
      %v865 = vsub.f32 %v751, %v857
      %v866 = vsub.f32 %v799, %v860
      %v867 = vsub.f32 %v847, %v863
      %v868 = vmul.f32 %v864, 1.442695
      %v869 = vpow.pop %v868
      %v870 = vmul.f32 %v865, 1.442695
      %v871 = vpow.pop %v870
      %v872 = vmul.f32 %v866, 1.442695
      %v873 = vpow.pop %v872
      %v874 = vmul.f32 %v867, 1.442695
      %v875 = vpow.pop %v874
      %v876 = vsel %vm203, %v869, 0.0
      %877 = vadd.xlane.f32.xlu0 %v876
      %v878 = vpop.xlane.xlu0 %877
      %v879 = vsel %vm203, %v871, 0.0
      %880 = vadd.xlane.f32.xlu0 %v879
      %v881 = vpop.xlane.xlu0 %880
      %v882 = vsel %vm203, %v873, 0.0
      %883 = vadd.xlane.f32.xlu0 %v882
      %v884 = vpop.xlane.xlu0 %883
      %v885 = vsel %vm203, %v875, 0.0
      %886 = vadd.xlane.f32.xlu0 %v885
      %v887 = vpop.xlane.xlu0 %886
      %v888 = vpack.c.bf16 %v869, %v869
      %v889 = vpack.c.bf16 %v871, %v871
      %v890 = vpack.c.bf16 %v873, %v873
      %v891 = vpack.c.bf16 %v875, %v875
      %892 = vrot.lane.b32.xlu0 %v652, 112
      %v893 = vpop.permute.xlu0 %892
      %v895 = vsel %vm203, %v888, 0
      %v898 = vsel %vm439, %v893, 0
      %900 = vmatprep.subr.bf16.mxu0 0
      %901 = vmatpush1.bf16.msra.mxu0 0
      %902 = vmatprep.subr.bf16.mxu0 0
      %903 = vmatpush1.bf16.msra.mxu0 0
      %904 = vmatprep.subr.bf16.mxu0 0
      %905 = vmatpush1.bf16.msra.mxu0 0
      %906 = vmatprep.subr.bf16.mxu0 0
      %907 = vmatpush1.bf16.msra.mxu0 0
      %908 = vmatprep.subr.bf16.mxu0 0
      %909 = vmatpush1.bf16.msra.mxu0 0
      %910 = vmatprep.subr.bf16.mxu0 0
      %911 = vmatpush1.bf16.msra.mxu0 0
      %912 = vmatprep.subr.bf16.mxu0 0
      %913 = vmatpush1.bf16.msra.mxu0 0
      %914 = vmatprep.subr.bf16.mxu0 0
      %915 = vmatpush1.bf16.msra.mxu0 %v898
      %916 = vmatprep.subr.bf16.mxu0 0
      %917 = vmatpush2.bf16.msra.mxu0 0
      %918 = vmatprep.subr.bf16.mxu0 0
      %919 = vmatpush2.bf16.msra.mxu0 0
      %920 = vmatprep.subr.bf16.mxu0 0
      %921 = vmatpush2.bf16.msra.mxu0 0
      %922 = vmatprep.subr.bf16.mxu0 0
      %923 = vmatpush2.bf16.msra.mxu0 0
      %924 = vmatprep.subr.bf16.mxu0 0
      %925 = vmatpush2.bf16.msra.mxu0 0
      %926 = vmatprep.subr.bf16.mxu0 0
      %927 = vmatpush2.bf16.msra.mxu0 0
      %928 = vmatprep.subr.bf16.mxu0 0
      %929 = vmatpush2.bf16.msra.mxu0 0
      %930 = vmatprep.subr.bf16.mxu0 0
      %931 = vmatpush2.bf16.msra.mxu0 0
      %932 = vmatprep.mubr.bf16.mxu0 0
      %933 = vmatmul.mubr.bf16.gmra.mxu0 %v895
      %v934 = vpop.f32.mrf.mxu0
      %v935 = vadd.f32 0.0, %v934
      %v936 = vpop.f32.mrf.mxu0
      %v937 = vpop.f32.mrf.mxu0
      %v938 = vpop.f32.mrf.mxu0
      %939 = vdwg.mxu0
      %940 = vrot.lane.b32.xlu0 %v655, 112
      %v941 = vpop.permute.xlu0 %940
      %v943 = vsel %vm203, %v889, 0
      %v946 = vsel %vm439, %v941, 0
      %948 = vmatprep.subr.bf16.mxu0 0
      %949 = vmatpush1.bf16.msra.mxu0 0
      %950 = vmatprep.subr.bf16.mxu0 0
      %951 = vmatpush1.bf16.msra.mxu0 0
      %952 = vmatprep.subr.bf16.mxu0 0
      %953 = vmatpush1.bf16.msra.mxu0 0
      %954 = vmatprep.subr.bf16.mxu0 0
      %955 = vmatpush1.bf16.msra.mxu0 0
      %956 = vmatprep.subr.bf16.mxu0 0
      %957 = vmatpush1.bf16.msra.mxu0 0
      %958 = vmatprep.subr.bf16.mxu0 0
      %959 = vmatpush1.bf16.msra.mxu0 0
      %960 = vmatprep.subr.bf16.mxu0 0
      %961 = vmatpush1.bf16.msra.mxu0 0
      %962 = vmatprep.subr.bf16.mxu0 0
      %963 = vmatpush1.bf16.msra.mxu0 %v946
      %964 = vmatprep.subr.bf16.mxu0 0
      %965 = vmatpush2.bf16.msra.mxu0 0
      %966 = vmatprep.subr.bf16.mxu0 0
      %967 = vmatpush2.bf16.msra.mxu0 0
      %968 = vmatprep.subr.bf16.mxu0 0
      %969 = vmatpush2.bf16.msra.mxu0 0
      %970 = vmatprep.subr.bf16.mxu0 0
      %971 = vmatpush2.bf16.msra.mxu0 0
      %972 = vmatprep.subr.bf16.mxu0 0
      %973 = vmatpush2.bf16.msra.mxu0 0
      %974 = vmatprep.subr.bf16.mxu0 0
      %975 = vmatpush2.bf16.msra.mxu0 0
      %976 = vmatprep.subr.bf16.mxu0 0
      %977 = vmatpush2.bf16.msra.mxu0 0
      %978 = vmatprep.subr.bf16.mxu0 0
      %979 = vmatpush2.bf16.msra.mxu0 0
      %980 = vmatprep.mubr.bf16.mxu0 0
      %981 = vmatmul.mubr.bf16.gmra.mxu0 %v943
      %v982 = vpop.f32.mrf.mxu0
      %v983 = vadd.f32 0.0, %v982
      %v984 = vpop.f32.mrf.mxu0
      %v985 = vpop.f32.mrf.mxu0
      %v986 = vpop.f32.mrf.mxu0
      %987 = vdwg.mxu0
      %988 = vrot.lane.b32.xlu0 %v657, 112
      %v989 = vpop.permute.xlu0 %988
      %v991 = vsel %vm203, %v890, 0
      %v994 = vsel %vm439, %v989, 0
      %996 = vmatprep.subr.bf16.mxu0 0
      %997 = vmatpush1.bf16.msra.mxu0 0
      %998 = vmatprep.subr.bf16.mxu0 0
      %999 = vmatpush1.bf16.msra.mxu0 0
      %1000 = vmatprep.subr.bf16.mxu0 0
      %1001 = vmatpush1.bf16.msra.mxu0 0
      %1002 = vmatprep.subr.bf16.mxu0 0
      %1003 = vmatpush1.bf16.msra.mxu0 0
      %1004 = vmatprep.subr.bf16.mxu0 0
      %1005 = vmatpush1.bf16.msra.mxu0 0
      %1006 = vmatprep.subr.bf16.mxu0 0
      %1007 = vmatpush1.bf16.msra.mxu0 0
      %1008 = vmatprep.subr.bf16.mxu0 0
      %1009 = vmatpush1.bf16.msra.mxu0 0
      %1010 = vmatprep.subr.bf16.mxu0 0
      %1011 = vmatpush1.bf16.msra.mxu0 %v994
      %1012 = vmatprep.subr.bf16.mxu0 0
      %1013 = vmatpush2.bf16.msra.mxu0 0
      %1014 = vmatprep.subr.bf16.mxu0 0
      %1015 = vmatpush2.bf16.msra.mxu0 0
      %1016 = vmatprep.subr.bf16.mxu0 0
      %1017 = vmatpush2.bf16.msra.mxu0 0
      %1018 = vmatprep.subr.bf16.mxu0 0
      %1019 = vmatpush2.bf16.msra.mxu0 0
      %1020 = vmatprep.subr.bf16.mxu0 0
      %1021 = vmatpush2.bf16.msra.mxu0 0
      %1022 = vmatprep.subr.bf16.mxu0 0
      %1023 = vmatpush2.bf16.msra.mxu0 0
      %1024 = vmatprep.subr.bf16.mxu0 0
      %1025 = vmatpush2.bf16.msra.mxu0 0
      %1026 = vmatprep.subr.bf16.mxu0 0
      %1027 = vmatpush2.bf16.msra.mxu0 0
      %1028 = vmatprep.mubr.bf16.mxu0 0
      %1029 = vmatmul.mubr.bf16.gmra.mxu0 %v991
      %v1030 = vpop.f32.mrf.mxu0
      %v1031 = vadd.f32 0.0, %v1030
      %v1032 = vpop.f32.mrf.mxu0
      %v1033 = vpop.f32.mrf.mxu0
      %v1034 = vpop.f32.mrf.mxu0
      %1035 = vdwg.mxu0
      %1036 = vrot.lane.b32.xlu0 %v659, 112
      %v1037 = vpop.permute.xlu0 %1036
      %v1039 = vsel %vm203, %v891, 0
      %v1042 = vsel %vm439, %v1037, 0
      %1044 = vmatprep.subr.bf16.mxu0 0
      %1045 = vmatpush1.bf16.msra.mxu0 0
      %1046 = vmatprep.subr.bf16.mxu0 0
      %1047 = vmatpush1.bf16.msra.mxu0 0
      %1048 = vmatprep.subr.bf16.mxu0 0
      %1049 = vmatpush1.bf16.msra.mxu0 0
      %1050 = vmatprep.subr.bf16.mxu0 0
      %1051 = vmatpush1.bf16.msra.mxu0 0
      %1052 = vmatprep.subr.bf16.mxu0 0
      %1053 = vmatpush1.bf16.msra.mxu0 0
      %1054 = vmatprep.subr.bf16.mxu0 0
      %1055 = vmatpush1.bf16.msra.mxu0 0
      %1056 = vmatprep.subr.bf16.mxu0 0
      %1057 = vmatpush1.bf16.msra.mxu0 0
      %1058 = vmatprep.subr.bf16.mxu0 0
      %1059 = vmatpush1.bf16.msra.mxu0 %v1042
      %1060 = vmatprep.subr.bf16.mxu0 0
      %1061 = vmatpush2.bf16.msra.mxu0 0
      %1062 = vmatprep.subr.bf16.mxu0 0
      %1063 = vmatpush2.bf16.msra.mxu0 0
      %1064 = vmatprep.subr.bf16.mxu0 0
      %1065 = vmatpush2.bf16.msra.mxu0 0
      %1066 = vmatprep.subr.bf16.mxu0 0
      %1067 = vmatpush2.bf16.msra.mxu0 0
      %1068 = vmatprep.subr.bf16.mxu0 0
      %1069 = vmatpush2.bf16.msra.mxu0 0
      %1070 = vmatprep.subr.bf16.mxu0 0
      %1071 = vmatpush2.bf16.msra.mxu0 0
      %1072 = vmatprep.subr.bf16.mxu0 0
      %1073 = vmatpush2.bf16.msra.mxu0 0
      %1074 = vmatprep.subr.bf16.mxu0 0
      %1075 = vmatpush2.bf16.msra.mxu0 0
      %1076 = vmatprep.mubr.bf16.mxu0 0
      %1077 = vmatmul.mubr.bf16.gmra.mxu0 %v1039
      %v1078 = vpop.f32.mrf.mxu0
      %v1079 = vadd.f32 0.0, %v1078
      %v1080 = vpop.f32.mrf.mxu0
      %v1081 = vpop.f32.mrf.mxu0
      %v1082 = vpop.f32.mrf.mxu0
      %1083 = vdwg.mxu0
      %v1084 = vrcp.pop %v878
      %v1085 = vrcp.pop %v881
      %v1086 = vrcp.pop %v884
      %v1087 = vrcp.pop %v887
      %v1088 = vmul.f32 %v935, %v1084
      %v1089 = vmul.f32 %v983, %v1085
      %v1090 = vmul.f32 %v1031, %v1086
      %v1091 = vmul.f32 %v1079, %v1087
      %1093 = vrot.lane.b32.xlu0 %v1089, 8
      %v1094 = vpop.permute.xlu0 %1093
      %1097 = vrot.lane.b32.xlu0 %v1090, 16
      %v1098 = vpop.permute.xlu0 %1097
      %1101 = vrot.lane.b32.xlu0 %v1091, 24
      %v1102 = vpop.permute.xlu0 %1101
      %v1104 = vsel %vm203, %v1088, %v1094
      %v1105 = vsel %vm648, %v1104, %v1098
      %v1106 = vsel %vm650, %v1105, %v1102
      %v1107 = vpack.c.bf16 %v1106, %v651
      %v1108 = vld [vmem:[%s3] sm:$0xf]
      %v1109 = vld [vmem:[%s3 + $0x4] sm:$0xf]
      %v1110 = vld [vmem:[%s3 + $0x8] sm:$0xf]
      %v1111 = vld [vmem:[%s3 + $0xc] sm:$0xf]
      %v1112 = vld [vmem:[#allocation7] sm:$0x1]
      %v1114 = vlaneseq
      %v1115 = vshrl.u32 %v1114, 7
      %v1116 = vsub.s32 0, %v1115
      %v1117 = vrot.slane %v1112, %v1116
      %v1123 = vunpack.c.l.b16 %v1108
      %v1124 = vunpack.c.l.b16 %v1109
      %v1125 = vunpack.c.l.b16 %v1110
      %v1126 = vunpack.c.l.b16 %v1111
      %v1127 = vpack.c.b16 %v1124, %v1123
      %v1128 = vpack.c.b16 %v1126, %v1125
      %v1132 = vsel %vm148, %v1107, 0
      %1134 = vmatprep.subr.bf16.mxu0 0
      %1135 = vmatpush1.bf16.msra.mxu0 0
      %1136 = vmatprep.subr.bf16.mxu0 0
      %1137 = vmatpush1.bf16.msra.mxu0 0
      %1138 = vmatprep.subr.bf16.mxu0 0
      %1139 = vmatpush1.bf16.msra.mxu0 0
      %1140 = vmatprep.subr.bf16.mxu0 0
      %1141 = vmatpush1.bf16.msra.mxu0 0
      %1142 = vmatprep.subr.bf16.mxu0 0
      %1143 = vmatpush1.bf16.msra.mxu0 0
      %1144 = vmatprep.subr.bf16.mxu0 0
      %1145 = vmatpush1.bf16.msra.mxu0 0
      %1146 = vmatprep.subr.bf16.mxu0 0
      %1147 = vmatpush1.bf16.msra.mxu0 %v1128
      %1148 = vmatprep.subr.bf16.mxu0 0
      %1149 = vmatpush1.bf16.msra.mxu0 %v1127
      %1150 = vmatprep.subr.bf16.mxu0 0
      %1151 = vmatpush2.bf16.msra.mxu0 0
      %1152 = vmatprep.subr.bf16.mxu0 0
      %1153 = vmatpush2.bf16.msra.mxu0 0
      %1154 = vmatprep.subr.bf16.mxu0 0
      %1155 = vmatpush2.bf16.msra.mxu0 0
      %1156 = vmatprep.subr.bf16.mxu0 0
      %1157 = vmatpush2.bf16.msra.mxu0 0
      %1158 = vmatprep.subr.bf16.mxu0 0
      %1159 = vmatpush2.bf16.msra.mxu0 0
      %1160 = vmatprep.subr.bf16.mxu0 0
      %1161 = vmatpush2.bf16.msra.mxu0 0
      %1162 = vmatprep.subr.bf16.mxu0 0
      %1163 = vmatpush2.bf16.msra.mxu0 0
      %1164 = vmatprep.subr.bf16.mxu0 0
      %1165 = vmatpush2.bf16.msra.mxu0 0
      %1166 = vmatprep.mubr.bf16.mxu0 0
      %1167 = vmatmul.mubr.bf16.gmra.mxu0 %v1132
      %v1168 = vpop.f32.mrf.mxu0
      %v1169 = vadd.f32 %v1117, %v1168
      %v1170 = vpop.f32.mrf.mxu0
      %v1171 = vpop.f32.mrf.mxu0
      %v1172 = vadd.f32 %v1117, %v1171
      %v1173 = vpop.f32.mrf.mxu0
      %1174 = vdwg.mxu0
      %v1175 = vadd.f32 %v122, %v1169
      %v1176 = vadd.f32 %v123, %v1172
      %v1177 = vsel %vm148, %v1175, 0.0
      %1178 = vadd.xlane.f32.xlu0 %v1177
      %v1179 = vpop.xlane.xlu0 %1178
      %v1180 = vsel %vm148, %v1176, 0.0
      %1181 = vadd.xlane.f32.xlu0 %v1180
      %v1182 = vpop.xlane.xlu0 %1181
      %v1183 = vrcp.pop 32.0
      %v1184 = vmul.f32 %v1179, %v1183
      %v1185 = vmul.f32 %v1182, %v1183
      %v1186 = vsub.f32 %v1175, %v1184
      %v1187 = vsub.f32 %v1176, %v1185
      %v1188 = vmul.f32 %v1186, %v1186
      %v1189 = vmul.f32 %v1187, %v1187
      %v1190 = vsel %vm148, %v1188, 0.0
      %1191 = vadd.xlane.f32.xlu0 %v1190
      %v1192 = vpop.xlane.xlu0 %1191
      %v1193 = vsel %vm148, %v1189, 0.0
      %1194 = vadd.xlane.f32.xlu0 %v1193
      %v1195 = vpop.xlane.xlu0 %1194
      %v1196 = vmul.f32 %v1192, %v1183
      %v1197 = vmul.f32 %v1195, %v1183
      %v1198 = vadd.f32 %v1196, 1e-05
      %v1199 = vadd.f32 %v1197, 1e-05
      %v1200 = vrsqrt.pop %v1198
      %v1201 = vrsqrt.pop %v1199
      %v1202 = vmul.f32 %v1186, %v1200
      %v1203 = vmul.f32 %v1187, %v1201
      %v1204 = vld [vmem:[#allocation9] sm:$0x1]
      %v1206 = vlaneseq
      %v1207 = vshrl.u32 %v1206, 7
      %v1208 = vsub.s32 0, %v1207
      %v1209 = vrot.slane %v1204, %v1208
      %v1211 = vmul.f32 %v1202, %v1209
      %v1212 = vmul.f32 %v1203, %v1209
      %v1213 = vld [vmem:[#allocation10] sm:$0x1]
      %v1215 = vlaneseq
      %v1216 = vshrl.u32 %v1215, 7
      %v1217 = vsub.s32 0, %v1216
      %v1218 = vrot.slane %v1213, %v1217
      %v1220 = vadd.f32 %v1211, %v1218
      %v1221 = vadd.f32 %v1212, %v1218
      %1222 = vst.msk [vmem:[#allocation2] sm:$0xff] %vm148, %v1220
      %1223 = vst.msk [vmem:[#allocation2 + $0x8] sm:$0xff] %vm148, %v1221
      %1224 = vst.msk [vmem:[#allocation3] sm:$0xff] %vm148, 0.0
      %1225 = vst.msk [vmem:[#allocation3 + $0x8] sm:$0xff] %vm148, 0.0
    $region81: #{tpu_custom_call.1} parent=1 // pred_fallthru
      _
    %v1226 = vld [vmem:[#allocation2] sm:$0xff]
    %v1227 = vld [vmem:[#allocation2 + $0x8] sm:$0xff]
    %v1228 = vpack.c.bf16 %v1227, %v1226
    %v1229 = vld [vmem:[#allocation12] sm:$0xf]
    %v1230 = vld [vmem:[#allocation12 + $0x4] sm:$0xf]
    %v1231 = vld [vmem:[#allocation12 + $0x8] sm:$0xf]
    %v1232 = vld [vmem:[#allocation12 + $0xc] sm:$0xf]
    %v1233 = vld [vmem:[#allocation13] sm:$0x1]
    %v1235 = vlaneseq
    %v1236 = vshrl.u32 %v1235, 7
    %v1237 = vsub.s32 0, %v1236
    %v1238 = vrot.slane %v1233, %v1237
    %v1244 = vunpack.c.l.b16 %v1229
    %v1245 = vunpack.c.l.b16 %v1230
    %v1246 = vunpack.c.l.b16 %v1231
    %v1247 = vunpack.c.l.b16 %v1232
    %v1248 = vpack.c.b16 %v1245, %v1244
    %v1249 = vpack.c.b16 %v1247, %v1246
    %vm1252 = vcmask 261120
    %v1254 = vsel %vm1252, %v1228, 0
    %1256 = vmatprep.subr.bf16.mxu0 0
    %1257 = vmatpush1.bf16.msra.mxu0 0
    %1258 = vmatprep.subr.bf16.mxu0 0
    %1259 = vmatpush1.bf16.msra.mxu0 0
    %1260 = vmatprep.subr.bf16.mxu0 0
    %1261 = vmatpush1.bf16.msra.mxu0 0
    %1262 = vmatprep.subr.bf16.mxu0 0
    %1263 = vmatpush1.bf16.msra.mxu0 0
    %1264 = vmatprep.subr.bf16.mxu0 0
    %1265 = vmatpush1.bf16.msra.mxu0 0
    %1266 = vmatprep.subr.bf16.mxu0 0
    %1267 = vmatpush1.bf16.msra.mxu0 0
    %1268 = vmatprep.subr.bf16.mxu0 0
    %1269 = vmatpush1.bf16.msra.mxu0 %v1249
    %1270 = vmatprep.subr.bf16.mxu0 0
    %1271 = vmatpush1.bf16.msra.mxu0 %v1248
    %1272 = vmatprep.subr.bf16.mxu0 0
    %1273 = vmatpush2.bf16.msra.mxu0 0
    %1274 = vmatprep.subr.bf16.mxu0 0
    %1275 = vmatpush2.bf16.msra.mxu0 0
    %1276 = vmatprep.subr.bf16.mxu0 0
    %1277 = vmatpush2.bf16.msra.mxu0 0
    %1278 = vmatprep.subr.bf16.mxu0 0
    %1279 = vmatpush2.bf16.msra.mxu0 0
    %1280 = vmatprep.subr.bf16.mxu0 0
    %1281 = vmatpush2.bf16.msra.mxu0 0
    %1282 = vmatprep.subr.bf16.mxu0 0
    %1283 = vmatpush2.bf16.msra.mxu0 0
    %1284 = vmatprep.subr.bf16.mxu0 0
    %1285 = vmatpush2.bf16.msra.mxu0 0
    %1286 = vmatprep.subr.bf16.mxu0 0
    %1287 = vmatpush2.bf16.msra.mxu0 0
    %1288 = vmatprep.mubr.bf16.mxu0 0
    %1289 = vmatmul.mubr.bf16.gmra.mxu0 %v1254
    %v1290 = vpop.f32.mrf.mxu0
    %v1291 = vadd.f32 %v1238, %v1290
    %v1292 = vpop.f32.mrf.mxu0
    %v1293 = vpop.f32.mrf.mxu0
    %v1294 = vadd.f32 %v1238, %v1293
    %v1295 = vpop.f32.mrf.mxu0
    %1296 = vdwg.mxu0
    %v1297 = vmax.f32 %v1291, 0.0
    %v1298 = vmax.f32 %v1294, 0.0
    %v1299 = vld [vmem:[#allocation3] sm:$0xff]
    %v1300 = vld [vmem:[#allocation3 + $0x8] sm:$0xff]
    %v1301 = vpack.c.bf16 %v1298, %v1297
    %v1302 = vld [vmem:[%s9] sm:$0xf]
    %v1303 = vld [vmem:[%s9 + $0x4] sm:$0xf]
    %v1304 = vld [vmem:[%s9 + $0x8] sm:$0xf]
    %v1305 = vld [vmem:[%s9 + $0xc] sm:$0xf]
    %v1306 = vld [vmem:[%s9 + $0x10] sm:$0xf]
    %v1307 = vld [vmem:[%s9 + $0x14] sm:$0xf]
    %v1308 = vld [vmem:[%s9 + $0x18] sm:$0xf]
    %v1309 = vld [vmem:[%s9 + $0x1c] sm:$0xf]
    %v1318 = vunpack.c.l.b16 %v1302
    %v1319 = vunpack.c.l.b16 %v1303
    %v1320 = vunpack.c.l.b16 %v1304
    %v1321 = vunpack.c.l.b16 %v1305
    %v1322 = vunpack.c.l.b16 %v1306
    %v1323 = vunpack.c.l.b16 %v1307
    %v1324 = vunpack.c.l.b16 %v1308
    %v1325 = vunpack.c.l.b16 %v1309
    %v1326 = vpack.c.b16 %v1319, %v1318
    %v1327 = vpack.c.b16 %v1321, %v1320
    %v1328 = vpack.c.b16 %v1323, %v1322
    %v1329 = vpack.c.b16 %v1325, %v1324
    %vm1334 = vcmask 523264
    %v1336 = vsel %vm1334, %v1301, 0
    %1338 = vmatprep.subr.bf16.mxu0 0
    %1339 = vmatpush1.bf16.msra.mxu0 0
    %1340 = vmatprep.subr.bf16.mxu0 0
    %1341 = vmatpush1.bf16.msra.mxu0 0
    %1342 = vmatprep.subr.bf16.mxu0 0
    %1343 = vmatpush1.bf16.msra.mxu0 0
    %1344 = vmatprep.subr.bf16.mxu0 0
    %1345 = vmatpush1.bf16.msra.mxu0 0
    %1346 = vmatprep.subr.bf16.mxu0 0
    %1347 = vmatpush1.bf16.msra.mxu0 %v1329
    %1348 = vmatprep.subr.bf16.mxu0 0
    %1349 = vmatpush1.bf16.msra.mxu0 %v1328
    %1350 = vmatprep.subr.bf16.mxu0 0
    %1351 = vmatpush1.bf16.msra.mxu0 %v1327
    %1352 = vmatprep.subr.bf16.mxu0 0
    %1353 = vmatpush1.bf16.msra.mxu0 %v1326
    %1354 = vmatprep.subr.bf16.mxu0 0
    %1355 = vmatpush2.bf16.msra.mxu0 0
    %1356 = vmatprep.subr.bf16.mxu0 0
    %1357 = vmatpush2.bf16.msra.mxu0 0
    %1358 = vmatprep.subr.bf16.mxu0 0
    %1359 = vmatpush2.bf16.msra.mxu0 0
    %1360 = vmatprep.subr.bf16.mxu0 0
    %1361 = vmatpush2.bf16.msra.mxu0 0
    %1362 = vmatprep.subr.bf16.mxu0 0
    %1363 = vmatpush2.bf16.msra.mxu0 0
    %1364 = vmatprep.subr.bf16.mxu0 0
    %1365 = vmatpush2.bf16.msra.mxu0 0
    %1366 = vmatprep.subr.bf16.mxu0 0
    %1367 = vmatpush2.bf16.msra.mxu0 0
    %1368 = vmatprep.subr.bf16.mxu0 0
    %1369 = vmatpush2.bf16.msra.mxu0 0
    %1370 = vmatprep.mubr.bf16.mxu0 0
    %1371 = vmatmul.mubr.bf16.gmra.mxu0 %v1336
    %v1372 = vpop.f32.mrf.mxu0
    %v1373 = vadd.f32 0.0, %v1372
    %v1374 = vpop.f32.mrf.mxu0
    %v1375 = vpop.f32.mrf.mxu0
    %v1376 = vadd.f32 0.0, %v1375
    %v1377 = vpop.f32.mrf.mxu0
    %1378 = vdwg.mxu0
    %v1379 = vadd.f32 %v1299, %v1373
    %v1380 = vadd.f32 %v1300, %v1376
    %1381 = vst.msk [vmem:[#allocation3] sm:$0xff] %vm1252, %v1379
    %1382 = vst.msk [vmem:[#allocation3 + $0x8] sm:$0xff] %vm1252, %v1380
    // Predicated region
    $region82: #{tpu_custom_call.1} parent=1 // pred_check
      %p1383 = pneg %p118
    $region83: #{tpu_custom_call.1} parent=1 // pred_check_branch
      %1385 = sbr.rel (%p1383) target = $region85
    $region84: #{tpu_custom_call.1} parent=1 // pred_region
      %v1386 = vld [vmem:[#allocation2] sm:$0xff]
      %v1387 = vld [vmem:[#allocation2 + $0x8] sm:$0xff]
      %v1388 = vld [vmem:[#allocation3] sm:$0xff]
      %v1389 = vld [vmem:[#allocation3 + $0x8] sm:$0xff]
      %v1390 = vadd.f32 %v1386, %v1388
      %v1391 = vadd.f32 %v1387, %v1389
      %v1392 = vld [vmem:[%s10] sm:$0x1]
      %v1394 = vlaneseq
      %v1395 = vshrl.u32 %v1394, 7
      %v1396 = vsub.s32 0, %v1395
      %v1397 = vrot.slane %v1392, %v1396
      %v1399 = vadd.f32 %v1390, %v1397
      %v1400 = vadd.f32 %v1391, %v1397
      %v1401 = vsel %vm1252, %v1399, 0.0
      %1402 = vadd.xlane.f32.xlu0 %v1401
      %v1403 = vpop.xlane.xlu0 %1402
      %v1404 = vsel %vm1252, %v1400, 0.0
      %1405 = vadd.xlane.f32.xlu0 %v1404
      %v1406 = vpop.xlane.xlu0 %1405
      %v1407 = vrcp.pop 32.0
      %v1408 = vmul.f32 %v1403, %v1407
      %v1409 = vmul.f32 %v1406, %v1407
      %v1410 = vsub.f32 %v1399, %v1408
      %v1411 = vsub.f32 %v1400, %v1409
      %v1412 = vmul.f32 %v1410, %v1410
      %v1413 = vmul.f32 %v1411, %v1411
      %v1414 = vsel %vm1252, %v1412, 0.0
      %1415 = vadd.xlane.f32.xlu0 %v1414
      %v1416 = vpop.xlane.xlu0 %1415
      %v1417 = vsel %vm1252, %v1413, 0.0
      %1418 = vadd.xlane.f32.xlu0 %v1417
      %v1419 = vpop.xlane.xlu0 %1418
      %v1420 = vmul.f32 %v1416, %v1407
      %v1421 = vmul.f32 %v1419, %v1407
      %v1422 = vadd.f32 %v1420, 1e-05
      %v1423 = vadd.f32 %v1421, 1e-05
      %v1424 = vrsqrt.pop %v1422
      %v1425 = vrsqrt.pop %v1423
      %v1426 = vmul.f32 %v1410, %v1424
      %v1427 = vmul.f32 %v1411, %v1425
      %v1428 = vld [vmem:[%s11] sm:$0x1]
      %v1430 = vlaneseq
      %v1431 = vshrl.u32 %v1430, 7
      %v1432 = vsub.s32 0, %v1431
      %v1433 = vrot.slane %v1428, %v1432
      %v1435 = vmul.f32 %v1426, %v1433
      %v1436 = vmul.f32 %v1427, %v1433
      %v1437 = vld [vmem:[%s12] sm:$0x1]
      %v1439 = vlaneseq
      %v1440 = vshrl.u32 %v1439, 7
      %v1441 = vsub.s32 0, %v1440
      %v1442 = vrot.slane %v1437, %v1441
      %v1444 = vadd.f32 %v1435, %v1442
      %v1445 = vadd.f32 %v1436, %v1442
      %1446 = vst.msk [vmem:[#allocation15] sm:$0xff] %vm1252, %v1444
      %1447 = vst.msk [vmem:[#allocation15 + $0x8] sm:$0xff] %vm1252, %v1445
    $region85: #{tpu_custom_call.1} parent=1 // pred_fallthru
      _
    // Predicated region
    $region86: #{tpu_custom_call.1} parent=1 // pred_check
      _
    $region87: #{tpu_custom_call.1} parent=1 // pred_check_branch
      %1449 = sbr.rel (0) target = $region89
    $region88: #{tpu_custom_call.1} parent=1 // pred_region
      %s1451 = ssub.s32 256, 256
      %1452 = vsyncadd [#allocation6], %s1451
      %s1453 = sshll.u32 [#allocation15], 4
      %s1454 = int_to_ptr.vmem [resolvable:$true] %s1453
      %1459 = dma.vmem_to_hbm [thread:$0]  %s1454, 256, %s13, [#allocation6], 128, 128, 8
    $region89: #{tpu_custom_call.1} parent=1 // pred_fallthru
      _
    // Predicated region
    $region90: #{tpu_custom_call.1} parent=1 // pred_check
      _
    $region91: #{tpu_custom_call.1} parent=1 // pred_check_branch
      %1461 = sbr.rel (0) target = $region93
    $region92: #{tpu_custom_call.1} parent=1 // pred_region
      %1462 = dma.done [#allocation6], 256
    $region93: #{tpu_custom_call.1} parent=1 // pred_fallthru
      _
    %1463 = vsyncpa [#allocation5], 1
    %1464 = vsyncpa [#allocation8], 1
    %1465 = vsyncpa [#allocation11], 1
    %1466 = vsyncpa [#allocation14], 1
    %1467 = vsyncpa [#allocation6], 1

</llo_original>
